<compile_context>
chip_gen: v7x
topology: tpu7x:2x2x1
jax: 0.10.0
libtpu: 0.0.40
codegen_flags: <defaults>
</compile_context>

<pallas_src>
import jax
import jax.numpy as jnp
from jax.experimental import pallas as pl
from jax.experimental.pallas import tpu as pltpu

# ---------------- configuration (small synthetic sizes) ----------------
BATCH = 2          # batch size
CHANNELS = 3       # image channels
TIME = 6           # number of frames
IMG = 16           # spatial H = W
FEAT = 32          # CNN embedding dim == LSTM input size (stand-in for resnet.fc.in_features)
HIDDEN = 32        # lstm_hidden_size
NUM_LAYERS = 4     # nn.LSTM(num_layers=4) in Encoder
EMB = 16           # decoder embedding dim
VOCAB = 11         # decoder.output_dim
VOCAB_PAD = 128    # lane-dense padding for the output projection
TRG_LEN = 5        # target sequence length
K_RAW = CHANNELS * 9
K_PAD = 32         # conv contraction dim padded to a sublane-aligned size
HW = IMG * IMG
GATES = 4 * HIDDEN # 128 -> one full vreg of gates per layer


# ---------------- shared LSTM helpers (used inside kernels) ----------------
def _lstm_cell(gates, c_prev, H):
    """i/f/g/o gate math.  Full-vreg EUP: one sigmoid + one tanh over all 4H
    lanes, 32-lane slices taken afterwards."""
    sg = jax.nn.sigmoid(gates)
    th = jnp.tanh(gates)
    i = sg[:, 0 * H:1 * H]
    f = sg[:, 1 * H:2 * H]
    g = th[:, 2 * H:3 * H]
    o = sg[:, 3 * H:4 * H]
    c_new = f * c_prev + i * g
    h_new = o * jnp.tanh(c_new)
    return h_new, c_new


def _lstm_stack_step(x_gates0, whh0_ref, w_cat_ref, b_ref, h_st, c_st, B, H):
    """One timestep of the 4-layer stack; packed (L*B, H) h/c refs updated in place.

    x_gates0 : (B, 4H) non-recurrent contribution to layer-0 gates (no bias).
    whh0     : (H, 4H) layer-0 recurrent weights.
    w_cat    : (L-1, 2H, 4H) concat([W_ih; W_hh]) for layers 1..L-1 -> one dot/layer.
    b        : (L, 1, 4H) combined biases.
    Returns the top layer's new hidden state (B, H).
    """
    x = None
    for layer in range(NUM_LAYERS):              # static unroll (4 layers)
        r0 = layer * B
        h_prev = h_st[r0:r0 + B, :]
        c_prev = c_st[r0:r0 + B, :]
        if layer == 0:
            gates = (x_gates0
                     + jnp.dot(h_prev, whh0_ref[...],
                               preferred_element_type=jnp.float32)
                     + b_ref[0])
        else:
            xh = jnp.concatenate([x, h_prev], axis=1)          # (B, 2H)
            gates = (jnp.dot(xh, w_cat_ref[layer - 1],
                             preferred_element_type=jnp.float32)
                     + b_ref[layer])
        h_new, c_new = _lstm_cell(gates, c_prev, H)
        h_st[r0:r0 + B, :] = h_new
        c_st[r0:r0 + B, :] = c_new
        x = h_new
    return x


def _onehot_from_tokens(tok_ref, col, B, Vp):
    """Build a (B, Vp) one-hot from SMEM token ids tok_ref[:, col]."""
    row = jax.lax.broadcasted_iota(jnp.int32, (B, Vp), 0)
    lane = jax.lax.broadcasted_iota(jnp.int32, (B, Vp), 1)
    oh = jnp.zeros((B, Vp), jnp.float32)
    for b in range(B):                            # static unroll, B is tiny
        oh = oh + ((row == b) & (lane == tok_ref[b, col])).astype(jnp.float32)
    return oh


# ---------------- encoder kernel: conv + projection + 4-layer LSTM ----------------
def _encoder_kernel(patches_ref, cw_ref, cb_ref, wih0_ref,
                    whh0_ref, w_cat_ref, b_ref,
                    hn_ref, cn_ref, h_st, c_st):
    """grid=(T,).  Per step: conv for this frame's batch + pool + layer-0 input
    projection + one 4-layer LSTM step.  Final h/c written only at the last step."""
    t = pl.program_id(0)
    H = hn_ref.shape[1]
    B = hn_ref.shape[0] // NUM_LAYERS

    @pl.when(t == 0)
    def _():
        h_st[...] = jnp.zeros_like(h_st)
        c_st[...] = jnp.zeros_like(c_st)

    # Per-frame CNN stand-in: im2col 3x3 conv + bias + ReLU + global avg pool,
    # with the LSTM layer-0 input projection fused into the epilogue.
    acts = jnp.dot(patches_ref[0], cw_ref[...],
                   preferred_element_type=jnp.float32)          # (B*HW, F)
    acts = jnp.maximum(acts + cb_ref[...], 0.0)
    f = acts.shape[1]
    hw = acts.shape[0] // B
    pooled = jnp.sum(acts.reshape(B, hw, f), axis=1) * (1.0 / hw)   # (B, F)
    xg0 = jnp.dot(pooled, wih0_ref[...], preferred_element_type=jnp.float32)

    _lstm_stack_step(xg0, whh0_ref, w_cat_ref, b_ref, h_st, c_st, B, H)

    @pl.when(t == pl.num_programs(0) - 1)
    def _():
        hn_ref[...] = h_st[...]
        cn_ref[...] = c_st[...]


def encoder_forward(imgs, enc):
    """imgs: (B, C, T, H, W) -> packed final hidden/cell (L*B, H) each.

    Note: PyTorch's `context = encoder_outputs[:, -1, :]` equals h_n of the top
    layer, i.e. the last-layer rows of the packed final hidden state, so the
    per-step LSTM outputs never need to be materialized.
    """
    B = imgs.shape[0]
    T = imgs.shape[2]
    frames = jnp.transpose(imgs, (2, 0, 1, 3, 4))           # (T, B, C, H, W)
    patches = _im2col_3x3(frames)                            # (T, B*HW, K_PAD)
    hn, cn = pl.pallas_call(
        _encoder_kernel,
        grid=(T,),
        in_specs=[
            pl.BlockSpec((1, B * HW, K_PAD), lambda t: (t, 0, 0)),
            pl.BlockSpec((K_PAD, FEAT), lambda t: (0, 0)),
            pl.BlockSpec((1, FEAT), lambda t: (0, 0)),
            pl.BlockSpec((FEAT, GATES), lambda t: (0, 0)),
            pl.BlockSpec((HIDDEN, GATES), lambda t: (0, 0)),
            pl.BlockSpec((NUM_LAYERS - 1, 2 * HIDDEN, GATES), lambda t: (0, 0, 0)),
            pl.BlockSpec((NUM_LAYERS, 1, GATES), lambda t: (0, 0, 0)),
        ],
        out_specs=(
            pl.BlockSpec((NUM_LAYERS * B, HIDDEN), lambda t: (0, 0)),
            pl.BlockSpec((NUM_LAYERS * B, HIDDEN), lambda t: (0, 0)),
        ),
        out_shape=(
            jax.ShapeDtypeStruct((NUM_LAYERS * B, HIDDEN), jnp.float32),
            jax.ShapeDtypeStruct((NUM_LAYERS * B, HIDDEN), jnp.float32),
        ),
        scratch_shapes=[
            pltpu.VMEM((NUM_LAYERS * B, HIDDEN), jnp.float32),
            pltpu.VMEM((NUM_LAYERS * B, HIDDEN), jnp.float32),
        ],
        compiler_params=pltpu.CompilerParams(
            dimension_semantics=("arbitrary",)),
    )(patches, enc["conv_w"], enc["conv_b"], enc["wih0"],
      enc["whh0"], enc["w_cat"], enc["b"])
    return hn, cn


# ---------------- decoder kernel: full decode loop in one call ----------------
def _decoder_kernel(tgt_ref, tf_ref,                       # SMEM scalar prefetch
                    h0_ref, c0_ref, emb_proj_ref, w_ctx_ref,
                    whh0_ref, w_cat_ref, b_ref, fcw_ref, fcb_ref,
                    logits_ref, h_st, c_st, oh_st, ctxg_st):
    """grid=(trg_len-1,).  Each step: embedding (one-hot dot) + 4 LSTM layers +
    output projection + in-kernel greedy/teacher-forced next-input select."""
    g = pl.program_id(0)
    H = whh0_ref.shape[0]
    B = h0_ref.shape[0] // NUM_LAYERS
    Vp = emb_proj_ref.shape[0]

    @pl.when(g == 0)
    def _():
        h_st[...] = h0_ref[...]
        c_st[...] = c0_ref[...]
        # context = encoder out[:, -1, :] == top-layer rows of the packed h_n;
        # its gate projection is constant across decode steps -> compute once.
        ctx = h0_ref[(NUM_LAYERS - 1) * B:NUM_LAYERS * B, :]
        ctxg_st[...] = jnp.dot(ctx, w_ctx_ref[...],
                               preferred_element_type=jnp.float32)
        oh_st[...] = _onehot_from_tokens(tgt_ref, 0, B, Vp)

    # Layer-0 non-recurrent gates: embedding lookup fused with the embedding
    # slice of W_ih (one-hot @ (emb_table @ W_emb)) plus the context term.
    xg0 = (jnp.dot(oh_st[...], emb_proj_ref[...],
                   preferred_element_type=jnp.float32)
           + ctxg_st[...])
    top = _lstm_stack_step(xg0, whh0_ref, w_cat_ref, b_ref, h_st, c_st, B, H)

    logits = (jnp.dot(top, fcw_ref[...], preferred_element_type=jnp.float32)
              + fcb_ref[...])                               # (B, Vp)
    logits_ref[0] = logits

    # Next input: greedy argmax (pad lanes masked to -inf) vs teacher forcing.
    lane = jax.lax.broadcasted_iota(jnp.int32, (B, Vp), 1)
    lane_f = lane.astype(jnp.float32)
    masked = jnp.where(lane < VOCAB, logits, -jnp.inf)
    rowmax = jnp.max(masked, axis=1, keepdims=True)
    first_hit = jnp.min(jnp.where(masked >= rowmax, lane_f, float(Vp)),
                        axis=1, keepdims=True)              # first-index tie-break
    oh_top1 = (lane_f == first_hit).astype(jnp.float32)
    oh_tgt = _onehot_from_tokens(tgt_ref, g + 1, B, Vp)
    w_tf = (tf_ref[g + 1] > 0).astype(jnp.float32)
    oh_st[...] = w_tf * oh_tgt + (1.0 - w_tf) * oh_top1


def decode_all(target, tf_mask, hn, cn, dec):
    B = hn.shape[0] // NUM_LAYERS
    steps = TRG_LEN - 1
    grid_spec = pltpu.PrefetchScalarGridSpec(
        num_scalar_prefetch=2,
        grid=(steps,),
        in_specs=[
            pl.BlockSpec((NUM_LAYERS * B, HIDDEN), lambda g, *_: (0, 0)),
            pl.BlockSpec((NUM_LAYERS * B, HIDDEN), lambda g, *_: (0, 0)),
            pl.BlockSpec((VOCAB_PAD, GATES), lambda g, *_: (0, 0)),
            pl.BlockSpec((HIDDEN, GATES), lambda g, *_: (0, 0)),
            pl.BlockSpec((HIDDEN, GATES), lambda g, *_: (0, 0)),
            pl.BlockSpec((NUM_LAYERS - 1, 2 * HIDDEN, GATES), lambda g, *_: (0, 0, 0)),
            pl.BlockSpec((NUM_LAYERS, 1, GATES), lambda g, *_: (0, 0, 0)),
            pl.BlockSpec((HIDDEN, VOCAB_PAD), lambda g, *_: (0, 0)),
            pl.BlockSpec((1, VOCAB_PAD), lambda g, *_: (0, 0)),
        ],
        out_specs=pl.BlockSpec((1, B, VOCAB_PAD), lambda g, *_: (g, 0, 0)),
        scratch_shapes=[
            pltpu.VMEM((NUM_LAYERS * B, HIDDEN), jnp.float32),   # h state
            pltpu.VMEM((NUM_LAYERS * B, HIDDEN), jnp.float32),   # c state
            pltpu.VMEM((B, VOCAB_PAD), jnp.float32),             # one-hot of current input
            pltpu.VMEM((B, GATES), jnp.float32),                 # ctx @ W_ctx (constant)
        ],
    )
    return pl.pallas_call(
        _decoder_kernel,
        grid_spec=grid_spec,
        out_shape=jax.ShapeDtypeStruct((steps, B, VOCAB_PAD), jnp.float32),
        compiler_params=pltpu.CompilerParams(
            dimension_semantics=("arbitrary",)),
    )(target.astype(jnp.int32), tf_mask.astype(jnp.int32),
      hn, cn, dec["emb_proj"], dec["w_ctx"], dec["whh0"],
      dec["w_cat"], dec["b"], dec["fc_w"], dec["fc_b"])


# ---------------- glue: im2col for 3x3 conv, stride 1, pad 1 (all frames) ----------------
def _im2col_3x3(frames):
    # frames: (T, B, C, H, W) -> (T, B*H*W, K_PAD)
    # TODO(synk): patch extraction (pad/stack/transpose) stays in XLA outside the
    # Pallas kernel; at IMG=16 it is ~0.4 MiB and off the serial critical path.
    T, B, C, H, W = frames.shape
    xp = jnp.pad(frames, ((0, 0), (0, 0), (0, 0), (1, 1), (1, 1)))
    shifts = [xp[:, :, :, di:di + H, dj:dj + W]
              for di in range(3) for dj in range(3)]
    p = jnp.stack(shifts, axis=3)                            # (T, B, C, 9, H, W)
    p = p.transpose(0, 1, 4, 5, 2, 3).reshape(T, B * H * W, C * 9)
    return jnp.pad(p, ((0, 0), (0, 0), (0, K_PAD - C * 9)))  # lane-aligned K


# ---------------- deterministic parameter initialization ----------------
def _init(key, shape, scale=0.1):
    return (scale * jax.random.normal(key, shape)).astype(jnp.float32)


def make_params(key):
    keys = jax.random.split(key, 24)
    k = iter(keys)
    # Encoder params.
    # TODO(synk): torchvision resnet18 (pretrained) backbone cannot be reproduced
    # in-script; substituted a deterministic 3x3-conv + ReLU + global-avg-pool
    # per-frame feature extractor playing the same role (frame -> FEAT vector).
    conv_w = jnp.pad(_init(next(k), (K_RAW, FEAT)), ((0, K_PAD - K_RAW), (0, 0)))
    enc = {
        "conv_w": conv_w,
        "conv_b": _init(next(k), (1, FEAT)),
        "wih0": _init(next(k), (FEAT, GATES)),
        "whh0": _init(next(k), (HIDDEN, GATES)),
        # layers 1..3: [W_ih; W_hh] concatenated -> one (2H,4H) dot per layer
        "w_cat": _init(next(k), (NUM_LAYERS - 1, 2 * HIDDEN, GATES)),
        "b": _init(next(k), (NUM_LAYERS, 1, GATES)),
    }
    # Decoder params.
    # TODO(synk): the Decoder class is not defined in the source module; implemented
    # a standard embedding + 4-layer LSTM (input = [emb; context]) + linear head
    # matching the call signature decoder(input, hidden, cell, context) and
    # decoder.output_dim.
    emb = jnp.pad(_init(next(k), (VOCAB, EMB)), ((0, VOCAB_PAD - VOCAB), (0, 0)))
    w_emb = _init(next(k), (EMB, GATES))
    fc_w = jnp.pad(_init(next(k), (HIDDEN, VOCAB)), ((0, 0), (0, VOCAB_PAD - VOCAB)))
    fc_b = jnp.pad(_init(next(k), (1, VOCAB)), ((0, 0), (0, VOCAB_PAD - VOCAB)))
    dec = {
        # Embedding table fused with the embedding slice of layer-0 W_ih:
        # one full-K MXU dot per decode step instead of gather + small matmul.
        "emb_proj": jnp.dot(emb, w_emb),                     # (VOCAB_PAD, 4H)
        "w_ctx": _init(next(k), (HIDDEN, GATES)),
        "whh0": _init(next(k), (HIDDEN, GATES)),
        "w_cat": _init(next(k), (NUM_LAYERS - 1, 2 * HIDDEN, GATES)),
        "b": _init(next(k), (NUM_LAYERS, 1, GATES)),
        "fc_w": fc_w,
        "fc_b": fc_b,
    }
    return enc, dec


# ---------------- Seq2Seq forward (jitted, 2 pallas_calls total) ----------------
@jax.jit
def seq2seq_forward(imgs, target, tf_mask, enc, dec):
    B = imgs.shape[0]
    hn, cn = encoder_forward(imgs, enc)
    logits_pad = decode_all(target, tf_mask, hn, cn, dec)    # (trg_len-1, B, Vp)
    logits = logits_pad[:, :, :VOCAB]                        # drop pad lanes
    outputs = jnp.concatenate(
        [jnp.zeros((1, B, VOCAB), jnp.float32), logits], axis=0)
    return outputs


# ---------------- main ----------------
if __name__ == "__main__":
    key = jax.random.PRNGKey(0)
    k_params, k_imgs, k_tgt, k_tf = jax.random.split(key, 4)

    enc_params, dec_params = make_params(k_params)

    imgs = jax.random.normal(k_imgs, (BATCH, CHANNELS, TIME, IMG, IMG),
                             dtype=jnp.float32)
    target = jax.random.randint(k_tgt, (BATCH, TRG_LEN), 0, VOCAB,
                                dtype=jnp.int32)
    # Teacher-forcing decisions precomputed (deterministic under jit); same
    # semantics as per-step random.random() < ratio, different random stream.
    teacher_forcing_ratio = 0.5
    tf_mask = (jax.random.uniform(k_tf, (TRG_LEN,))
               < teacher_forcing_ratio).astype(jnp.int32)

    out = seq2seq_forward(imgs, target, tf_mask, enc_params, dec_params)
    out = jax.block_until_ready(out)
    assert out.shape == (TRG_LEN, BATCH, VOCAB)
    print("KERNEL_OK")
</pallas_src>

<mosaic_0001>
module attributes {stable_mosaic.version = 11 : i64} {
  func.func @_encoder_kernel(%arg0: i32, %arg1: memref<1x512x32xf32, #tpu.memory_space<vmem>>, %arg2: memref<32x32xf32, #tpu.memory_space<vmem>>, %arg3: memref<1x32xf32, #tpu.memory_space<vmem>>, %arg4: memref<32x128xf32, #tpu.memory_space<vmem>>, %arg5: memref<32x128xf32, #tpu.memory_space<vmem>>, %arg6: memref<3x64x128xf32, #tpu.memory_space<vmem>>, %arg7: memref<4x1x128xf32, #tpu.memory_space<vmem>>, %arg8: memref<8x32xf32, #tpu.memory_space<vmem>>, %arg9: memref<8x32xf32, #tpu.memory_space<vmem>>, %arg10: memref<8x32xf32, #tpu.memory_space<vmem>>, %arg11: memref<8x32xf32, #tpu.memory_space<vmem>>) attributes {dimension_semantics = [#tpu.dimension_semantics<arbitrary>], iteration_bounds = array<i64: 6>, scalar_prefetch = 0 : i64, scratch_operands = 2 : i64, tpu.core_type = #tpu.core_type<tc>, window_params = [{transform_indices = @transform_0, window_bounds = array<i64: 1, 512, 32>}, {pipeline_mode = #tpu.pipeline_mode<synchronous>, transform_indices = @transform_1, window_bounds = array<i64: 32, 32>}, {pipeline_mode = #tpu.pipeline_mode<synchronous>, transform_indices = @transform_2, window_bounds = array<i64: 1, 32>}, {pipeline_mode = #tpu.pipeline_mode<synchronous>, transform_indices = @transform_3, window_bounds = array<i64: 32, 128>}, {pipeline_mode = #tpu.pipeline_mode<synchronous>, transform_indices = @transform_4, window_bounds = array<i64: 32, 128>}, {pipeline_mode = #tpu.pipeline_mode<synchronous>, transform_indices = @transform_5, window_bounds = array<i64: 3, 64, 128>}, {pipeline_mode = #tpu.pipeline_mode<synchronous>, transform_indices = @transform_6, window_bounds = array<i64: 4, 1, 128>}, {pipeline_mode = #tpu.pipeline_mode<synchronous>, transform_indices = @transform_7, window_bounds = array<i64: 8, 32>}, {pipeline_mode = #tpu.pipeline_mode<synchronous>, transform_indices = @transform_8, window_bounds = array<i64: 8, 32>}]} {
    %c0_i32 = arith.constant 0 : i32
    %0 = arith.cmpi eq, %arg0, %c0_i32 : i32
    %1 = arith.extui %0 : i1 to i32
    %c0_i32_0 = arith.constant 0 : i32
    %2 = arith.cmpi ne, %1, %c0_i32_0 : i32
    scf.if %2 {
      %cst_72 = arith.constant 0.000000e+00 : f32
      %128 = vector.broadcast %cst_72 : f32 to vector<8x32xf32>
      %c0_73 = arith.constant 0 : index
      %c0_74 = arith.constant 0 : index
      %129 = vector.load %arg10[%c0_73, %c0_74] : memref<8x32xf32, #tpu.memory_space<vmem>>, vector<8x32xf32>
      tpu.vector_store %arg10[%c0_73, %c0_74], %128 {strides = array<i32>} : memref<8x32xf32, #tpu.memory_space<vmem>>, vector<8x32xf32>,
      %cst_75 = arith.constant 0.000000e+00 : f32
      %130 = vector.broadcast %cst_75 : f32 to vector<8x32xf32>
      %c0_76 = arith.constant 0 : index
      %c0_77 = arith.constant 0 : index
      %131 = vector.load %arg11[%c0_76, %c0_77] : memref<8x32xf32, #tpu.memory_space<vmem>>, vector<8x32xf32>
      tpu.vector_store %arg11[%c0_76, %c0_77], %130 {strides = array<i32>} : memref<8x32xf32, #tpu.memory_space<vmem>>, vector<8x32xf32>,
    } else {
    }
    %c0 = arith.constant 0 : index
    %c0_1 = arith.constant 0 : index
    %c0_2 = arith.constant 0 : index
    %3 = vector.load %arg1[%c0, %c0_1, %c0_2] : memref<1x512x32xf32, #tpu.memory_space<vmem>>, vector<1x512x32xf32>
    %4 = vector.shape_cast %3 : vector<1x512x32xf32> to vector<512x32xf32>
    %c0_3 = arith.constant 0 : index
    %c0_4 = arith.constant 0 : index
    %5 = vector.load %arg2[%c0_3, %c0_4] : memref<32x32xf32, #tpu.memory_space<vmem>>, vector<32x32xf32>
    %cst = arith.constant dense<0.000000e+00> : vector<512x32xf32>
    %6 = tpu.matmul %4, %5, %cst {dimension_numbers = #tpu.dot_dimension_numbers<[1], [0], [0], [1], [0, 0, 1, 1], [], []>} : vector<512x32xf32>, vector<32x32xf32>, vector<512x32xf32> -> vector<512x32xf32>
    %c0_5 = arith.constant 0 : index
    %c0_6 = arith.constant 0 : index
    %7 = vector.load %arg3[%c0_5, %c0_6] : memref<1x32xf32, #tpu.memory_space<vmem>>, vector<1x32xf32>
    %8 = vector.broadcast %7 : vector<1x32xf32> to vector<512x32xf32>
    %9 = arith.addf %6, %8 : vector<512x32xf32>
    %cst_7 = arith.constant 0.000000e+00 : f32
    %10 = vector.broadcast %cst_7 : f32 to vector<512x32xf32>
    %11 = arith.maximumf %9, %10 : vector<512x32xf32>
    %12 = vector.shape_cast %11 : vector<512x32xf32> to vector<2x256x32xf32>
    %cst_8 = arith.constant dense<0.000000e+00> : vector<2x32xf32>
    %13 = vector.multi_reduction <add>, %12, %cst_8 [1] : vector<2x256x32xf32> to vector<2x32xf32>
    %cst_9 = arith.constant 3.906250e-03 : f32
    %14 = vector.broadcast %cst_9 : f32 to vector<2x32xf32>
    %15 = arith.mulf %13, %14 : vector<2x32xf32>
    %c0_10 = arith.constant 0 : index
    %c0_11 = arith.constant 0 : index
    %16 = vector.load %arg4[%c0_10, %c0_11] : memref<32x128xf32, #tpu.memory_space<vmem>>, vector<32x128xf32>
    %cst_12 = arith.constant dense<0.000000e+00> : vector<2x128xf32>
    %17 = tpu.matmul %15, %16, %cst_12 {dimension_numbers = #tpu.dot_dimension_numbers<[1], [0], [0], [1], [0, 0, 1, 1], [], []>} : vector<2x32xf32>, vector<32x128xf32>, vector<2x128xf32> -> vector<2x128xf32>
    %c0_13 = arith.constant 0 : index
    %c0_14 = arith.constant 0 : index
    %18 = vector.load %arg10[%c0_13, %c0_14] : memref<8x32xf32, #tpu.memory_space<vmem>>, vector<2x32xf32>
    %c0_15 = arith.constant 0 : index
    %c0_16 = arith.constant 0 : index
    %19 = vector.load %arg11[%c0_15, %c0_16] : memref<8x32xf32, #tpu.memory_space<vmem>>, vector<2x32xf32>
    %c0_17 = arith.constant 0 : index
    %c0_18 = arith.constant 0 : index
    %20 = vector.load %arg5[%c0_17, %c0_18] : memref<32x128xf32, #tpu.memory_space<vmem>>, vector<32x128xf32>
    %cst_19 = arith.constant dense<0.000000e+00> : vector<2x128xf32>
    %21 = tpu.matmul %18, %20, %cst_19 {dimension_numbers = #tpu.dot_dimension_numbers<[1], [0], [0], [1], [0, 0, 1, 1], [], []>} : vector<2x32xf32>, vector<32x128xf32>, vector<2x128xf32> -> vector<2x128xf32>
    %22 = arith.addf %17, %21 : vector<2x128xf32>
    %c0_20 = arith.constant 0 : index
    %c0_21 = arith.constant 0 : index
    %c0_22 = arith.constant 0 : index
    %23 = vector.load %arg7[%c0_20, %c0_21, %c0_22] : memref<4x1x128xf32, #tpu.memory_space<vmem>>, vector<1x1x128xf32>
    %24 = vector.shape_cast %23 : vector<1x1x128xf32> to vector<1x128xf32>
    %25 = vector.broadcast %24 : vector<1x128xf32> to vector<2x128xf32>
    %26 = arith.addf %22, %25 : vector<2x128xf32>
    %27 = arith.negf %26 : vector<2x128xf32>
    %28 = math.exp %27 : vector<2x128xf32>
    %cst_23 = arith.constant 1.000000e+00 : f32
    %29 = vector.broadcast %cst_23 : f32 to vector<2x128xf32>
    %30 = arith.addf %29, %28 : vector<2x128xf32>
    %31 = arith.divf %29, %30 : vector<2x128xf32>
    %32 = math.tanh %26 : vector<2x128xf32>
    %33 = vector.extract_strided_slice %31 {offsets = [0, 0], sizes = [2, 32], strides = [1, 1]} : vector<2x128xf32> to vector<2x32xf32>
    %34 = vector.extract_strided_slice %31 {offsets = [0, 32], sizes = [2, 32], strides = [1, 1]} : vector<2x128xf32> to vector<2x32xf32>
    %35 = vector.extract_strided_slice %32 {offsets = [0, 64], sizes = [2, 32], strides = [1, 1]} : vector<2x128xf32> to vector<2x32xf32>
    %36 = vector.extract_strided_slice %31 {offsets = [0, 96], sizes = [2, 32], strides = [1, 1]} : vector<2x128xf32> to vector<2x32xf32>
    %37 = arith.mulf %34, %19 : vector<2x32xf32>
    %38 = arith.mulf %33, %35 : vector<2x32xf32>
    %39 = arith.addf %37, %38 : vector<2x32xf32>
    %40 = math.tanh %39 : vector<2x32xf32>
    %41 = arith.mulf %36, %40 : vector<2x32xf32>
    %c0_24 = arith.constant 0 : index
    %c0_25 = arith.constant 0 : index
    %42 = vector.load %arg10[%c0_24, %c0_25] : memref<8x32xf32, #tpu.memory_space<vmem>>, vector<2x32xf32>
    tpu.vector_store %arg10[%c0_24, %c0_25], %41 {strides = array<i32>} : memref<8x32xf32, #tpu.memory_space<vmem>>, vector<2x32xf32>,
    %c0_26 = arith.constant 0 : index
    %c0_27 = arith.constant 0 : index
    %43 = vector.load %arg11[%c0_26, %c0_27] : memref<8x32xf32, #tpu.memory_space<vmem>>, vector<2x32xf32>
    tpu.vector_store %arg11[%c0_26, %c0_27], %39 {strides = array<i32>} : memref<8x32xf32, #tpu.memory_space<vmem>>, vector<2x32xf32>,
    %c2 = arith.constant 2 : index
    %c0_28 = arith.constant 0 : index
    %44 = vector.load %arg10[%c2, %c0_28] : memref<8x32xf32, #tpu.memory_space<vmem>>, vector<2x32xf32>
    %c2_29 = arith.constant 2 : index
    %c0_30 = arith.constant 0 : index
    %45 = vector.load %arg11[%c2_29, %c0_30] : memref<8x32xf32, #tpu.memory_space<vmem>>, vector<2x32xf32>
    %46 = tpu.concatenate %41, %44 in 1 : vector<2x32xf32>, vector<2x32xf32> -> vector<2x64xf32>
    %c0_31 = arith.constant 0 : index
    %c0_32 = arith.constant 0 : index
    %c0_33 = arith.constant 0 : index
    %47 = vector.load %arg6[%c0_31, %c0_32, %c0_33] : memref<3x64x128xf32, #tpu.memory_space<vmem>>, vector<1x64x128xf32>
    %48 = vector.shape_cast %47 : vector<1x64x128xf32> to vector<64x128xf32>
    %cst_34 = arith.constant dense<0.000000e+00> : vector<2x128xf32>
    %49 = tpu.matmul %46, %48, %cst_34 {dimension_numbers = #tpu.dot_dimension_numbers<[1], [0], [0], [1], [0, 0, 1, 1], [], []>} : vector<2x64xf32>, vector<64x128xf32>, vector<2x128xf32> -> vector<2x128xf32>
    %c1 = arith.constant 1 : index
    %c0_35 = arith.constant 0 : index
    %c0_36 = arith.constant 0 : index
    %50 = vector.load %arg7[%c1, %c0_35, %c0_36] : memref<4x1x128xf32, #tpu.memory_space<vmem>>, vector<1x1x128xf32>
    %51 = vector.shape_cast %50 : vector<1x1x128xf32> to vector<1x128xf32>
    %52 = vector.broadcast %51 : vector<1x128xf32> to vector<2x128xf32>
    %53 = arith.addf %49, %52 : vector<2x128xf32>
    %54 = arith.negf %53 : vector<2x128xf32>
    %55 = math.exp %54 : vector<2x128xf32>
    %cst_37 = arith.constant 1.000000e+00 : f32
    %56 = vector.broadcast %cst_37 : f32 to vector<2x128xf32>
    %57 = arith.addf %56, %55 : vector<2x128xf32>
    %58 = arith.divf %56, %57 : vector<2x128xf32>
    %59 = math.tanh %53 : vector<2x128xf32>
    %60 = vector.extract_strided_slice %58 {offsets = [0, 0], sizes = [2, 32], strides = [1, 1]} : vector<2x128xf32> to vector<2x32xf32>
    %61 = vector.extract_strided_slice %58 {offsets = [0, 32], sizes = [2, 32], strides = [1, 1]} : vector<2x128xf32> to vector<2x32xf32>
    %62 = vector.extract_strided_slice %59 {offsets = [0, 64], sizes = [2, 32], strides = [1, 1]} : vector<2x128xf32> to vector<2x32xf32>
    %63 = vector.extract_strided_slice %58 {offsets = [0, 96], sizes = [2, 32], strides = [1, 1]} : vector<2x128xf32> to vector<2x32xf32>
    %64 = arith.mulf %61, %45 : vector<2x32xf32>
    %65 = arith.mulf %60, %62 : vector<2x32xf32>
    %66 = arith.addf %64, %65 : vector<2x32xf32>
    %67 = math.tanh %66 : vector<2x32xf32>
    %68 = arith.mulf %63, %67 : vector<2x32xf32>
    %c2_38 = arith.constant 2 : index
    %c0_39 = arith.constant 0 : index
    %69 = vector.load %arg10[%c2_38, %c0_39] : memref<8x32xf32, #tpu.memory_space<vmem>>, vector<2x32xf32>
    tpu.vector_store %arg10[%c2_38, %c0_39], %68 {strides = array<i32>} : memref<8x32xf32, #tpu.memory_space<vmem>>, vector<2x32xf32>,
    %c2_40 = arith.constant 2 : index
    %c0_41 = arith.constant 0 : index
    %70 = vector.load %arg11[%c2_40, %c0_41] : memref<8x32xf32, #tpu.memory_space<vmem>>, vector<2x32xf32>
    tpu.vector_store %arg11[%c2_40, %c0_41], %66 {strides = array<i32>} : memref<8x32xf32, #tpu.memory_space<vmem>>, vector<2x32xf32>,
    %c4 = arith.constant 4 : index
    %c0_42 = arith.constant 0 : index
    %71 = vector.load %arg10[%c4, %c0_42] : memref<8x32xf32, #tpu.memory_space<vmem>>, vector<2x32xf32>
    %c4_43 = arith.constant 4 : index
    %c0_44 = arith.constant 0 : index
    %72 = vector.load %arg11[%c4_43, %c0_44] : memref<8x32xf32, #tpu.memory_space<vmem>>, vector<2x32xf32>
    %73 = tpu.concatenate %68, %71 in 1 : vector<2x32xf32>, vector<2x32xf32> -> vector<2x64xf32>
    %c1_45 = arith.constant 1 : index
    %c0_46 = arith.constant 0 : index
    %c0_47 = arith.constant 0 : index
    %74 = vector.load %arg6[%c1_45, %c0_46, %c0_47] : memref<3x64x128xf32, #tpu.memory_space<vmem>>, vector<1x64x128xf32>
    %75 = vector.shape_cast %74 : vector<1x64x128xf32> to vector<64x128xf32>
    %cst_48 = arith.constant dense<0.000000e+00> : vector<2x128xf32>
    %76 = tpu.matmul %73, %75, %cst_48 {dimension_numbers = #tpu.dot_dimension_numbers<[1], [0], [0], [1], [0, 0, 1, 1], [], []>} : vector<2x64xf32>, vector<64x128xf32>, vector<2x128xf32> -> vector<2x128xf32>
    %c2_49 = arith.constant 2 : index
    %c0_50 = arith.constant 0 : index
    %c0_51 = arith.constant 0 : index
    %77 = vector.load %arg7[%c2_49, %c0_50, %c0_51] : memref<4x1x128xf32, #tpu.memory_space<vmem>>, vector<1x1x128xf32>
    %78 = vector.shape_cast %77 : vector<1x1x128xf32> to vector<1x128xf32>
    %79 = vector.broadcast %78 : vector<1x128xf32> to vector<2x128xf32>
    %80 = arith.addf %76, %79 : vector<2x128xf32>
    %81 = arith.negf %80 : vector<2x128xf32>
    %82 = math.exp %81 : vector<2x128xf32>
    %cst_52 = arith.constant 1.000000e+00 : f32
    %83 = vector.broadcast %cst_52 : f32 to vector<2x128xf32>
    %84 = arith.addf %83, %82 : vector<2x128xf32>
    %85 = arith.divf %83, %84 : vector<2x128xf32>
    %86 = math.tanh %80 : vector<2x128xf32>
    %87 = vector.extract_strided_slice %85 {offsets = [0, 0], sizes = [2, 32], strides = [1, 1]} : vector<2x128xf32> to vector<2x32xf32>
    %88 = vector.extract_strided_slice %85 {offsets = [0, 32], sizes = [2, 32], strides = [1, 1]} : vector<2x128xf32> to vector<2x32xf32>
    %89 = vector.extract_strided_slice %86 {offsets = [0, 64], sizes = [2, 32], strides = [1, 1]} : vector<2x128xf32> to vector<2x32xf32>
    %90 = vector.extract_strided_slice %85 {offsets = [0, 96], sizes = [2, 32], strides = [1, 1]} : vector<2x128xf32> to vector<2x32xf32>
    %91 = arith.mulf %88, %72 : vector<2x32xf32>
    %92 = arith.mulf %87, %89 : vector<2x32xf32>
    %93 = arith.addf %91, %92 : vector<2x32xf32>
    %94 = math.tanh %93 : vector<2x32xf32>
    %95 = arith.mulf %90, %94 : vector<2x32xf32>
    %c4_53 = arith.constant 4 : index
    %c0_54 = arith.constant 0 : index
    %96 = vector.load %arg10[%c4_53, %c0_54] : memref<8x32xf32, #tpu.memory_space<vmem>>, vector<2x32xf32>
    tpu.vector_store %arg10[%c4_53, %c0_54], %95 {strides = array<i32>} : memref<8x32xf32, #tpu.memory_space<vmem>>, vector<2x32xf32>,
    %c4_55 = arith.constant 4 : index
    %c0_56 = arith.constant 0 : index
    %97 = vector.load %arg11[%c4_55, %c0_56] : memref<8x32xf32, #tpu.memory_space<vmem>>, vector<2x32xf32>
    tpu.vector_store %arg11[%c4_55, %c0_56], %93 {strides = array<i32>} : memref<8x32xf32, #tpu.memory_space<vmem>>, vector<2x32xf32>,
    %c6 = arith.constant 6 : index
    %c0_57 = arith.constant 0 : index
    %98 = vector.load %arg10[%c6, %c0_57] : memref<8x32xf32, #tpu.memory_space<vmem>>, vector<2x32xf32>
    %c6_58 = arith.constant 6 : index
    %c0_59 = arith.constant 0 : index
    %99 = vector.load %arg11[%c6_58, %c0_59] : memref<8x32xf32, #tpu.memory_space<vmem>>, vector<2x32xf32>
    %100 = tpu.concatenate %95, %98 in 1 : vector<2x32xf32>, vector<2x32xf32> -> vector<2x64xf32>
    %c2_60 = arith.constant 2 : index
    %c0_61 = arith.constant 0 : index
    %c0_62 = arith.constant 0 : index
    %101 = vector.load %arg6[%c2_60, %c0_61, %c0_62] : memref<3x64x128xf32, #tpu.memory_space<vmem>>, vector<1x64x128xf32>
    %102 = vector.shape_cast %101 : vector<1x64x128xf32> to vector<64x128xf32>
    %cst_63 = arith.constant dense<0.000000e+00> : vector<2x128xf32>
    %103 = tpu.matmul %100, %102, %cst_63 {dimension_numbers = #tpu.dot_dimension_numbers<[1], [0], [0], [1], [0, 0, 1, 1], [], []>} : vector<2x64xf32>, vector<64x128xf32>, vector<2x128xf32> -> vector<2x128xf32>
    %c3 = arith.constant 3 : index
    %c0_64 = arith.constant 0 : index
    %c0_65 = arith.constant 0 : index
    %104 = vector.load %arg7[%c3, %c0_64, %c0_65] : memref<4x1x128xf32, #tpu.memory_space<vmem>>, vector<1x1x128xf32>
    %105 = vector.shape_cast %104 : vector<1x1x128xf32> to vector<1x128xf32>
    %106 = vector.broadcast %105 : vector<1x128xf32> to vector<2x128xf32>
    %107 = arith.addf %103, %106 : vector<2x128xf32>
    %108 = arith.negf %107 : vector<2x128xf32>
    %109 = math.exp %108 : vector<2x128xf32>
    %cst_66 = arith.constant 1.000000e+00 : f32
    %110 = vector.broadcast %cst_66 : f32 to vector<2x128xf32>
    %111 = arith.addf %110, %109 : vector<2x128xf32>
    %112 = arith.divf %110, %111 : vector<2x128xf32>
    %113 = math.tanh %107 : vector<2x128xf32>
    %114 = vector.extract_strided_slice %112 {offsets = [0, 0], sizes = [2, 32], strides = [1, 1]} : vector<2x128xf32> to vector<2x32xf32>
    %115 = vector.extract_strided_slice %112 {offsets = [0, 32], sizes = [2, 32], strides = [1, 1]} : vector<2x128xf32> to vector<2x32xf32>
    %116 = vector.extract_strided_slice %113 {offsets = [0, 64], sizes = [2, 32], strides = [1, 1]} : vector<2x128xf32> to vector<2x32xf32>
    %117 = vector.extract_strided_slice %112 {offsets = [0, 96], sizes = [2, 32], strides = [1, 1]} : vector<2x128xf32> to vector<2x32xf32>
    %118 = arith.mulf %115, %99 : vector<2x32xf32>
    %119 = arith.mulf %114, %116 : vector<2x32xf32>
    %120 = arith.addf %118, %119 : vector<2x32xf32>
    %121 = math.tanh %120 : vector<2x32xf32>
    %122 = arith.mulf %117, %121 : vector<2x32xf32>
    %c6_67 = arith.constant 6 : index
    %c0_68 = arith.constant 0 : index
    %123 = vector.load %arg10[%c6_67, %c0_68] : memref<8x32xf32, #tpu.memory_space<vmem>>, vector<2x32xf32>
    tpu.vector_store %arg10[%c6_67, %c0_68], %122 {strides = array<i32>} : memref<8x32xf32, #tpu.memory_space<vmem>>, vector<2x32xf32>,
    %c6_69 = arith.constant 6 : index
    %c0_70 = arith.constant 0 : index
    %124 = vector.load %arg11[%c6_69, %c0_70] : memref<8x32xf32, #tpu.memory_space<vmem>>, vector<2x32xf32>
    tpu.vector_store %arg11[%c6_69, %c0_70], %120 {strides = array<i32>} : memref<8x32xf32, #tpu.memory_space<vmem>>, vector<2x32xf32>,
    %c5_i32 = arith.constant 5 : i32
    %125 = arith.cmpi eq, %arg0, %c5_i32 : i32
    %126 = arith.extui %125 : i1 to i32
    %c0_i32_71 = arith.constant 0 : i32
    %127 = arith.cmpi ne, %126, %c0_i32_71 : i32
    scf.if %127 {
      %c0_72 = arith.constant 0 : index
      %c0_73 = arith.constant 0 : index
      %128 = vector.load %arg10[%c0_72, %c0_73] : memref<8x32xf32, #tpu.memory_space<vmem>>, vector<8x32xf32>
      %c0_74 = arith.constant 0 : index
      %c0_75 = arith.constant 0 : index
      %129 = vector.load %arg8[%c0_74, %c0_75] : memref<8x32xf32, #tpu.memory_space<vmem>>, vector<8x32xf32>
      tpu.vector_store %arg8[%c0_74, %c0_75], %128 {strides = array<i32>} : memref<8x32xf32, #tpu.memory_space<vmem>>, vector<8x32xf32>,
      %c0_76 = arith.constant 0 : index
      %c0_77 = arith.constant 0 : index
      %130 = vector.load %arg11[%c0_76, %c0_77] : memref<8x32xf32, #tpu.memory_space<vmem>>, vector<8x32xf32>
      %c0_78 = arith.constant 0 : index
      %c0_79 = arith.constant 0 : index
      %131 = vector.load %arg9[%c0_78, %c0_79] : memref<8x32xf32, #tpu.memory_space<vmem>>, vector<8x32xf32>
      tpu.vector_store %arg9[%c0_78, %c0_79], %130 {strides = array<i32>} : memref<8x32xf32, #tpu.memory_space<vmem>>, vector<8x32xf32>,
    } else {
    }
    return
  }
  func.func @transform_0(%arg0: i32) -> (i32, i32, i32) {
    %c0_i32 = arith.constant 0 : i32
    %c0_i32_0 = arith.constant 0 : i32
    %c0_i32_1 = arith.constant 0 : i32
    return %arg0, %c0_i32, %c0_i32_0 : i32, i32, i32
  }
  func.func @transform_1(%arg0: i32) -> (i32, i32) {
    %c0_i32 = arith.constant 0 : i32
    %c0_i32_0 = arith.constant 0 : i32
    %c0_i32_1 = arith.constant 0 : i32
    return %c0_i32, %c0_i32_0 : i32, i32
  }
  func.func @transform_2(%arg0: i32) -> (i32, i32) {
    %c0_i32 = arith.constant 0 : i32
    %c0_i32_0 = arith.constant 0 : i32
    %c0_i32_1 = arith.constant 0 : i32
    return %c0_i32, %c0_i32_0 : i32, i32
  }
  func.func @transform_3(%arg0: i32) -> (i32, i32) {
    %c0_i32 = arith.constant 0 : i32
    %c0_i32_0 = arith.constant 0 : i32
    %c0_i32_1 = arith.constant 0 : i32
    return %c0_i32, %c0_i32_0 : i32, i32
  }
  func.func @transform_4(%arg0: i32) -> (i32, i32) {
    %c0_i32 = arith.constant 0 : i32
    %c0_i32_0 = arith.constant 0 : i32
    %c0_i32_1 = arith.constant 0 : i32
    return %c0_i32, %c0_i32_0 : i32, i32
  }
  func.func @transform_5(%arg0: i32) -> (i32, i32, i32) {
    %c0_i32 = arith.constant 0 : i32
    %c0_i32_0 = arith.constant 0 : i32
    %c0_i32_1 = arith.constant 0 : i32
    %c0_i32_2 = arith.constant 0 : i32
    return %c0_i32, %c0_i32_0, %c0_i32_1 : i32, i32, i32
  }
  func.func @transform_6(%arg0: i32) -> (i32, i32, i32) {
    %c0_i32 = arith.constant 0 : i32
    %c0_i32_0 = arith.constant 0 : i32
    %c0_i32_1 = arith.constant 0 : i32
    %c0_i32_2 = arith.constant 0 : i32
    return %c0_i32, %c0_i32_0, %c0_i32_1 : i32, i32, i32
  }
  func.func @transform_7(%arg0: i32) -> (i32, i32) {
    %c0_i32 = arith.constant 0 : i32
    %c0_i32_0 = arith.constant 0 : i32
    %c0_i32_1 = arith.constant 0 : i32
    return %c0_i32, %c0_i32_0 : i32, i32
  }
  func.func @transform_8(%arg0: i32) -> (i32, i32) {
    %c0_i32 = arith.constant 0 : i32
    %c0_i32_0 = arith.constant 0 : i32
    %c0_i32_1 = arith.constant 0 : i32
    return %c0_i32, %c0_i32_0 : i32, i32
  }
}

module attributes {stable_mosaic.version = 11 : i64} {
  func.func @_decoder_kernel(%arg0: i32, %arg1: memref<2x5xi32, #tpu.memory_space<smem>>, %arg2: memref<5xi32, #tpu.memory_space<smem>>, %arg3: memref<8x32xf32, #tpu.memory_space<vmem>>, %arg4: memref<8x32xf32, #tpu.memory_space<vmem>>, %arg5: memref<128x128xf32, #tpu.memory_space<vmem>>, %arg6: memref<32x128xf32, #tpu.memory_space<vmem>>, %arg7: memref<32x128xf32, #tpu.memory_space<vmem>>, %arg8: memref<3x64x128xf32, #tpu.memory_space<vmem>>, %arg9: memref<4x1x128xf32, #tpu.memory_space<vmem>>, %arg10: memref<32x128xf32, #tpu.memory_space<vmem>>, %arg11: memref<1x128xf32, #tpu.memory_space<vmem>>, %arg12: memref<1x2x128xf32, #tpu.memory_space<vmem>>, %arg13: memref<8x32xf32, #tpu.memory_space<vmem>>, %arg14: memref<8x32xf32, #tpu.memory_space<vmem>>, %arg15: memref<2x128xf32, #tpu.memory_space<vmem>>, %arg16: memref<2x128xf32, #tpu.memory_space<vmem>>) attributes {dimension_semantics = [#tpu.dimension_semantics<arbitrary>], iteration_bounds = array<i64: 4>, scalar_prefetch = 2 : i64, scratch_operands = 4 : i64, tpu.core_type = #tpu.core_type<tc>, window_params = [{pipeline_mode = #tpu.pipeline_mode<synchronous>, transform_indices = @transform_0, window_bounds = array<i64: 8, 32>}, {pipeline_mode = #tpu.pipeline_mode<synchronous>, transform_indices = @transform_1, window_bounds = array<i64: 8, 32>}, {pipeline_mode = #tpu.pipeline_mode<synchronous>, transform_indices = @transform_2, window_bounds = array<i64: 128, 128>}, {pipeline_mode = #tpu.pipeline_mode<synchronous>, transform_indices = @transform_3, window_bounds = array<i64: 32, 128>}, {pipeline_mode = #tpu.pipeline_mode<synchronous>, transform_indices = @transform_4, window_bounds = array<i64: 32, 128>}, {pipeline_mode = #tpu.pipeline_mode<synchronous>, transform_indices = @transform_5, window_bounds = array<i64: 3, 64, 128>}, {pipeline_mode = #tpu.pipeline_mode<synchronous>, transform_indices = @transform_6, window_bounds = array<i64: 4, 1, 128>}, {pipeline_mode = #tpu.pipeline_mode<synchronous>, transform_indices = @transform_7, window_bounds = array<i64: 32, 128>}, {pipeline_mode = #tpu.pipeline_mode<synchronous>, transform_indices = @transform_8, window_bounds = array<i64: 1, 128>}, {transform_indices = @transform_9, window_bounds = array<i64: 1, 2, 128>}]} {
    %c0_i32 = arith.constant 0 : i32
    %0 = arith.cmpi eq, %arg0, %c0_i32 : i32
    %1 = arith.extui %0 : i1 to i32
    %c0_i32_0 = arith.constant 0 : i32
    %2 = arith.cmpi ne, %1, %c0_i32_0 : i32
    scf.if %2 {
      %c0_86 = arith.constant 0 : index
      %c0_87 = arith.constant 0 : index
      %178 = vector.load %arg3[%c0_86, %c0_87] : memref<8x32xf32, #tpu.memory_space<vmem>>, vector<8x32xf32>
      %c0_88 = arith.constant 0 : index
      %c0_89 = arith.constant 0 : index
      %179 = vector.load %arg13[%c0_88, %c0_89] : memref<8x32xf32, #tpu.memory_space<vmem>>, vector<8x32xf32>
      tpu.vector_store %arg13[%c0_88, %c0_89], %178 {strides = array<i32>} : memref<8x32xf32, #tpu.memory_space<vmem>>, vector<8x32xf32>,
      %c0_90 = arith.constant 0 : index
      %c0_91 = arith.constant 0 : index
      %180 = vector.load %arg4[%c0_90, %c0_91] : memref<8x32xf32, #tpu.memory_space<vmem>>, vector<8x32xf32>
      %c0_92 = arith.constant 0 : index
      %c0_93 = arith.constant 0 : index
      %181 = vector.load %arg14[%c0_92, %c0_93] : memref<8x32xf32, #tpu.memory_space<vmem>>, vector<8x32xf32>
      tpu.vector_store %arg14[%c0_92, %c0_93], %180 {strides = array<i32>} : memref<8x32xf32, #tpu.memory_space<vmem>>, vector<8x32xf32>,
      %c6_94 = arith.constant 6 : index
      %c0_95 = arith.constant 0 : index
      %182 = vector.load %arg3[%c6_94, %c0_95] : memref<8x32xf32, #tpu.memory_space<vmem>>, vector<2x32xf32>
      %c0_96 = arith.constant 0 : index
      %c0_97 = arith.constant 0 : index
      %183 = vector.load %arg6[%c0_96, %c0_97] : memref<32x128xf32, #tpu.memory_space<vmem>>, vector<32x128xf32>
      %cst_98 = arith.constant dense<0.000000e+00> : vector<2x128xf32>
      %184 = tpu.matmul %182, %183, %cst_98 {dimension_numbers = #tpu.dot_dimension_numbers<[1], [0], [0], [1], [0, 0, 1, 1], [], []>} : vector<2x32xf32>, vector<32x128xf32>, vector<2x128xf32> -> vector<2x128xf32>
      %c0_99 = arith.constant 0 : index
      %c0_100 = arith.constant 0 : index
      %185 = vector.load %arg16[%c0_99, %c0_100] : memref<2x128xf32, #tpu.memory_space<vmem>>, vector<2x128xf32>
      tpu.vector_store %arg16[%c0_99, %c0_100], %184 {strides = array<i32>} : memref<2x128xf32, #tpu.memory_space<vmem>>, vector<2x128xf32>,
      %186 = tpu.iota {dimensions = array<i32: 0>} : vector<2x128xi32>
      %187 = tpu.iota {dimensions = array<i32: 1>} : vector<2x128xi32>
      %cst_101 = arith.constant 0.000000e+00 : f32
      %188 = vector.broadcast %cst_101 : f32 to vector<2x128xf32>
      %c0_i32_102 = arith.constant 0 : i32
      %189 = vector.broadcast %c0_i32_102 : i32 to vector<2x128xi32>
      %190 = arith.cmpi eq, %186, %189 : vector<2x128xi32>
      %c0_103 = arith.constant 0 : index
      %c0_104 = arith.constant 0 : index
      %191 = memref.load %arg1[%c0_103, %c0_104] : memref<2x5xi32, #tpu.memory_space<smem>>
      %192 = vector.broadcast %191 : i32 to vector<2x128xi32>
      %193 = arith.cmpi eq, %187, %192 : vector<2x128xi32>
      %194 = arith.andi %190, %193 : vector<2x128xi1>
      %195 = arith.extui %194 : vector<2x128xi1> to vector<2x128xi32>
      %196 = arith.sitofp %195 : vector<2x128xi32> to vector<2x128xf32>
      %197 = arith.addf %188, %196 : vector<2x128xf32>
      %c1_i32_105 = arith.constant 1 : i32
      %198 = vector.broadcast %c1_i32_105 : i32 to vector<2x128xi32>
      %199 = arith.cmpi eq, %186, %198 : vector<2x128xi32>
      %c1_106 = arith.constant 1 : index
      %c0_107 = arith.constant 0 : index
      %200 = memref.load %arg1[%c1_106, %c0_107] : memref<2x5xi32, #tpu.memory_space<smem>>
      %201 = vector.broadcast %200 : i32 to vector<2x128xi32>
      %202 = arith.cmpi eq, %187, %201 : vector<2x128xi32>
      %203 = arith.andi %199, %202 : vector<2x128xi1>
      %204 = arith.extui %203 : vector<2x128xi1> to vector<2x128xi32>
      %205 = arith.sitofp %204 : vector<2x128xi32> to vector<2x128xf32>
      %206 = arith.addf %197, %205 : vector<2x128xf32>
      %c0_108 = arith.constant 0 : index
      %c0_109 = arith.constant 0 : index
      %207 = vector.load %arg15[%c0_108, %c0_109] : memref<2x128xf32, #tpu.memory_space<vmem>>, vector<2x128xf32>
      tpu.vector_store %arg15[%c0_108, %c0_109], %206 {strides = array<i32>} : memref<2x128xf32, #tpu.memory_space<vmem>>, vector<2x128xf32>,
    } else {
    }
    %c0 = arith.constant 0 : index
    %c0_1 = arith.constant 0 : index
    %3 = vector.load %arg15[%c0, %c0_1] : memref<2x128xf32, #tpu.memory_space<vmem>>, vector<2x128xf32>
    %c0_2 = arith.constant 0 : index
    %c0_3 = arith.constant 0 : index
    %4 = vector.load %arg5[%c0_2, %c0_3] : memref<128x128xf32, #tpu.memory_space<vmem>>, vector<128x128xf32>
    %cst = arith.constant dense<0.000000e+00> : vector<2x128xf32>
    %5 = tpu.matmul %3, %4, %cst {dimension_numbers = #tpu.dot_dimension_numbers<[1], [0], [0], [1], [0, 0, 1, 1], [], []>} : vector<2x128xf32>, vector<128x128xf32>, vector<2x128xf32> -> vector<2x128xf32>
    %c0_4 = arith.constant 0 : index
    %c0_5 = arith.constant 0 : index
    %6 = vector.load %arg16[%c0_4, %c0_5] : memref<2x128xf32, #tpu.memory_space<vmem>>, vector<2x128xf32>
    %7 = arith.addf %5, %6 : vector<2x128xf32>
    %c0_6 = arith.constant 0 : index
    %c0_7 = arith.constant 0 : index
    %8 = vector.load %arg13[%c0_6, %c0_7] : memref<8x32xf32, #tpu.memory_space<vmem>>, vector<2x32xf32>
    %c0_8 = arith.constant 0 : index
    %c0_9 = arith.constant 0 : index
    %9 = vector.load %arg14[%c0_8, %c0_9] : memref<8x32xf32, #tpu.memory_space<vmem>>, vector<2x32xf32>
    %c0_10 = arith.constant 0 : index
    %c0_11 = arith.constant 0 : index
    %10 = vector.load %arg7[%c0_10, %c0_11] : memref<32x128xf32, #tpu.memory_space<vmem>>, vector<32x128xf32>
    %cst_12 = arith.constant dense<0.000000e+00> : vector<2x128xf32>
    %11 = tpu.matmul %8, %10, %cst_12 {dimension_numbers = #tpu.dot_dimension_numbers<[1], [0], [0], [1], [0, 0, 1, 1], [], []>} : vector<2x32xf32>, vector<32x128xf32>, vector<2x128xf32> -> vector<2x128xf32>
    %12 = arith.addf %7, %11 : vector<2x128xf32>
    %c0_13 = arith.constant 0 : index
    %c0_14 = arith.constant 0 : index
    %c0_15 = arith.constant 0 : index
    %13 = vector.load %arg9[%c0_13, %c0_14, %c0_15] : memref<4x1x128xf32, #tpu.memory_space<vmem>>, vector<1x1x128xf32>
    %14 = vector.shape_cast %13 : vector<1x1x128xf32> to vector<1x128xf32>
    %15 = vector.broadcast %14 : vector<1x128xf32> to vector<2x128xf32>
    %16 = arith.addf %12, %15 : vector<2x128xf32>
    %17 = arith.negf %16 : vector<2x128xf32>
    %18 = math.exp %17 : vector<2x128xf32>
    %cst_16 = arith.constant 1.000000e+00 : f32
    %19 = vector.broadcast %cst_16 : f32 to vector<2x128xf32>
    %20 = arith.addf %19, %18 : vector<2x128xf32>
    %21 = arith.divf %19, %20 : vector<2x128xf32>
    %22 = math.tanh %16 : vector<2x128xf32>
    %23 = vector.extract_strided_slice %21 {offsets = [0, 0], sizes = [2, 32], strides = [1, 1]} : vector<2x128xf32> to vector<2x32xf32>
    %24 = vector.extract_strided_slice %21 {offsets = [0, 32], sizes = [2, 32], strides = [1, 1]} : vector<2x128xf32> to vector<2x32xf32>
    %25 = vector.extract_strided_slice %22 {offsets = [0, 64], sizes = [2, 32], strides = [1, 1]} : vector<2x128xf32> to vector<2x32xf32>
    %26 = vector.extract_strided_slice %21 {offsets = [0, 96], sizes = [2, 32], strides = [1, 1]} : vector<2x128xf32> to vector<2x32xf32>
    %27 = arith.mulf %24, %9 : vector<2x32xf32>
    %28 = arith.mulf %23, %25 : vector<2x32xf32>
    %29 = arith.addf %27, %28 : vector<2x32xf32>
    %30 = math.tanh %29 : vector<2x32xf32>
    %31 = arith.mulf %26, %30 : vector<2x32xf32>
    %c0_17 = arith.constant 0 : index
    %c0_18 = arith.constant 0 : index
    %32 = vector.load %arg13[%c0_17, %c0_18] : memref<8x32xf32, #tpu.memory_space<vmem>>, vector<2x32xf32>
    tpu.vector_store %arg13[%c0_17, %c0_18], %31 {strides = array<i32>} : memref<8x32xf32, #tpu.memory_space<vmem>>, vector<2x32xf32>,
    %c0_19 = arith.constant 0 : index
    %c0_20 = arith.constant 0 : index
    %33 = vector.load %arg14[%c0_19, %c0_20] : memref<8x32xf32, #tpu.memory_space<vmem>>, vector<2x32xf32>
    tpu.vector_store %arg14[%c0_19, %c0_20], %29 {strides = array<i32>} : memref<8x32xf32, #tpu.memory_space<vmem>>, vector<2x32xf32>,
    %c2 = arith.constant 2 : index
    %c0_21 = arith.constant 0 : index
    %34 = vector.load %arg13[%c2, %c0_21] : memref<8x32xf32, #tpu.memory_space<vmem>>, vector<2x32xf32>
    %c2_22 = arith.constant 2 : index
    %c0_23 = arith.constant 0 : index
    %35 = vector.load %arg14[%c2_22, %c0_23] : memref<8x32xf32, #tpu.memory_space<vmem>>, vector<2x32xf32>
    %36 = tpu.concatenate %31, %34 in 1 : vector<2x32xf32>, vector<2x32xf32> -> vector<2x64xf32>
    %c0_24 = arith.constant 0 : index
    %c0_25 = arith.constant 0 : index
    %c0_26 = arith.constant 0 : index
    %37 = vector.load %arg8[%c0_24, %c0_25, %c0_26] : memref<3x64x128xf32, #tpu.memory_space<vmem>>, vector<1x64x128xf32>
    %38 = vector.shape_cast %37 : vector<1x64x128xf32> to vector<64x128xf32>
    %cst_27 = arith.constant dense<0.000000e+00> : vector<2x128xf32>
    %39 = tpu.matmul %36, %38, %cst_27 {dimension_numbers = #tpu.dot_dimension_numbers<[1], [0], [0], [1], [0, 0, 1, 1], [], []>} : vector<2x64xf32>, vector<64x128xf32>, vector<2x128xf32> -> vector<2x128xf32>
    %c1 = arith.constant 1 : index
    %c0_28 = arith.constant 0 : index
    %c0_29 = arith.constant 0 : index
    %40 = vector.load %arg9[%c1, %c0_28, %c0_29] : memref<4x1x128xf32, #tpu.memory_space<vmem>>, vector<1x1x128xf32>
    %41 = vector.shape_cast %40 : vector<1x1x128xf32> to vector<1x128xf32>
    %42 = vector.broadcast %41 : vector<1x128xf32> to vector<2x128xf32>
    %43 = arith.addf %39, %42 : vector<2x128xf32>
    %44 = arith.negf %43 : vector<2x128xf32>
    %45 = math.exp %44 : vector<2x128xf32>
    %cst_30 = arith.constant 1.000000e+00 : f32
    %46 = vector.broadcast %cst_30 : f32 to vector<2x128xf32>
    %47 = arith.addf %46, %45 : vector<2x128xf32>
    %48 = arith.divf %46, %47 : vector<2x128xf32>
    %49 = math.tanh %43 : vector<2x128xf32>
    %50 = vector.extract_strided_slice %48 {offsets = [0, 0], sizes = [2, 32], strides = [1, 1]} : vector<2x128xf32> to vector<2x32xf32>
    %51 = vector.extract_strided_slice %48 {offsets = [0, 32], sizes = [2, 32], strides = [1, 1]} : vector<2x128xf32> to vector<2x32xf32>
    %52 = vector.extract_strided_slice %49 {offsets = [0, 64], sizes = [2, 32], strides = [1, 1]} : vector<2x128xf32> to vector<2x32xf32>
    %53 = vector.extract_strided_slice %48 {offsets = [0, 96], sizes = [2, 32], strides = [1, 1]} : vector<2x128xf32> to vector<2x32xf32>
    %54 = arith.mulf %51, %35 : vector<2x32xf32>
    %55 = arith.mulf %50, %52 : vector<2x32xf32>
    %56 = arith.addf %54, %55 : vector<2x32xf32>
    %57 = math.tanh %56 : vector<2x32xf32>
    %58 = arith.mulf %53, %57 : vector<2x32xf32>
    %c2_31 = arith.constant 2 : index
    %c0_32 = arith.constant 0 : index
    %59 = vector.load %arg13[%c2_31, %c0_32] : memref<8x32xf32, #tpu.memory_space<vmem>>, vector<2x32xf32>
    tpu.vector_store %arg13[%c2_31, %c0_32], %58 {strides = array<i32>} : memref<8x32xf32, #tpu.memory_space<vmem>>, vector<2x32xf32>,
    %c2_33 = arith.constant 2 : index
    %c0_34 = arith.constant 0 : index
    %60 = vector.load %arg14[%c2_33, %c0_34] : memref<8x32xf32, #tpu.memory_space<vmem>>, vector<2x32xf32>
    tpu.vector_store %arg14[%c2_33, %c0_34], %56 {strides = array<i32>} : memref<8x32xf32, #tpu.memory_space<vmem>>, vector<2x32xf32>,
    %c4 = arith.constant 4 : index
    %c0_35 = arith.constant 0 : index
    %61 = vector.load %arg13[%c4, %c0_35] : memref<8x32xf32, #tpu.memory_space<vmem>>, vector<2x32xf32>
    %c4_36 = arith.constant 4 : index
    %c0_37 = arith.constant 0 : index
    %62 = vector.load %arg14[%c4_36, %c0_37] : memref<8x32xf32, #tpu.memory_space<vmem>>, vector<2x32xf32>
    %63 = tpu.concatenate %58, %61 in 1 : vector<2x32xf32>, vector<2x32xf32> -> vector<2x64xf32>
    %c1_38 = arith.constant 1 : index
    %c0_39 = arith.constant 0 : index
    %c0_40 = arith.constant 0 : index
    %64 = vector.load %arg8[%c1_38, %c0_39, %c0_40] : memref<3x64x128xf32, #tpu.memory_space<vmem>>, vector<1x64x128xf32>
    %65 = vector.shape_cast %64 : vector<1x64x128xf32> to vector<64x128xf32>
    %cst_41 = arith.constant dense<0.000000e+00> : vector<2x128xf32>
    %66 = tpu.matmul %63, %65, %cst_41 {dimension_numbers = #tpu.dot_dimension_numbers<[1], [0], [0], [1], [0, 0, 1, 1], [], []>} : vector<2x64xf32>, vector<64x128xf32>, vector<2x128xf32> -> vector<2x128xf32>
    %c2_42 = arith.constant 2 : index
    %c0_43 = arith.constant 0 : index
    %c0_44 = arith.constant 0 : index
    %67 = vector.load %arg9[%c2_42, %c0_43, %c0_44] : memref<4x1x128xf32, #tpu.memory_space<vmem>>, vector<1x1x128xf32>
    %68 = vector.shape_cast %67 : vector<1x1x128xf32> to vector<1x128xf32>
    %69 = vector.broadcast %68 : vector<1x128xf32> to vector<2x128xf32>
    %70 = arith.addf %66, %69 : vector<2x128xf32>
    %71 = arith.negf %70 : vector<2x128xf32>
    %72 = math.exp %71 : vector<2x128xf32>
    %cst_45 = arith.constant 1.000000e+00 : f32
    %73 = vector.broadcast %cst_45 : f32 to vector<2x128xf32>
    %74 = arith.addf %73, %72 : vector<2x128xf32>
    %75 = arith.divf %73, %74 : vector<2x128xf32>
    %76 = math.tanh %70 : vector<2x128xf32>
    %77 = vector.extract_strided_slice %75 {offsets = [0, 0], sizes = [2, 32], strides = [1, 1]} : vector<2x128xf32> to vector<2x32xf32>
    %78 = vector.extract_strided_slice %75 {offsets = [0, 32], sizes = [2, 32], strides = [1, 1]} : vector<2x128xf32> to vector<2x32xf32>
    %79 = vector.extract_strided_slice %76 {offsets = [0, 64], sizes = [2, 32], strides = [1, 1]} : vector<2x128xf32> to vector<2x32xf32>
    %80 = vector.extract_strided_slice %75 {offsets = [0, 96], sizes = [2, 32], strides = [1, 1]} : vector<2x128xf32> to vector<2x32xf32>
    %81 = arith.mulf %78, %62 : vector<2x32xf32>
    %82 = arith.mulf %77, %79 : vector<2x32xf32>
    %83 = arith.addf %81, %82 : vector<2x32xf32>
    %84 = math.tanh %83 : vector<2x32xf32>
    %85 = arith.mulf %80, %84 : vector<2x32xf32>
    %c4_46 = arith.constant 4 : index
    %c0_47 = arith.constant 0 : index
    %86 = vector.load %arg13[%c4_46, %c0_47] : memref<8x32xf32, #tpu.memory_space<vmem>>, vector<2x32xf32>
    tpu.vector_store %arg13[%c4_46, %c0_47], %85 {strides = array<i32>} : memref<8x32xf32, #tpu.memory_space<vmem>>, vector<2x32xf32>,
    %c4_48 = arith.constant 4 : index
    %c0_49 = arith.constant 0 : index
    %87 = vector.load %arg14[%c4_48, %c0_49] : memref<8x32xf32, #tpu.memory_space<vmem>>, vector<2x32xf32>
    tpu.vector_store %arg14[%c4_48, %c0_49], %83 {strides = array<i32>} : memref<8x32xf32, #tpu.memory_space<vmem>>, vector<2x32xf32>,
    %c6 = arith.constant 6 : index
    %c0_50 = arith.constant 0 : index
    %88 = vector.load %arg13[%c6, %c0_50] : memref<8x32xf32, #tpu.memory_space<vmem>>, vector<2x32xf32>
    %c6_51 = arith.constant 6 : index
    %c0_52 = arith.constant 0 : index
    %89 = vector.load %arg14[%c6_51, %c0_52] : memref<8x32xf32, #tpu.memory_space<vmem>>, vector<2x32xf32>
    %90 = tpu.concatenate %85, %88 in 1 : vector<2x32xf32>, vector<2x32xf32> -> vector<2x64xf32>
    %c2_53 = arith.constant 2 : index
    %c0_54 = arith.constant 0 : index
    %c0_55 = arith.constant 0 : index
    %91 = vector.load %arg8[%c2_53, %c0_54, %c0_55] : memref<3x64x128xf32, #tpu.memory_space<vmem>>, vector<1x64x128xf32>
    %92 = vector.shape_cast %91 : vector<1x64x128xf32> to vector<64x128xf32>
    %cst_56 = arith.constant dense<0.000000e+00> : vector<2x128xf32>
    %93 = tpu.matmul %90, %92, %cst_56 {dimension_numbers = #tpu.dot_dimension_numbers<[1], [0], [0], [1], [0, 0, 1, 1], [], []>} : vector<2x64xf32>, vector<64x128xf32>, vector<2x128xf32> -> vector<2x128xf32>
    %c3 = arith.constant 3 : index
    %c0_57 = arith.constant 0 : index
    %c0_58 = arith.constant 0 : index
    %94 = vector.load %arg9[%c3, %c0_57, %c0_58] : memref<4x1x128xf32, #tpu.memory_space<vmem>>, vector<1x1x128xf32>
    %95 = vector.shape_cast %94 : vector<1x1x128xf32> to vector<1x128xf32>
    %96 = vector.broadcast %95 : vector<1x128xf32> to vector<2x128xf32>
    %97 = arith.addf %93, %96 : vector<2x128xf32>
    %98 = arith.negf %97 : vector<2x128xf32>
    %99 = math.exp %98 : vector<2x128xf32>
    %cst_59 = arith.constant 1.000000e+00 : f32
    %100 = vector.broadcast %cst_59 : f32 to vector<2x128xf32>
    %101 = arith.addf %100, %99 : vector<2x128xf32>
    %102 = arith.divf %100, %101 : vector<2x128xf32>
    %103 = math.tanh %97 : vector<2x128xf32>
    %104 = vector.extract_strided_slice %102 {offsets = [0, 0], sizes = [2, 32], strides = [1, 1]} : vector<2x128xf32> to vector<2x32xf32>
    %105 = vector.extract_strided_slice %102 {offsets = [0, 32], sizes = [2, 32], strides = [1, 1]} : vector<2x128xf32> to vector<2x32xf32>
    %106 = vector.extract_strided_slice %103 {offsets = [0, 64], sizes = [2, 32], strides = [1, 1]} : vector<2x128xf32> to vector<2x32xf32>
    %107 = vector.extract_strided_slice %102 {offsets = [0, 96], sizes = [2, 32], strides = [1, 1]} : vector<2x128xf32> to vector<2x32xf32>
    %108 = arith.mulf %105, %89 : vector<2x32xf32>
    %109 = arith.mulf %104, %106 : vector<2x32xf32>
    %110 = arith.addf %108, %109 : vector<2x32xf32>
    %111 = math.tanh %110 : vector<2x32xf32>
    %112 = arith.mulf %107, %111 : vector<2x32xf32>
    %c6_60 = arith.constant 6 : index
    %c0_61 = arith.constant 0 : index
    %113 = vector.load %arg13[%c6_60, %c0_61] : memref<8x32xf32, #tpu.memory_space<vmem>>, vector<2x32xf32>
    tpu.vector_store %arg13[%c6_60, %c0_61], %112 {strides = array<i32>} : memref<8x32xf32, #tpu.memory_space<vmem>>, vector<2x32xf32>,
    %c6_62 = arith.constant 6 : index
    %c0_63 = arith.constant 0 : index
    %114 = vector.load %arg14[%c6_62, %c0_63] : memref<8x32xf32, #tpu.memory_space<vmem>>, vector<2x32xf32>
    tpu.vector_store %arg14[%c6_62, %c0_63], %110 {strides = array<i32>} : memref<8x32xf32, #tpu.memory_space<vmem>>, vector<2x32xf32>,
    %c0_64 = arith.constant 0 : index
    %c0_65 = arith.constant 0 : index
    %115 = vector.load %arg10[%c0_64, %c0_65] : memref<32x128xf32, #tpu.memory_space<vmem>>, vector<32x128xf32>
    %cst_66 = arith.constant dense<0.000000e+00> : vector<2x128xf32>
    %116 = tpu.matmul %112, %115, %cst_66 {dimension_numbers = #tpu.dot_dimension_numbers<[1], [0], [0], [1], [0, 0, 1, 1], [], []>} : vector<2x32xf32>, vector<32x128xf32>, vector<2x128xf32> -> vector<2x128xf32>
    %c0_67 = arith.constant 0 : index
    %c0_68 = arith.constant 0 : index
    %117 = vector.load %arg11[%c0_67, %c0_68] : memref<1x128xf32, #tpu.memory_space<vmem>>, vector<1x128xf32>
    %118 = vector.broadcast %117 : vector<1x128xf32> to vector<2x128xf32>
    %119 = arith.addf %116, %118 : vector<2x128xf32>
    %c0_69 = arith.constant 0 : index
    %c0_70 = arith.constant 0 : index
    %c0_71 = arith.constant 0 : index
    %120 = vector.load %arg12[%c0_69, %c0_70, %c0_71] : memref<1x2x128xf32, #tpu.memory_space<vmem>>, vector<1x2x128xf32>
    %121 = vector.shape_cast %120 : vector<1x2x128xf32> to vector<2x128xf32>
    %122 = vector.shape_cast %119 : vector<2x128xf32> to vector<1x2x128xf32>
    tpu.vector_store %arg12[%c0_69, %c0_70, %c0_71], %122 {strides = array<i32>} : memref<1x2x128xf32, #tpu.memory_space<vmem>>, vector<1x2x128xf32>,
    %123 = tpu.iota {dimensions = array<i32: 1>} : vector<2x128xi32>
    %124 = arith.sitofp %123 : vector<2x128xi32> to vector<2x128xf32>
    %c11_i32 = arith.constant 11 : i32
    %125 = vector.broadcast %c11_i32 : i32 to vector<2x128xi32>
    %126 = arith.cmpi slt, %123, %125 : vector<2x128xi32>
    %cst_72 = arith.constant 0xFF800000 : f32
    %127 = vector.broadcast %cst_72 : f32 to vector<2x128xf32>
    %128 = arith.select %126, %119, %127 : vector<2x128xi1>, vector<2x128xf32>
    %cst_73 = arith.constant dense<0xFF800000> : vector<2xf32>
    %129 = vector.multi_reduction <maximumf>, %128, %cst_73 [1] : vector<2x128xf32> to vector<2xf32>
    %130 = vector.shape_cast %129 : vector<2xf32> to vector<2x1xf32>
    %131 = vector.broadcast %130 : vector<2x1xf32> to vector<2x128xf32>
    %132 = arith.cmpf oge, %128, %131 : vector<2x128xf32>
    %cst_74 = arith.constant 1.280000e+02 : f32
    %133 = vector.broadcast %cst_74 : f32 to vector<2x128xf32>
    %134 = arith.select %132, %124, %133 : vector<2x128xi1>, vector<2x128xf32>
    %cst_75 = arith.constant dense<0x7F800000> : vector<2xf32>
    %135 = vector.multi_reduction <minimumf>, %134, %cst_75 [1] : vector<2x128xf32> to vector<2xf32>
    %136 = vector.shape_cast %135 : vector<2xf32> to vector<2x1xf32>
    %137 = vector.broadcast %136 : vector<2x1xf32> to vector<2x128xf32>
    %138 = arith.cmpf oeq, %124, %137 : vector<2x128xf32>
    %139 = arith.extui %138 : vector<2x128xi1> to vector<2x128xi32>
    %140 = arith.sitofp %139 : vector<2x128xi32> to vector<2x128xf32>
    %c1_i32 = arith.constant 1 : i32
    %141 = arith.addi %arg0, %c1_i32 : i32
    %142 = tpu.iota {dimensions = array<i32: 0>} : vector<2x128xi32>
    %143 = tpu.iota {dimensions = array<i32: 1>} : vector<2x128xi32>
    %cst_76 = arith.constant 0.000000e+00 : f32
    %144 = vector.broadcast %cst_76 : f32 to vector<2x128xf32>
    %c0_i32_77 = arith.constant 0 : i32
    %145 = vector.broadcast %c0_i32_77 : i32 to vector<2x128xi32>
    %146 = arith.cmpi eq, %142, %145 : vector<2x128xi32>
    %c0_78 = arith.constant 0 : index
    %147 = arith.index_cast %141 : i32 to index
    %148 = memref.load %arg1[%c0_78, %147] : memref<2x5xi32, #tpu.memory_space<smem>>
    %149 = vector.broadcast %148 : i32 to vector<2x128xi32>
    %150 = arith.cmpi eq, %143, %149 : vector<2x128xi32>
    %151 = arith.andi %146, %150 : vector<2x128xi1>
    %152 = arith.extui %151 : vector<2x128xi1> to vector<2x128xi32>
    %153 = arith.sitofp %152 : vector<2x128xi32> to vector<2x128xf32>
    %154 = arith.addf %144, %153 : vector<2x128xf32>
    %c1_i32_79 = arith.constant 1 : i32
    %155 = vector.broadcast %c1_i32_79 : i32 to vector<2x128xi32>
    %156 = arith.cmpi eq, %142, %155 : vector<2x128xi32>
    %c1_80 = arith.constant 1 : index
    %157 = arith.index_cast %141 : i32 to index
    %158 = memref.load %arg1[%c1_80, %157] : memref<2x5xi32, #tpu.memory_space<smem>>
    %159 = vector.broadcast %158 : i32 to vector<2x128xi32>
    %160 = arith.cmpi eq, %143, %159 : vector<2x128xi32>
    %161 = arith.andi %156, %160 : vector<2x128xi1>
    %162 = arith.extui %161 : vector<2x128xi1> to vector<2x128xi32>
    %163 = arith.sitofp %162 : vector<2x128xi32> to vector<2x128xf32>
    %164 = arith.addf %154, %163 : vector<2x128xf32>
    %c1_i32_81 = arith.constant 1 : i32
    %165 = arith.addi %arg0, %c1_i32_81 : i32
    %166 = arith.index_cast %165 : i32 to index
    %167 = memref.load %arg2[%166] : memref<5xi32, #tpu.memory_space<smem>>
    %c0_i32_82 = arith.constant 0 : i32
    %168 = arith.cmpi sgt, %167, %c0_i32_82 : i32
    %169 = arith.extui %168 : i1 to i32
    %170 = arith.sitofp %169 : i32 to f32
    %171 = vector.broadcast %170 : f32 to vector<2x128xf32>
    %172 = arith.mulf %171, %164 : vector<2x128xf32>
    %cst_83 = arith.constant 1.000000e+00 : f32
    %173 = arith.subf %cst_83, %170 : f32
    %174 = vector.broadcast %173 : f32 to vector<2x128xf32>
    %175 = arith.mulf %174, %140 : vector<2x128xf32>
    %176 = arith.addf %172, %175 : vector<2x128xf32>
    %c0_84 = arith.constant 0 : index
    %c0_85 = arith.constant 0 : index
    %177 = vector.load %arg15[%c0_84, %c0_85] : memref<2x128xf32, #tpu.memory_space<vmem>>, vector<2x128xf32>
    tpu.vector_store %arg15[%c0_84, %c0_85], %176 {strides = array<i32>} : memref<2x128xf32, #tpu.memory_space<vmem>>, vector<2x128xf32>,
    return
  }
  func.func @transform_0(%arg0: i32, %arg1: memref<2x5xi32, #tpu.memory_space<smem>>, %arg2: memref<5xi32, #tpu.memory_space<smem>>) -> (i32, i32) {
    %c0_i32 = arith.constant 0 : i32
    %c0_i32_0 = arith.constant 0 : i32
    %c0_i32_1 = arith.constant 0 : i32
    return %c0_i32, %c0_i32_0 : i32, i32
  }
  func.func @transform_1(%arg0: i32, %arg1: memref<2x5xi32, #tpu.memory_space<smem>>, %arg2: memref<5xi32, #tpu.memory_space<smem>>) -> (i32, i32) {
    %c0_i32 = arith.constant 0 : i32
    %c0_i32_0 = arith.constant 0 : i32
    %c0_i32_1 = arith.constant 0 : i32
    return %c0_i32, %c0_i32_0 : i32, i32
  }
  func.func @transform_2(%arg0: i32, %arg1: memref<2x5xi32, #tpu.memory_space<smem>>, %arg2: memref<5xi32, #tpu.memory_space<smem>>) -> (i32, i32) {
    %c0_i32 = arith.constant 0 : i32
    %c0_i32_0 = arith.constant 0 : i32
    %c0_i32_1 = arith.constant 0 : i32
    return %c0_i32, %c0_i32_0 : i32, i32
  }
  func.func @transform_3(%arg0: i32, %arg1: memref<2x5xi32, #tpu.memory_space<smem>>, %arg2: memref<5xi32, #tpu.memory_space<smem>>) -> (i32, i32) {
    %c0_i32 = arith.constant 0 : i32
    %c0_i32_0 = arith.constant 0 : i32
    %c0_i32_1 = arith.constant 0 : i32
    return %c0_i32, %c0_i32_0 : i32, i32
  }
  func.func @transform_4(%arg0: i32, %arg1: memref<2x5xi32, #tpu.memory_space<smem>>, %arg2: memref<5xi32, #tpu.memory_space<smem>>) -> (i32, i32) {
    %c0_i32 = arith.constant 0 : i32
    %c0_i32_0 = arith.constant 0 : i32
    %c0_i32_1 = arith.constant 0 : i32
    return %c0_i32, %c0_i32_0 : i32, i32
  }
  func.func @transform_5(%arg0: i32, %arg1: memref<2x5xi32, #tpu.memory_space<smem>>, %arg2: memref<5xi32, #tpu.memory_space<smem>>) -> (i32, i32, i32) {
    %c0_i32 = arith.constant 0 : i32
    %c0_i32_0 = arith.constant 0 : i32
    %c0_i32_1 = arith.constant 0 : i32
    %c0_i32_2 = arith.constant 0 : i32
    return %c0_i32, %c0_i32_0, %c0_i32_1 : i32, i32, i32
  }
  func.func @transform_6(%arg0: i32, %arg1: memref<2x5xi32, #tpu.memory_space<smem>>, %arg2: memref<5xi32, #tpu.memory_space<smem>>) -> (i32, i32, i32) {
    %c0_i32 = arith.constant 0 : i32
    %c0_i32_0 = arith.constant 0 : i32
    %c0_i32_1 = arith.constant 0 : i32
    %c0_i32_2 = arith.constant 0 : i32
    return %c0_i32, %c0_i32_0, %c0_i32_1 : i32, i32, i32
  }
  func.func @transform_7(%arg0: i32, %arg1: memref<2x5xi32, #tpu.memory_space<smem>>, %arg2: memref<5xi32, #tpu.memory_space<smem>>) -> (i32, i32) {
    %c0_i32 = arith.constant 0 : i32
    %c0_i32_0 = arith.constant 0 : i32
    %c0_i32_1 = arith.constant 0 : i32
    return %c0_i32, %c0_i32_0 : i32, i32
  }
  func.func @transform_8(%arg0: i32, %arg1: memref<2x5xi32, #tpu.memory_space<smem>>, %arg2: memref<5xi32, #tpu.memory_space<smem>>) -> (i32, i32) {
    %c0_i32 = arith.constant 0 : i32
    %c0_i32_0 = arith.constant 0 : i32
    %c0_i32_1 = arith.constant 0 : i32
    return %c0_i32, %c0_i32_0 : i32, i32
  }
  func.func @transform_9(%arg0: i32, %arg1: memref<2x5xi32, #tpu.memory_space<smem>>, %arg2: memref<5xi32, #tpu.memory_space<smem>>) -> (i32, i32, i32) {
    %c0_i32 = arith.constant 0 : i32
    %c0_i32_0 = arith.constant 0 : i32
    %c0_i32_1 = arith.constant 0 : i32
    return %arg0, %c0_i32, %c0_i32_0 : i32, i32, i32
  }
}

</mosaic_0001>

<llo_original>
// kernel: seq2seq_forward.3
$region0: #{seq2seq_forward.3}
  #allocation0 [shape = 'u32[]', space=smem, size = 0x4, offset = 0x4, fixed_abs, tag = 'smem constant byte address 0x4 - core index']
  #allocation1 [shape = 'u32[144,128]{1,0:T(1,128)}', space=vmem, size = 0x12000, scoped, tag = 'internal scratch']
  #allocation2 [shape = 'f32[8,32]{1,0:T(8,128)}', space=vmem, size = 0x1000, scoped, tag = 'scratch operand']
  #allocation3 [shape = 'f32[8,32]{1,0:T(8,128)}', space=vmem, size = 0x1000, scoped, tag = 'scratch operand']
  #allocation4 [shape = 'f32[2,128]{1,0:T(2,128)}', space=vmem, size = 0x400, scoped, tag = 'scratch operand']
  #allocation5 [shape = 'f32[2,128]{1,0:T(2,128)}', space=vmem, size = 0x400, scoped, tag = 'scratch operand']
  #allocation6 [shape = 's32[1]{0}', space=sflag, size = 0x4, scoped, tag = 'scoped memory for seq2seq_forward.3']
  #allocation7 [shape = 'u8[1024]{0}', space=smem, size = 0x400, scoped, tag = 'prefetched SMEM operand 0']
  #allocation8 [shape = 'u8[512]{0}', space=smem, size = 0x200, scoped, tag = 'prefetched SMEM operand 1']
  %s0 = inlined_call_operand.vmem [shape: s32[2,5], index: 0, kind: input, shape index: {}]
  %s1 = inlined_call_operand.vmem [shape: s32[5], index: 1, kind: input, shape index: {}]
  %s2 = inlined_call_operand.vmem [shape: f32[8,32], index: 2, kind: input, shape index: {}]
  %s3 = inlined_call_operand.vmem [shape: f32[8,32], index: 3, kind: input, shape index: {}]
  %s4 = inlined_call_operand.vmem [shape: f32[128,128], index: 4, kind: input, shape index: {}]
  %s5 = inlined_call_operand.vmem [shape: f32[32,128], index: 5, kind: input, shape index: {}]
  %s6 = inlined_call_operand.vmem [shape: f32[32,128], index: 6, kind: input, shape index: {}]
  %s7 = inlined_call_operand.vmem [shape: f32[3,64,128], index: 7, kind: input, shape index: {}]
  %s8 = inlined_call_operand.vmem [shape: f32[4,1,128], index: 8, kind: input, shape index: {}]
  %s9 = inlined_call_operand.vmem [shape: f32[32,128], index: 9, kind: input, shape index: {}]
  %s10 = inlined_call_operand.vmem [shape: f32[1,128], index: 10, kind: input, shape index: {}]
  %s11 = inlined_call_operand.vmem [shape: f32[4,2,128], index: 11, kind: output, shape index: {}]
  %s12 = sld [smem:[#allocation0]]
  $region73: #{seq2seq_forward.3} parent=0
    _
  %s14 = ssub.s32 1, %s12
  %s15 = scalar_select 0, %s14, %s12
  %s16 = sshll.u32 %s0, 4
  %s17 = int_to_ptr.vmem [resolvable:$true] %s16
  %19 = dma.vmem_to_smem %s17, 32, [#allocation7], [#allocation6]
  %s20 = sshll.u32 %s1, 4
  %s21 = int_to_ptr.vmem [resolvable:$true] %s20
  %23 = dma.vmem_to_smem %s21, 16, [#allocation8], [#allocation6]
  %24 = dma.done [#allocation6], 48
  %25 = sfence
  loop: start=0, step=1, limit=6
  $region2: #{seq2seq_forward.3} parent=0 // loop_pre_header
    _
  $region3: #{seq2seq_forward.3} parent=0 // loop_header
    %s27 = sphi 0, %s31
    %p28 = scmp.ge.s32.totalorder %s27, 6
    %s35 = sphi 0, %s35
    %s37 = sphi 0, %s35
    %s38 = sphi 0, %s37
    %s52 = sphi 0, %s38
    %s56 = sphi 0, %s56
    %s58 = sphi 0, %s56
    %s59 = sphi 0, %s58
    %s73 = sphi 0, %s59
    %s77 = sphi 0, %s77
    %s79 = sphi 0, %s77
    %s80 = sphi 0, %s79
    %s94 = sphi 0, %s80
    %s98 = sphi 0, %s98
    %s100 = sphi 0, %s98
    %s101 = sphi 0, %s100
    %s115 = sphi 0, %s101
    %s119 = sphi 0, %s119
    %s121 = sphi 0, %s119
    %s122 = sphi 0, %s121
    %s136 = sphi 0, %s122
    %s140 = sphi 0, %s140
    %s142 = sphi 0, %s140
    %s143 = sphi 0, %s142
    %s157 = sphi 0, %s143
    %s161 = sphi 0, %s161
    %s163 = sphi 0, %s161
    %s164 = sphi 0, %s163
    %s178 = sphi 0, %s164
    %s182 = sphi 0, %s182
    %s184 = sphi 0, %s182
    %s185 = sphi 0, %s184
    %s199 = sphi 0, %s185
    %s203 = sphi 0, %s203
    %s205 = sphi 0, %s203
    %s206 = sphi 0, %s205
    %s220 = sphi 0, %s206
    %s226 = sphi 0, %s228
    %s229 = sphi 0, %s226
    %s230 = sphi 0, %s229
    %s246 = sphi 0, %s230
  $region4: #{seq2seq_forward.3} parent=0 // loop_header_branch
    %30 = sbr.rel (%p28) target = $region8
  $region5: #{seq2seq_forward.3} parent=0 // loop_body
    %s32 = ssub.s32 %s27, 1
    %s33 = ssub.s32 %s27, 2
    %s34 = sadd.s32 %s27, 1
    %s36 = sadd.s32 %s35, 1
    %p39 = scmp.eq.s32.totalorder %s27, 3
    %p40 = scmp.ne.s32.totalorder %s35, %s37
    %p41 = scmp.eq.s32.totalorder %s27, 0
    %p42 = por %p40, %p41
    %p43 = scmp.ne.s32.totalorder %s35, %s37
    %p44 = scmp.eq.s32.totalorder %s32, 3
    %p45 = por %p43, %p44
    %p46 = scmp.ne.s32.totalorder %s37, %s38
    %p47 = scmp.eq.s32.totalorder %s32, 0
    %p48 = por %p46, %p47
    %p49 = scmp.ne.s32.totalorder %s37, %s38
    %p50 = scmp.eq.s32.totalorder %s33, 3
    %p51 = por %p49, %p50
    %p53 = scmp.ne.s32.totalorder %s38, %s52
    %p54 = scmp.eq.s32.totalorder %s33, 0
    %p55 = por %p53, %p54
    %s57 = sadd.s32 %s56, 1
    %p60 = scmp.eq.s32.totalorder %s27, 3
    %p61 = scmp.ne.s32.totalorder %s56, %s58
    %p62 = scmp.eq.s32.totalorder %s27, 0
    %p63 = por %p61, %p62
    %p64 = scmp.ne.s32.totalorder %s56, %s58
    %p65 = scmp.eq.s32.totalorder %s32, 3
    %p66 = por %p64, %p65
    %p67 = scmp.ne.s32.totalorder %s58, %s59
    %p68 = scmp.eq.s32.totalorder %s32, 0
    %p69 = por %p67, %p68
    %p70 = scmp.ne.s32.totalorder %s58, %s59
    %p71 = scmp.eq.s32.totalorder %s33, 3
    %p72 = por %p70, %p71
    %p74 = scmp.ne.s32.totalorder %s59, %s73
    %p75 = scmp.eq.s32.totalorder %s33, 0
    %p76 = por %p74, %p75
    %s78 = sadd.s32 %s77, 1
    %p81 = scmp.eq.s32.totalorder %s27, 3
    %p82 = scmp.ne.s32.totalorder %s77, %s79
    %p83 = scmp.eq.s32.totalorder %s27, 0
    %p84 = por %p82, %p83
    %p85 = scmp.ne.s32.totalorder %s77, %s79
    %p86 = scmp.eq.s32.totalorder %s32, 3
    %p87 = por %p85, %p86
    %p88 = scmp.ne.s32.totalorder %s79, %s80
    %p89 = scmp.eq.s32.totalorder %s32, 0
    %p90 = por %p88, %p89
    %p91 = scmp.ne.s32.totalorder %s79, %s80
    %p92 = scmp.eq.s32.totalorder %s33, 3
    %p93 = por %p91, %p92
    %p95 = scmp.ne.s32.totalorder %s80, %s94
    %p96 = scmp.eq.s32.totalorder %s33, 0
    %p97 = por %p95, %p96
    %s99 = sadd.s32 %s98, 1
    %p102 = scmp.eq.s32.totalorder %s27, 3
    %p103 = scmp.ne.s32.totalorder %s98, %s100
    %p104 = scmp.eq.s32.totalorder %s27, 0
    %p105 = por %p103, %p104
    %p106 = scmp.ne.s32.totalorder %s98, %s100
    %p107 = scmp.eq.s32.totalorder %s32, 3
    %p108 = por %p106, %p107
    %p109 = scmp.ne.s32.totalorder %s100, %s101
    %p110 = scmp.eq.s32.totalorder %s32, 0
    %p111 = por %p109, %p110
    %p112 = scmp.ne.s32.totalorder %s100, %s101
    %p113 = scmp.eq.s32.totalorder %s33, 3
    %p114 = por %p112, %p113
    %p116 = scmp.ne.s32.totalorder %s101, %s115
    %p117 = scmp.eq.s32.totalorder %s33, 0
    %p118 = por %p116, %p117
    %s120 = sadd.s32 %s119, 1
    %p123 = scmp.eq.s32.totalorder %s27, 3
    %p124 = scmp.ne.s32.totalorder %s119, %s121
    %p125 = scmp.eq.s32.totalorder %s27, 0
    %p126 = por %p124, %p125
    %p127 = scmp.ne.s32.totalorder %s119, %s121
    %p128 = scmp.eq.s32.totalorder %s32, 3
    %p129 = por %p127, %p128
    %p130 = scmp.ne.s32.totalorder %s121, %s122
    %p131 = scmp.eq.s32.totalorder %s32, 0
    %p132 = por %p130, %p131
    %p133 = scmp.ne.s32.totalorder %s121, %s122
    %p134 = scmp.eq.s32.totalorder %s33, 3
    %p135 = por %p133, %p134
    %p137 = scmp.ne.s32.totalorder %s122, %s136
    %p138 = scmp.eq.s32.totalorder %s33, 0
    %p139 = por %p137, %p138
    %s141 = sadd.s32 %s140, 1
    %p144 = scmp.eq.s32.totalorder %s27, 3
    %p145 = scmp.ne.s32.totalorder %s140, %s142
    %p146 = scmp.eq.s32.totalorder %s27, 0
    %p147 = por %p145, %p146
    %p148 = scmp.ne.s32.totalorder %s140, %s142
    %p149 = scmp.eq.s32.totalorder %s32, 3
    %p150 = por %p148, %p149
    %p151 = scmp.ne.s32.totalorder %s142, %s143
    %p152 = scmp.eq.s32.totalorder %s32, 0
    %p153 = por %p151, %p152
    %p154 = scmp.ne.s32.totalorder %s142, %s143
    %p155 = scmp.eq.s32.totalorder %s33, 3
    %p156 = por %p154, %p155
    %p158 = scmp.ne.s32.totalorder %s143, %s157
    %p159 = scmp.eq.s32.totalorder %s33, 0
    %p160 = por %p158, %p159
    %s162 = sadd.s32 %s161, 1
    %p165 = scmp.eq.s32.totalorder %s27, 3
    %p166 = scmp.ne.s32.totalorder %s161, %s163
    %p167 = scmp.eq.s32.totalorder %s27, 0
    %p168 = por %p166, %p167
    %p169 = scmp.ne.s32.totalorder %s161, %s163
    %p170 = scmp.eq.s32.totalorder %s32, 3
    %p171 = por %p169, %p170
    %p172 = scmp.ne.s32.totalorder %s163, %s164
    %p173 = scmp.eq.s32.totalorder %s32, 0
    %p174 = por %p172, %p173
    %p175 = scmp.ne.s32.totalorder %s163, %s164
    %p176 = scmp.eq.s32.totalorder %s33, 3
    %p177 = por %p175, %p176
    %p179 = scmp.ne.s32.totalorder %s164, %s178
    %p180 = scmp.eq.s32.totalorder %s33, 0
    %p181 = por %p179, %p180
    %s183 = sadd.s32 %s182, 1
    %p186 = scmp.eq.s32.totalorder %s27, 3
    %p187 = scmp.ne.s32.totalorder %s182, %s184
    %p188 = scmp.eq.s32.totalorder %s27, 0
    %p189 = por %p187, %p188
    %p190 = scmp.ne.s32.totalorder %s182, %s184
    %p191 = scmp.eq.s32.totalorder %s32, 3
    %p192 = por %p190, %p191
    %p193 = scmp.ne.s32.totalorder %s184, %s185
    %p194 = scmp.eq.s32.totalorder %s32, 0
    %p195 = por %p193, %p194
    %p196 = scmp.ne.s32.totalorder %s184, %s185
    %p197 = scmp.eq.s32.totalorder %s33, 3
    %p198 = por %p196, %p197
    %p200 = scmp.ne.s32.totalorder %s185, %s199
    %p201 = scmp.eq.s32.totalorder %s33, 0
    %p202 = por %p200, %p201
    %s204 = sadd.s32 %s203, 1
    %p207 = scmp.eq.s32.totalorder %s27, 3
    %p208 = scmp.ne.s32.totalorder %s203, %s205
    %p209 = scmp.eq.s32.totalorder %s27, 0
    %p210 = por %p208, %p209
    %p211 = scmp.ne.s32.totalorder %s203, %s205
    %p212 = scmp.eq.s32.totalorder %s32, 3
    %p213 = por %p211, %p212
    %p214 = scmp.ne.s32.totalorder %s205, %s206
    %p215 = scmp.eq.s32.totalorder %s32, 0
    %p216 = por %p214, %p215
    %p217 = scmp.ne.s32.totalorder %s205, %s206
    %p218 = scmp.eq.s32.totalorder %s33, 3
    %p219 = por %p217, %p218
    %p221 = scmp.ne.s32.totalorder %s206, %s220
    %p222 = scmp.eq.s32.totalorder %s33, 0
    %p223 = por %p221, %p222
    %s224 = ssub.s32 %s27, %s34
    %p225 = scmp.eq.s32.totalorder %s224, 0
    %s227 = sadd.s32 %s226, 1
    %s228 = scalar_select %p225, %s226, %s227
    %p231 = pneg %p225
    %p232 = scmp.eq.s32.totalorder %s27, 3
    %p233 = por %p231, %p232
    %p234 = scmp.ne.s32.totalorder %s226, %s229
    %p235 = scmp.eq.s32.totalorder %s27, 0
    %p236 = por %p234, %p235
    %p237 = scmp.ne.s32.totalorder %s226, %s229
    %p238 = scmp.eq.s32.totalorder %s32, 3
    %p239 = por %p237, %p238
    %p240 = scmp.ne.s32.totalorder %s229, %s230
    %p241 = scmp.eq.s32.totalorder %s32, 0
    %p242 = por %p240, %p241
    %p243 = scmp.ne.s32.totalorder %s229, %s230
    %p244 = scmp.eq.s32.totalorder %s33, 3
    %p245 = por %p243, %p244
    %p247 = scmp.ne.s32.totalorder %s230, %s246
    %p248 = scmp.eq.s32.totalorder %s33, 0
    %p249 = por %p247, %p248
    %p250 = scmp.le.s32.totalorder 1, %s27
    %p251 = scmp.lt.s32.totalorder %s27, 5
    %p252 = pnand %p250, %p251
    %p253 = pneg %p252
    // Predicated region
    $region9: #{seq2seq_forward.3} parent=5 // pred_check
      _
    $region10: #{seq2seq_forward.3} parent=5 // pred_check_branch
      %255 = sbr.rel (%p252) target = $region12
    $region11: #{seq2seq_forward.3} parent=5 // pred_region
      %s256 = ssub.s32 %s27, 1
      // Predicated region
      $region13: #{seq2seq_forward.3} parent=11 // pred_check
        %p257 = pneg %p48
      $region14: #{seq2seq_forward.3} parent=11 // pred_check_branch
        %259 = sbr.rel (%p257) target = $region16
      $region15: #{seq2seq_forward.3} parent=11 // pred_region
        _
      $region16: #{seq2seq_forward.3} parent=11 // pred_fallthru
        _
      // Predicated region
      $region17: #{seq2seq_forward.3} parent=11 // pred_check
        %p260 = pneg %p69
      $region18: #{seq2seq_forward.3} parent=11 // pred_check_branch
        %262 = sbr.rel (%p260) target = $region20
      $region19: #{seq2seq_forward.3} parent=11 // pred_region
        _
      $region20: #{seq2seq_forward.3} parent=11 // pred_fallthru
        _
      // Predicated region
      $region21: #{seq2seq_forward.3} parent=11 // pred_check
        %p263 = pneg %p90
      $region22: #{seq2seq_forward.3} parent=11 // pred_check_branch
        %265 = sbr.rel (%p263) target = $region24
      $region23: #{seq2seq_forward.3} parent=11 // pred_region
        _
      $region24: #{seq2seq_forward.3} parent=11 // pred_fallthru
        _
      // Predicated region
      $region25: #{seq2seq_forward.3} parent=11 // pred_check
        %p266 = pneg %p111
      $region26: #{seq2seq_forward.3} parent=11 // pred_check_branch
        %268 = sbr.rel (%p266) target = $region28
      $region27: #{seq2seq_forward.3} parent=11 // pred_region
        _
      $region28: #{seq2seq_forward.3} parent=11 // pred_fallthru
        _
      // Predicated region
      $region29: #{seq2seq_forward.3} parent=11 // pred_check
        %p269 = pneg %p132
      $region30: #{seq2seq_forward.3} parent=11 // pred_check_branch
        %271 = sbr.rel (%p269) target = $region32
      $region31: #{seq2seq_forward.3} parent=11 // pred_region
        _
      $region32: #{seq2seq_forward.3} parent=11 // pred_fallthru
        _
      // Predicated region
      $region33: #{seq2seq_forward.3} parent=11 // pred_check
        %p272 = pneg %p153
      $region34: #{seq2seq_forward.3} parent=11 // pred_check_branch
        %274 = sbr.rel (%p272) target = $region36
      $region35: #{seq2seq_forward.3} parent=11 // pred_region
        _
      $region36: #{seq2seq_forward.3} parent=11 // pred_fallthru
        _
      // Predicated region
      $region37: #{seq2seq_forward.3} parent=11 // pred_check
        %p275 = pneg %p174
      $region38: #{seq2seq_forward.3} parent=11 // pred_check_branch
        %277 = sbr.rel (%p275) target = $region40
      $region39: #{seq2seq_forward.3} parent=11 // pred_region
        _
      $region40: #{seq2seq_forward.3} parent=11 // pred_fallthru
        _
      // Predicated region
      $region41: #{seq2seq_forward.3} parent=11 // pred_check
        %p278 = pneg %p195
      $region42: #{seq2seq_forward.3} parent=11 // pred_check_branch
        %280 = sbr.rel (%p278) target = $region44
      $region43: #{seq2seq_forward.3} parent=11 // pred_region
        _
      $region44: #{seq2seq_forward.3} parent=11 // pred_fallthru
        _
      // Predicated region
      $region45: #{seq2seq_forward.3} parent=11 // pred_check
        %p281 = pneg %p216
      $region46: #{seq2seq_forward.3} parent=11 // pred_check_branch
        %283 = sbr.rel (%p281) target = $region48
      $region47: #{seq2seq_forward.3} parent=11 // pred_region
        _
      $region48: #{seq2seq_forward.3} parent=11 // pred_fallthru
        _
    $region12: #{seq2seq_forward.3} parent=5 // pred_fallthru
      _
    %p284 = scmp.lt.s32.totalorder %s27, 4
    // Predicated region
    $region49: #{seq2seq_forward.3} parent=5 // pred_check
      %p285 = pneg %p284
    $region50: #{seq2seq_forward.3} parent=5 // pred_check_branch
      %287 = sbr.rel (%p285) target = $region52
    $region51: #{seq2seq_forward.3} parent=5 // pred_region
      _
    $region52: #{seq2seq_forward.3} parent=5 // pred_fallthru
      _
    %p288 = scmp.le.s32.totalorder 1, %s27
    %p289 = scmp.lt.s32.totalorder %s27, 5
    %p290 = pnand %p288, %p289
    %p291 = pneg %p290
    // Predicated region
    $region53: #{seq2seq_forward.3} parent=5 // pred_check
      _
    $region54: #{seq2seq_forward.3} parent=5 // pred_check_branch
      %293 = sbr.rel (%p290) target = $region56
    $region55: #{seq2seq_forward.3} parent=5 // pred_region
      %s294 = ssub.s32 %s27, 1
      %p295 = pneg %p48
      %p296 = pneg %p45
      %p297 = pneg %p69
      %p298 = pneg %p66
      %p299 = pneg %p90
      %p300 = pneg %p87
      %p301 = pneg %p111
      %p302 = pneg %p108
      %p303 = pneg %p132
      %p304 = pneg %p129
      %p305 = pneg %p153
      %p306 = pneg %p150
      %p307 = pneg %p174
      %p308 = pneg %p171
      %p309 = pneg %p195
      %p310 = pneg %p192
      %p311 = pneg %p216
      %p312 = pneg %p213
      %p313 = pneg %p242
      %p314 = pneg %p239
      %p315 = scmp.lt.s32.totalorder %s32, 3
      %s316 = scalar_select %p315, %s32, 3
      %s317 = smul.addr %s316, 2
      %s318 = scalar_lea.vmem %s11, %s317
      %p319 = scmp.lt.s32.totalorder %s32, 3
      %s320 = scalar_select %p319, %s32, 3
      %s321 = smul.addr %s320, 2
      %s322 = scalar_lea.vmem %s11, %s321
      %p323 = scmp.eq.s32.totalorder %s32, 0
      // Predicated region
      $region57: #{seq2seq_forward.3} parent=55 // pred_check
        %p324 = pneg %p323
      $region58: #{seq2seq_forward.3} parent=55 // pred_check_branch
        %326 = sbr.rel (%p324) target = $region60
      $region59: #{seq2seq_forward.3} parent=55 // pred_region
        %v327 = vld [vmem:[%s2] sm:$0xff]
        %vm328 = vcmask 261120
        %329 = vst.msk [vmem:[#allocation2] sm:$0xff] %vm328, %v327
        %v330 = vld [vmem:[%s3] sm:$0xff]
        %331 = vst.msk [vmem:[#allocation3] sm:$0xff] %vm328, %v330
        %v332 = vld [vmem:[%s2 + $0x6] sm:$0x3]
        %v333 = vld [vmem:[%s5] sm:$0xff]
        %v334 = vld [vmem:[%s5 + $0x8] sm:$0xff]
        %v335 = vld [vmem:[%s5 + $0x10] sm:$0xff]
        %v336 = vld [vmem:[%s5 + $0x18] sm:$0xff]
        %v338 = vsel %vm328, %v332, 0
        %340 = vmatprep.subr.mxu0 0.0
        %341 = vmatpush1.msra.mxu0 %v333
        %342 = vmatprep.subr.mxu0 0.0
        %343 = vmatpush1.msra.mxu0 %v334
        %344 = vmatprep.subr.mxu0 0.0
        %345 = vmatpush1.msra.mxu0 %v335
        %346 = vmatprep.subr.mxu0 0.0
        %347 = vmatpush1.msra.mxu0 %v336
        %348 = vmatprep.subr.mxu0 0.0
        %349 = vmatpush1.msra.mxu0 0.0
        %350 = vmatprep.subr.mxu0 0.0
        %351 = vmatpush1.msra.mxu0 0.0
        %352 = vmatprep.subr.mxu0 0.0
        %353 = vmatpush1.msra.mxu0 0.0
        %354 = vmatprep.subr.mxu0 0.0
        %355 = vmatpush1.msra.mxu0 0.0
        %356 = vmatprep.subr.mxu0 0.0
        %357 = vmatpush1.msra.mxu0 0.0
        %358 = vmatprep.subr.mxu0 0.0
        %359 = vmatpush1.msra.mxu0 0.0
        %360 = vmatprep.subr.mxu0 0.0
        %361 = vmatpush1.msra.mxu0 0.0
        %362 = vmatprep.subr.mxu0 0.0
        %363 = vmatpush1.msra.mxu0 0.0
        %364 = vmatprep.subr.mxu0 0.0
        %365 = vmatpush1.msra.mxu0 0.0
        %366 = vmatprep.subr.mxu0 0.0
        %367 = vmatpush1.msra.mxu0 0.0
        %368 = vmatprep.subr.mxu0 0.0
        %369 = vmatpush1.msra.mxu0 0.0
        %370 = vmatprep.subr.mxu0 0.0
        %371 = vmatpush1.msra.mxu0 0.0
        %372 = vmatprep.subr.mxu0 0.0
        %373 = vmatpush1.msra.mxu0 0.0
        %374 = vmatprep.subr.mxu0 0.0
        %375 = vmatpush1.msra.mxu0 0.0
        %376 = vmatprep.subr.mxu0 0.0
        %377 = vmatpush1.msra.mxu0 0.0
        %378 = vmatprep.subr.mxu0 0.0
        %379 = vmatpush1.msra.mxu0 0.0
        %380 = vmatprep.subr.mxu0 0.0
        %381 = vmatpush1.msra.mxu0 0.0
        %382 = vmatprep.subr.mxu0 0.0
        %383 = vmatpush1.msra.mxu0 0.0
        %384 = vmatprep.subr.mxu0 0.0
        %385 = vmatpush1.msra.mxu0 0.0
        %386 = vmatprep.subr.mxu0 0.0
        %387 = vmatpush1.msra.mxu0 0.0
        %388 = vmatprep.subr.mxu0 0.0
        %389 = vmatpush1.msra.mxu0 0.0
        %390 = vmatprep.subr.mxu0 0.0
        %391 = vmatpush1.msra.mxu0 0.0
        %392 = vmatprep.subr.mxu0 0.0
        %393 = vmatpush1.msra.mxu0 0.0
        %394 = vmatprep.subr.mxu0 0.0
        %395 = vmatpush1.msra.mxu0 0.0
        %396 = vmatprep.subr.mxu0 0.0
        %397 = vmatpush1.msra.mxu0 0.0
        %398 = vmatprep.subr.mxu0 0.0
        %399 = vmatpush1.msra.mxu0 0.0
        %400 = vmatprep.subr.mxu0 0.0
        %401 = vmatpush1.msra.mxu0 0.0
        %402 = vmatprep.subr.mxu0 0.0
        %403 = vmatpush1.msra.mxu0 0.0
        %404 = vmatprep.mubr.f32.mxu0 0.0
        %405 = vmatmul.mubr.f32.gmra.mrb[0].mxu0 %v338
        %v406 = vpop.f32.mrb[0].mxu0
        %v407 = vadd.f32 0.0, %v406
        %v408 = vpop.f32.mrb[0].mxu0
        %409 = vdwg.mxu0
        %410 = vst [vmem:[#allocation5] sm:$0x3] %v407
        %v411 = vlaneseq
        %v412 = vshrl.u32 %v411, 7
        %v413 = vlaneseq
        %v414 = vand.u32 %v413, 127
        %vm415 = vcmp.eq.s32.totalorder %v412, 0
        %s416 = sld [smem:[#allocation7]]
        %v417 = vstv %s416
        %vm418 = vcmp.eq.s32.totalorder %v414, %v417
        %vm419 = vmand %vm415, %vm418
        %v420 = vsel %vm419, 1, 0
        %v421 = vcvt.s32.f32 %v420
        %v422 = vadd.f32 %v421, 0.0
        %vm423 = vcmp.eq.s32.totalorder %v412, 1
        %s424 = sld [smem:[#allocation7 + $0x80]]
        %v425 = vstv %s424
        %vm426 = vcmp.eq.s32.totalorder %v414, %v425
        %vm427 = vmand %vm423, %vm426
        %v428 = vsel %vm427, 1, 0
        %v429 = vcvt.s32.f32 %v428
        %v430 = vadd.f32 %v422, %v429
        %431 = vst [vmem:[#allocation4] sm:$0x3] %v430
      $region60: #{seq2seq_forward.3} parent=55 // pred_fallthru
        _
      %v432 = vld [vmem:[#allocation4] sm:$0x3]
      %v433 = vld [vmem:[%s4] sm:$0xff]
      %v434 = vld [vmem:[%s4 + $0x8] sm:$0xff]
      %v435 = vld [vmem:[%s4 + $0x10] sm:$0xff]
      %v436 = vld [vmem:[%s4 + $0x18] sm:$0xff]
      %v437 = vld [vmem:[%s4 + $0x20] sm:$0xff]
      %v438 = vld [vmem:[%s4 + $0x28] sm:$0xff]
      %v439 = vld [vmem:[%s4 + $0x30] sm:$0xff]
      %v440 = vld [vmem:[%s4 + $0x38] sm:$0xff]
      %v441 = vld [vmem:[%s4 + $0x40] sm:$0xff]
      %v442 = vld [vmem:[%s4 + $0x48] sm:$0xff]
      %v443 = vld [vmem:[%s4 + $0x50] sm:$0xff]
      %v444 = vld [vmem:[%s4 + $0x58] sm:$0xff]
      %v445 = vld [vmem:[%s4 + $0x60] sm:$0xff]
      %v446 = vld [vmem:[%s4 + $0x68] sm:$0xff]
      %v447 = vld [vmem:[%s4 + $0x70] sm:$0xff]
      %v448 = vld [vmem:[%s4 + $0x78] sm:$0xff]
      %v449 = vld [vmem:[#allocation5] sm:$0x3]
      %450 = vmatprep.subr.mxu0 0.0
      %451 = vmatpush1.msra.mxu0 %v433
      %452 = vmatprep.subr.mxu0 0.0
      %453 = vmatpush1.msra.mxu0 %v434
      %454 = vmatprep.subr.mxu0 0.0
      %455 = vmatpush1.msra.mxu0 %v435
      %456 = vmatprep.subr.mxu0 0.0
      %457 = vmatpush1.msra.mxu0 %v436
      %458 = vmatprep.subr.mxu0 0.0
      %459 = vmatpush1.msra.mxu0 %v437
      %460 = vmatprep.subr.mxu0 0.0
      %461 = vmatpush1.msra.mxu0 %v438
      %462 = vmatprep.subr.mxu0 0.0
      %463 = vmatpush1.msra.mxu0 %v439
      %464 = vmatprep.subr.mxu0 0.0
      %465 = vmatpush1.msra.mxu0 %v440
      %466 = vmatprep.subr.mxu0 0.0
      %467 = vmatpush1.msra.mxu0 %v441
      %468 = vmatprep.subr.mxu0 0.0
      %469 = vmatpush1.msra.mxu0 %v442
      %470 = vmatprep.subr.mxu0 0.0
      %471 = vmatpush1.msra.mxu0 %v443
      %472 = vmatprep.subr.mxu0 0.0
      %473 = vmatpush1.msra.mxu0 %v444
      %474 = vmatprep.subr.mxu0 0.0
      %475 = vmatpush1.msra.mxu0 %v445
      %476 = vmatprep.subr.mxu0 0.0
      %477 = vmatpush1.msra.mxu0 %v446
      %478 = vmatprep.subr.mxu0 0.0
      %479 = vmatpush1.msra.mxu0 %v447
      %480 = vmatprep.subr.mxu0 0.0
      %481 = vmatpush1.msra.mxu0 %v448
      %482 = vmatprep.subr.mxu0 0.0
      %483 = vmatpush1.msra.mxu0 0.0
      %484 = vmatprep.subr.mxu0 0.0
      %485 = vmatpush1.msra.mxu0 0.0
      %486 = vmatprep.subr.mxu0 0.0
      %487 = vmatpush1.msra.mxu0 0.0
      %488 = vmatprep.subr.mxu0 0.0
      %489 = vmatpush1.msra.mxu0 0.0
      %490 = vmatprep.subr.mxu0 0.0
      %491 = vmatpush1.msra.mxu0 0.0
      %492 = vmatprep.subr.mxu0 0.0
      %493 = vmatpush1.msra.mxu0 0.0
      %494 = vmatprep.subr.mxu0 0.0
      %495 = vmatpush1.msra.mxu0 0.0
      %496 = vmatprep.subr.mxu0 0.0
      %497 = vmatpush1.msra.mxu0 0.0
      %498 = vmatprep.subr.mxu0 0.0
      %499 = vmatpush1.msra.mxu0 0.0
      %500 = vmatprep.subr.mxu0 0.0
      %501 = vmatpush1.msra.mxu0 0.0
      %502 = vmatprep.subr.mxu0 0.0
      %503 = vmatpush1.msra.mxu0 0.0
      %504 = vmatprep.subr.mxu0 0.0
      %505 = vmatpush1.msra.mxu0 0.0
      %506 = vmatprep.subr.mxu0 0.0
      %507 = vmatpush1.msra.mxu0 0.0
      %508 = vmatprep.subr.mxu0 0.0
      %509 = vmatpush1.msra.mxu0 0.0
      %510 = vmatprep.subr.mxu0 0.0
      %511 = vmatpush1.msra.mxu0 0.0
      %512 = vmatprep.subr.mxu0 0.0
      %513 = vmatpush1.msra.mxu0 0.0
      %514 = vmatprep.mubr.f32.mxu0 0.0
      %515 = vmatmul.mubr.f32.gmra.mrb[0].mxu0 %v432
      %v516 = vpop.f32.mrb[0].mxu0
      %v517 = vadd.f32 %v449, %v516
      %v518 = vpop.f32.mrb[0].mxu0
      %519 = vdwg.mxu0
      %v520 = vld [vmem:[#allocation2] sm:$0x3]
      %v521 = vld [vmem:[#allocation3] sm:$0x3]
      %v522 = vld [vmem:[%s6] sm:$0xff]
      %v523 = vld [vmem:[%s6 + $0x8] sm:$0xff]
      %v524 = vld [vmem:[%s6 + $0x10] sm:$0xff]
      %v525 = vld [vmem:[%s6 + $0x18] sm:$0xff]
      %vm526 = vcmask 261120
      %v528 = vsel %vm526, %v520, 0
      %530 = vmatprep.subr.mxu0 0.0
      %531 = vmatpush1.msra.mxu0 %v522
      %532 = vmatprep.subr.mxu0 0.0
      %533 = vmatpush1.msra.mxu0 %v523
      %534 = vmatprep.subr.mxu0 0.0
      %535 = vmatpush1.msra.mxu0 %v524
      %536 = vmatprep.subr.mxu0 0.0
      %537 = vmatpush1.msra.mxu0 %v525
      %538 = vmatprep.subr.mxu0 0.0
      %539 = vmatpush1.msra.mxu0 0.0
      %540 = vmatprep.subr.mxu0 0.0
      %541 = vmatpush1.msra.mxu0 0.0
      %542 = vmatprep.subr.mxu0 0.0
      %543 = vmatpush1.msra.mxu0 0.0
      %544 = vmatprep.subr.mxu0 0.0
      %545 = vmatpush1.msra.mxu0 0.0
      %546 = vmatprep.subr.mxu0 0.0
      %547 = vmatpush1.msra.mxu0 0.0
      %548 = vmatprep.subr.mxu0 0.0
      %549 = vmatpush1.msra.mxu0 0.0
      %550 = vmatprep.subr.mxu0 0.0
      %551 = vmatpush1.msra.mxu0 0.0
      %552 = vmatprep.subr.mxu0 0.0
      %553 = vmatpush1.msra.mxu0 0.0
      %554 = vmatprep.subr.mxu0 0.0
      %555 = vmatpush1.msra.mxu0 0.0
      %556 = vmatprep.subr.mxu0 0.0
      %557 = vmatpush1.msra.mxu0 0.0
      %558 = vmatprep.subr.mxu0 0.0
      %559 = vmatpush1.msra.mxu0 0.0
      %560 = vmatprep.subr.mxu0 0.0
      %561 = vmatpush1.msra.mxu0 0.0
      %562 = vmatprep.subr.mxu0 0.0
      %563 = vmatpush1.msra.mxu0 0.0
      %564 = vmatprep.subr.mxu0 0.0
      %565 = vmatpush1.msra.mxu0 0.0
      %566 = vmatprep.subr.mxu0 0.0
      %567 = vmatpush1.msra.mxu0 0.0
      %568 = vmatprep.subr.mxu0 0.0
      %569 = vmatpush1.msra.mxu0 0.0
      %570 = vmatprep.subr.mxu0 0.0
      %571 = vmatpush1.msra.mxu0 0.0
      %572 = vmatprep.subr.mxu0 0.0
      %573 = vmatpush1.msra.mxu0 0.0
      %574 = vmatprep.subr.mxu0 0.0
      %575 = vmatpush1.msra.mxu0 0.0
      %576 = vmatprep.subr.mxu0 0.0
      %577 = vmatpush1.msra.mxu0 0.0
      %578 = vmatprep.subr.mxu0 0.0
      %579 = vmatpush1.msra.mxu0 0.0
      %580 = vmatprep.subr.mxu0 0.0
      %581 = vmatpush1.msra.mxu0 0.0
      %582 = vmatprep.subr.mxu0 0.0
      %583 = vmatpush1.msra.mxu0 0.0
      %584 = vmatprep.subr.mxu0 0.0
      %585 = vmatpush1.msra.mxu0 0.0
      %586 = vmatprep.subr.mxu0 0.0
      %587 = vmatpush1.msra.mxu0 0.0
      %588 = vmatprep.subr.mxu0 0.0
      %589 = vmatpush1.msra.mxu0 0.0
      %590 = vmatprep.subr.mxu0 0.0
      %591 = vmatpush1.msra.mxu0 0.0
      %592 = vmatprep.subr.mxu0 0.0
      %593 = vmatpush1.msra.mxu0 0.0
      %594 = vmatprep.mubr.f32.mxu0 0.0
      %595 = vmatmul.mubr.f32.gmra.mrb[0].mxu0 %v528
      %v596 = vpop.f32.mrb[0].mxu0
      %v597 = vadd.f32 0.0, %v596
      %v598 = vpop.f32.mrb[0].mxu0
      %599 = vdwg.mxu0
      %v600 = vadd.f32 %v517, %v597
      %v601 = vld [vmem:[%s8] sm:$0x1]
      %v603 = vlaneseq
      %v604 = vshrl.u32 %v603, 7
      %v605 = vsub.s32 0, %v604
      %v606 = vrot.slane %v601, %v605
      %v608 = vadd.f32 %v600, %v606
      %v609 = vxor.u32 %v608, 2147483648
      %v610 = vmul.f32 %v609, 1.442695
      %v611 = vpow.pop %v610
      %v612 = vadd.f32 %v611, 1.0
      %v613 = vrcp.pop %v612
      %v614 = vmul.f32 1.0, %v613
      %v615 = vtanh.pop %v608
      %617 = vrot.lane.b32.xlu0 %v521, 32
      %v618 = vpop.permute.xlu0 %617
      %v620 = vmul.f32 %v614, %v618
      %622 = vrot.lane.b32.xlu0 %v615, 64
      %v623 = vpop.permute.xlu0 %622
      %v625 = vmul.f32 %v614, %v623
      %627 = vrot.lane.b32.xlu0 %v625, 32
      %v628 = vpop.permute.xlu0 %627
      %v630 = vadd.f32 %v620, %v628
      %v631 = vtanh.pop %v630
      %633 = vrot.lane.b32.xlu0 %v631, 64
      %v634 = vpop.permute.xlu0 %633
      %v636 = vmul.f32 %v614, %v634
      %638 = vrot.lane.b32.xlu0 %v636, 32
      %v639 = vpop.permute.xlu0 %638
      %vm641 = vcmask 254976
      %642 = vst.msk [vmem:[#allocation2] sm:$0x3] %vm641, %v639
      %644 = vrot.lane.b32.xlu0 %v630, 96
      %v645 = vpop.permute.xlu0 %644
      %647 = vst.msk [vmem:[#allocation3] sm:$0x3] %vm641, %v645
      %v648 = vld [vmem:[#allocation2 + $0x2] sm:$0x3]
      %v649 = vld [vmem:[#allocation3 + $0x2] sm:$0x3]
      %651 = vrot.lane.b32.xlu0 %v648, 32
      %v652 = vpop.permute.xlu0 %651
      %v654 = vsel %vm526, %v639, %v652
      %v655 = vld [vmem:[%s7] sm:$0xff]
      %v656 = vld [vmem:[%s7 + $0x8] sm:$0xff]
      %v657 = vld [vmem:[%s7 + $0x10] sm:$0xff]
      %v658 = vld [vmem:[%s7 + $0x18] sm:$0xff]
      %v659 = vld [vmem:[%s7 + $0x20] sm:$0xff]
      %v660 = vld [vmem:[%s7 + $0x28] sm:$0xff]
      %v661 = vld [vmem:[%s7 + $0x30] sm:$0xff]
      %v662 = vld [vmem:[%s7 + $0x38] sm:$0xff]
      %s663 = scalar_lea.vmem %s8, 1
      %v664 = vld [vmem:[%s663] sm:$0x1]
      %v666 = vlaneseq
      %v667 = vshrl.u32 %v666, 7
      %v668 = vsub.s32 0, %v667
      %v669 = vrot.slane %v664, %v668
      %vm671 = vcmask 523264
      %v673 = vsel %vm671, %v654, 0
      %675 = vmatprep.subr.mxu0 0.0
      %676 = vmatpush1.msra.mxu0 %v655
      %677 = vmatprep.subr.mxu0 0.0
      %678 = vmatpush1.msra.mxu0 %v656
      %679 = vmatprep.subr.mxu0 0.0
      %680 = vmatpush1.msra.mxu0 %v657
      %681 = vmatprep.subr.mxu0 0.0
      %682 = vmatpush1.msra.mxu0 %v658
      %683 = vmatprep.subr.mxu0 0.0
      %684 = vmatpush1.msra.mxu0 %v659
      %685 = vmatprep.subr.mxu0 0.0
      %686 = vmatpush1.msra.mxu0 %v660
      %687 = vmatprep.subr.mxu0 0.0
      %688 = vmatpush1.msra.mxu0 %v661
      %689 = vmatprep.subr.mxu0 0.0
      %690 = vmatpush1.msra.mxu0 %v662
      %691 = vmatprep.subr.mxu0 0.0
      %692 = vmatpush1.msra.mxu0 0.0
      %693 = vmatprep.subr.mxu0 0.0
      %694 = vmatpush1.msra.mxu0 0.0
      %695 = vmatprep.subr.mxu0 0.0
      %696 = vmatpush1.msra.mxu0 0.0
      %697 = vmatprep.subr.mxu0 0.0
      %698 = vmatpush1.msra.mxu0 0.0
      %699 = vmatprep.subr.mxu0 0.0
      %700 = vmatpush1.msra.mxu0 0.0
      %701 = vmatprep.subr.mxu0 0.0
      %702 = vmatpush1.msra.mxu0 0.0
      %703 = vmatprep.subr.mxu0 0.0
      %704 = vmatpush1.msra.mxu0 0.0
      %705 = vmatprep.subr.mxu0 0.0
      %706 = vmatpush1.msra.mxu0 0.0
      %707 = vmatprep.subr.mxu0 0.0
      %708 = vmatpush1.msra.mxu0 0.0
      %709 = vmatprep.subr.mxu0 0.0
      %710 = vmatpush1.msra.mxu0 0.0
      %711 = vmatprep.subr.mxu0 0.0
      %712 = vmatpush1.msra.mxu0 0.0
      %713 = vmatprep.subr.mxu0 0.0
      %714 = vmatpush1.msra.mxu0 0.0
      %715 = vmatprep.subr.mxu0 0.0
      %716 = vmatpush1.msra.mxu0 0.0
      %717 = vmatprep.subr.mxu0 0.0
      %718 = vmatpush1.msra.mxu0 0.0
      %719 = vmatprep.subr.mxu0 0.0
      %720 = vmatpush1.msra.mxu0 0.0
      %721 = vmatprep.subr.mxu0 0.0
      %722 = vmatpush1.msra.mxu0 0.0
      %723 = vmatprep.subr.mxu0 0.0
      %724 = vmatpush1.msra.mxu0 0.0
      %725 = vmatprep.subr.mxu0 0.0
      %726 = vmatpush1.msra.mxu0 0.0
      %727 = vmatprep.subr.mxu0 0.0
      %728 = vmatpush1.msra.mxu0 0.0
      %729 = vmatprep.subr.mxu0 0.0
      %730 = vmatpush1.msra.mxu0 0.0
      %731 = vmatprep.subr.mxu0 0.0
      %732 = vmatpush1.msra.mxu0 0.0
      %733 = vmatprep.subr.mxu0 0.0
      %734 = vmatpush1.msra.mxu0 0.0
      %735 = vmatprep.subr.mxu0 0.0
      %736 = vmatpush1.msra.mxu0 0.0
      %737 = vmatprep.subr.mxu0 0.0
      %738 = vmatpush1.msra.mxu0 0.0
      %739 = vmatprep.mubr.f32.mxu0 0.0
      %740 = vmatmul.mubr.f32.gmra.mrb[0].mxu0 %v673
      %v741 = vpop.f32.mrb[0].mxu0
      %v742 = vadd.f32 %v669, %v741
      %v743 = vpop.f32.mrb[0].mxu0
      %744 = vdwg.mxu0
      %v745 = vxor.u32 %v742, 2147483648
      %v746 = vmul.f32 %v745, 1.442695
      %v747 = vpow.pop %v746
      %v748 = vadd.f32 %v747, 1.0
      %v749 = vrcp.pop %v748
      %v750 = vmul.f32 1.0, %v749
      %v751 = vtanh.pop %v742
      %753 = vrot.lane.b32.xlu0 %v649, 32
      %v754 = vpop.permute.xlu0 %753
      %v756 = vmul.f32 %v750, %v754
      %758 = vrot.lane.b32.xlu0 %v751, 64
      %v759 = vpop.permute.xlu0 %758
      %v761 = vmul.f32 %v750, %v759
      %763 = vrot.lane.b32.xlu0 %v761, 32
      %v764 = vpop.permute.xlu0 %763
      %v766 = vadd.f32 %v756, %v764
      %v767 = vtanh.pop %v766
      %769 = vrot.lane.b32.xlu0 %v767, 64
      %v770 = vpop.permute.xlu0 %769
      %v772 = vmul.f32 %v750, %v770
      %774 = vrot.lane.b32.xlu0 %v772, 32
      %v775 = vpop.permute.xlu0 %774
      %777 = vst.msk [vmem:[#allocation2 + $0x2] sm:$0x3] %vm641, %v775
      %779 = vrot.lane.b32.xlu0 %v766, 96
      %v780 = vpop.permute.xlu0 %779
      %782 = vst.msk [vmem:[#allocation3 + $0x2] sm:$0x3] %vm641, %v780
      %v783 = vld [vmem:[#allocation2 + $0x4] sm:$0x3]
      %v784 = vld [vmem:[#allocation3 + $0x4] sm:$0x3]
      %786 = vrot.lane.b32.xlu0 %v783, 32
      %v787 = vpop.permute.xlu0 %786
      %v789 = vsel %vm526, %v775, %v787
      %s790 = scalar_lea.vmem %s7, 64
      %v791 = vld [vmem:[%s790] sm:$0xff]
      %v792 = vld [vmem:[%s790 + $0x8] sm:$0xff]
      %v793 = vld [vmem:[%s790 + $0x10] sm:$0xff]
      %v794 = vld [vmem:[%s790 + $0x18] sm:$0xff]
      %v795 = vld [vmem:[%s790 + $0x20] sm:$0xff]
      %v796 = vld [vmem:[%s790 + $0x28] sm:$0xff]
      %v797 = vld [vmem:[%s790 + $0x30] sm:$0xff]
      %v798 = vld [vmem:[%s790 + $0x38] sm:$0xff]
      %s799 = scalar_lea.vmem %s8, 2
      %v800 = vld [vmem:[%s799] sm:$0x1]
      %v802 = vlaneseq
      %v803 = vshrl.u32 %v802, 7
      %v804 = vsub.s32 0, %v803
      %v805 = vrot.slane %v800, %v804
      %v808 = vsel %vm671, %v789, 0
      %810 = vmatprep.subr.mxu0 0.0
      %811 = vmatpush1.msra.mxu0 %v791
      %812 = vmatprep.subr.mxu0 0.0
      %813 = vmatpush1.msra.mxu0 %v792
      %814 = vmatprep.subr.mxu0 0.0
      %815 = vmatpush1.msra.mxu0 %v793
      %816 = vmatprep.subr.mxu0 0.0
      %817 = vmatpush1.msra.mxu0 %v794
      %818 = vmatprep.subr.mxu0 0.0
      %819 = vmatpush1.msra.mxu0 %v795
      %820 = vmatprep.subr.mxu0 0.0
      %821 = vmatpush1.msra.mxu0 %v796
      %822 = vmatprep.subr.mxu0 0.0
      %823 = vmatpush1.msra.mxu0 %v797
      %824 = vmatprep.subr.mxu0 0.0
      %825 = vmatpush1.msra.mxu0 %v798
      %826 = vmatprep.subr.mxu0 0.0
      %827 = vmatpush1.msra.mxu0 0.0
      %828 = vmatprep.subr.mxu0 0.0
      %829 = vmatpush1.msra.mxu0 0.0
      %830 = vmatprep.subr.mxu0 0.0
      %831 = vmatpush1.msra.mxu0 0.0
      %832 = vmatprep.subr.mxu0 0.0
      %833 = vmatpush1.msra.mxu0 0.0
      %834 = vmatprep.subr.mxu0 0.0
      %835 = vmatpush1.msra.mxu0 0.0
      %836 = vmatprep.subr.mxu0 0.0
      %837 = vmatpush1.msra.mxu0 0.0
      %838 = vmatprep.subr.mxu0 0.0
      %839 = vmatpush1.msra.mxu0 0.0
      %840 = vmatprep.subr.mxu0 0.0
      %841 = vmatpush1.msra.mxu0 0.0
      %842 = vmatprep.subr.mxu0 0.0
      %843 = vmatpush1.msra.mxu0 0.0
      %844 = vmatprep.subr.mxu0 0.0
      %845 = vmatpush1.msra.mxu0 0.0
      %846 = vmatprep.subr.mxu0 0.0
      %847 = vmatpush1.msra.mxu0 0.0
      %848 = vmatprep.subr.mxu0 0.0
      %849 = vmatpush1.msra.mxu0 0.0
      %850 = vmatprep.subr.mxu0 0.0
      %851 = vmatpush1.msra.mxu0 0.0
      %852 = vmatprep.subr.mxu0 0.0
      %853 = vmatpush1.msra.mxu0 0.0
      %854 = vmatprep.subr.mxu0 0.0
      %855 = vmatpush1.msra.mxu0 0.0
      %856 = vmatprep.subr.mxu0 0.0
      %857 = vmatpush1.msra.mxu0 0.0
      %858 = vmatprep.subr.mxu0 0.0
      %859 = vmatpush1.msra.mxu0 0.0
      %860 = vmatprep.subr.mxu0 0.0
      %861 = vmatpush1.msra.mxu0 0.0
      %862 = vmatprep.subr.mxu0 0.0
      %863 = vmatpush1.msra.mxu0 0.0
      %864 = vmatprep.subr.mxu0 0.0
      %865 = vmatpush1.msra.mxu0 0.0
      %866 = vmatprep.subr.mxu0 0.0
      %867 = vmatpush1.msra.mxu0 0.0
      %868 = vmatprep.subr.mxu0 0.0
      %869 = vmatpush1.msra.mxu0 0.0
      %870 = vmatprep.subr.mxu0 0.0
      %871 = vmatpush1.msra.mxu0 0.0
      %872 = vmatprep.subr.mxu0 0.0
      %873 = vmatpush1.msra.mxu0 0.0
      %874 = vmatprep.mubr.f32.mxu0 0.0
      %875 = vmatmul.mubr.f32.gmra.mrb[0].mxu0 %v808
      %v876 = vpop.f32.mrb[0].mxu0
      %v877 = vadd.f32 %v805, %v876
      %v878 = vpop.f32.mrb[0].mxu0
      %879 = vdwg.mxu0
      %v880 = vxor.u32 %v877, 2147483648
      %v881 = vmul.f32 %v880, 1.442695
      %v882 = vpow.pop %v881
      %v883 = vadd.f32 %v882, 1.0
      %v884 = vrcp.pop %v883
      %v885 = vmul.f32 1.0, %v884
      %v886 = vtanh.pop %v877
      %888 = vrot.lane.b32.xlu0 %v784, 32
      %v889 = vpop.permute.xlu0 %888
      %v891 = vmul.f32 %v885, %v889
      %893 = vrot.lane.b32.xlu0 %v886, 64
      %v894 = vpop.permute.xlu0 %893
      %v896 = vmul.f32 %v885, %v894
      %898 = vrot.lane.b32.xlu0 %v896, 32
      %v899 = vpop.permute.xlu0 %898
      %v901 = vadd.f32 %v891, %v899
      %v902 = vtanh.pop %v901
      %904 = vrot.lane.b32.xlu0 %v902, 64
      %v905 = vpop.permute.xlu0 %904
      %v907 = vmul.f32 %v885, %v905
      %909 = vrot.lane.b32.xlu0 %v907, 32
      %v910 = vpop.permute.xlu0 %909
      %912 = vst.msk [vmem:[#allocation2 + $0x4] sm:$0x3] %vm641, %v910
      %914 = vrot.lane.b32.xlu0 %v901, 96
      %v915 = vpop.permute.xlu0 %914
      %917 = vst.msk [vmem:[#allocation3 + $0x4] sm:$0x3] %vm641, %v915
      %v918 = vld [vmem:[#allocation2 + $0x6] sm:$0x3]
      %v919 = vld [vmem:[#allocation3 + $0x6] sm:$0x3]
      %921 = vrot.lane.b32.xlu0 %v918, 32
      %v922 = vpop.permute.xlu0 %921
      %v924 = vsel %vm526, %v910, %v922
      %s925 = scalar_lea.vmem %s7, 128
      %v926 = vld [vmem:[%s925] sm:$0xff]
      %v927 = vld [vmem:[%s925 + $0x8] sm:$0xff]
      %v928 = vld [vmem:[%s925 + $0x10] sm:$0xff]
      %v929 = vld [vmem:[%s925 + $0x18] sm:$0xff]
      %v930 = vld [vmem:[%s925 + $0x20] sm:$0xff]
      %v931 = vld [vmem:[%s925 + $0x28] sm:$0xff]
      %v932 = vld [vmem:[%s925 + $0x30] sm:$0xff]
      %v933 = vld [vmem:[%s925 + $0x38] sm:$0xff]
      %s934 = scalar_lea.vmem %s8, 3
      %v935 = vld [vmem:[%s934] sm:$0x1]
      %v937 = vlaneseq
      %v938 = vshrl.u32 %v937, 7
      %v939 = vsub.s32 0, %v938
      %v940 = vrot.slane %v935, %v939
      %v943 = vsel %vm671, %v924, 0
      %945 = vmatprep.subr.mxu0 0.0
      %946 = vmatpush1.msra.mxu0 %v926
      %947 = vmatprep.subr.mxu0 0.0
      %948 = vmatpush1.msra.mxu0 %v927
      %949 = vmatprep.subr.mxu0 0.0
      %950 = vmatpush1.msra.mxu0 %v928
      %951 = vmatprep.subr.mxu0 0.0
      %952 = vmatpush1.msra.mxu0 %v929
      %953 = vmatprep.subr.mxu0 0.0
      %954 = vmatpush1.msra.mxu0 %v930
      %955 = vmatprep.subr.mxu0 0.0
      %956 = vmatpush1.msra.mxu0 %v931
      %957 = vmatprep.subr.mxu0 0.0
      %958 = vmatpush1.msra.mxu0 %v932
      %959 = vmatprep.subr.mxu0 0.0
      %960 = vmatpush1.msra.mxu0 %v933
      %961 = vmatprep.subr.mxu0 0.0
      %962 = vmatpush1.msra.mxu0 0.0
      %963 = vmatprep.subr.mxu0 0.0
      %964 = vmatpush1.msra.mxu0 0.0
      %965 = vmatprep.subr.mxu0 0.0
      %966 = vmatpush1.msra.mxu0 0.0
      %967 = vmatprep.subr.mxu0 0.0
      %968 = vmatpush1.msra.mxu0 0.0
      %969 = vmatprep.subr.mxu0 0.0
      %970 = vmatpush1.msra.mxu0 0.0
      %971 = vmatprep.subr.mxu0 0.0
      %972 = vmatpush1.msra.mxu0 0.0
      %973 = vmatprep.subr.mxu0 0.0
      %974 = vmatpush1.msra.mxu0 0.0
      %975 = vmatprep.subr.mxu0 0.0
      %976 = vmatpush1.msra.mxu0 0.0
      %977 = vmatprep.subr.mxu0 0.0
      %978 = vmatpush1.msra.mxu0 0.0
      %979 = vmatprep.subr.mxu0 0.0
      %980 = vmatpush1.msra.mxu0 0.0
      %981 = vmatprep.subr.mxu0 0.0
      %982 = vmatpush1.msra.mxu0 0.0
      %983 = vmatprep.subr.mxu0 0.0
      %984 = vmatpush1.msra.mxu0 0.0
      %985 = vmatprep.subr.mxu0 0.0
      %986 = vmatpush1.msra.mxu0 0.0
      %987 = vmatprep.subr.mxu0 0.0
      %988 = vmatpush1.msra.mxu0 0.0
      %989 = vmatprep.subr.mxu0 0.0
      %990 = vmatpush1.msra.mxu0 0.0
      %991 = vmatprep.subr.mxu0 0.0
      %992 = vmatpush1.msra.mxu0 0.0
      %993 = vmatprep.subr.mxu0 0.0
      %994 = vmatpush1.msra.mxu0 0.0
      %995 = vmatprep.subr.mxu0 0.0
      %996 = vmatpush1.msra.mxu0 0.0
      %997 = vmatprep.subr.mxu0 0.0
      %998 = vmatpush1.msra.mxu0 0.0
      %999 = vmatprep.subr.mxu0 0.0
      %1000 = vmatpush1.msra.mxu0 0.0
      %1001 = vmatprep.subr.mxu0 0.0
      %1002 = vmatpush1.msra.mxu0 0.0
      %1003 = vmatprep.subr.mxu0 0.0
      %1004 = vmatpush1.msra.mxu0 0.0
      %1005 = vmatprep.subr.mxu0 0.0
      %1006 = vmatpush1.msra.mxu0 0.0
      %1007 = vmatprep.subr.mxu0 0.0
      %1008 = vmatpush1.msra.mxu0 0.0
      %1009 = vmatprep.mubr.f32.mxu0 0.0
      %1010 = vmatmul.mubr.f32.gmra.mrb[0].mxu0 %v943
      %v1011 = vpop.f32.mrb[0].mxu0
      %v1012 = vadd.f32 %v940, %v1011
      %v1013 = vpop.f32.mrb[0].mxu0
      %1014 = vdwg.mxu0
      %v1015 = vxor.u32 %v1012, 2147483648
      %v1016 = vmul.f32 %v1015, 1.442695
      %v1017 = vpow.pop %v1016
      %v1018 = vadd.f32 %v1017, 1.0
      %v1019 = vrcp.pop %v1018
      %v1020 = vmul.f32 1.0, %v1019
      %v1021 = vtanh.pop %v1012
      %1023 = vrot.lane.b32.xlu0 %v919, 32
      %v1024 = vpop.permute.xlu0 %1023
      %v1026 = vmul.f32 %v1020, %v1024
      %1028 = vrot.lane.b32.xlu0 %v1021, 64
      %v1029 = vpop.permute.xlu0 %1028
      %v1031 = vmul.f32 %v1020, %v1029
      %1033 = vrot.lane.b32.xlu0 %v1031, 32
      %v1034 = vpop.permute.xlu0 %1033
      %v1036 = vadd.f32 %v1026, %v1034
      %v1037 = vtanh.pop %v1036
      %1039 = vrot.lane.b32.xlu0 %v1037, 64
      %v1040 = vpop.permute.xlu0 %1039
      %v1042 = vmul.f32 %v1020, %v1040
      %1044 = vrot.lane.b32.xlu0 %v1042, 32
      %v1045 = vpop.permute.xlu0 %1044
      %1047 = vst.msk [vmem:[#allocation2 + $0x6] sm:$0x3] %vm641, %v1045
      %1049 = vrot.lane.b32.xlu0 %v1036, 96
      %v1050 = vpop.permute.xlu0 %1049
      %1052 = vst.msk [vmem:[#allocation3 + $0x6] sm:$0x3] %vm641, %v1050
      %v1053 = vld [vmem:[%s9] sm:$0xff]
      %v1054 = vld [vmem:[%s9 + $0x8] sm:$0xff]
      %v1055 = vld [vmem:[%s9 + $0x10] sm:$0xff]
      %v1056 = vld [vmem:[%s9 + $0x18] sm:$0xff]
      %v1057 = vld [vmem:[%s10] sm:$0x1]
      %v1059 = vlaneseq
      %v1060 = vshrl.u32 %v1059, 7
      %v1061 = vsub.s32 0, %v1060
      %v1062 = vrot.slane %v1057, %v1061
      %v1064 = vsel %vm526, %v1045, 0
      %1066 = vmatprep.subr.mxu0 0.0
      %1067 = vmatpush1.msra.mxu0 %v1053
      %1068 = vmatprep.subr.mxu0 0.0
      %1069 = vmatpush1.msra.mxu0 %v1054
      %1070 = vmatprep.subr.mxu0 0.0
      %1071 = vmatpush1.msra.mxu0 %v1055
      %1072 = vmatprep.subr.mxu0 0.0
      %1073 = vmatpush1.msra.mxu0 %v1056
      %1074 = vmatprep.subr.mxu0 0.0
      %1075 = vmatpush1.msra.mxu0 0.0
      %1076 = vmatprep.subr.mxu0 0.0
      %1077 = vmatpush1.msra.mxu0 0.0
      %1078 = vmatprep.subr.mxu0 0.0
      %1079 = vmatpush1.msra.mxu0 0.0
      %1080 = vmatprep.subr.mxu0 0.0
      %1081 = vmatpush1.msra.mxu0 0.0
      %1082 = vmatprep.subr.mxu0 0.0
      %1083 = vmatpush1.msra.mxu0 0.0
      %1084 = vmatprep.subr.mxu0 0.0
      %1085 = vmatpush1.msra.mxu0 0.0
      %1086 = vmatprep.subr.mxu0 0.0
      %1087 = vmatpush1.msra.mxu0 0.0
      %1088 = vmatprep.subr.mxu0 0.0
      %1089 = vmatpush1.msra.mxu0 0.0
      %1090 = vmatprep.subr.mxu0 0.0
      %1091 = vmatpush1.msra.mxu0 0.0
      %1092 = vmatprep.subr.mxu0 0.0
      %1093 = vmatpush1.msra.mxu0 0.0
      %1094 = vmatprep.subr.mxu0 0.0
      %1095 = vmatpush1.msra.mxu0 0.0
      %1096 = vmatprep.subr.mxu0 0.0
      %1097 = vmatpush1.msra.mxu0 0.0
      %1098 = vmatprep.subr.mxu0 0.0
      %1099 = vmatpush1.msra.mxu0 0.0
      %1100 = vmatprep.subr.mxu0 0.0
      %1101 = vmatpush1.msra.mxu0 0.0
      %1102 = vmatprep.subr.mxu0 0.0
      %1103 = vmatpush1.msra.mxu0 0.0
      %1104 = vmatprep.subr.mxu0 0.0
      %1105 = vmatpush1.msra.mxu0 0.0
      %1106 = vmatprep.subr.mxu0 0.0
      %1107 = vmatpush1.msra.mxu0 0.0
      %1108 = vmatprep.subr.mxu0 0.0
      %1109 = vmatpush1.msra.mxu0 0.0
      %1110 = vmatprep.subr.mxu0 0.0
      %1111 = vmatpush1.msra.mxu0 0.0
      %1112 = vmatprep.subr.mxu0 0.0
      %1113 = vmatpush1.msra.mxu0 0.0
      %1114 = vmatprep.subr.mxu0 0.0
      %1115 = vmatpush1.msra.mxu0 0.0
      %1116 = vmatprep.subr.mxu0 0.0
      %1117 = vmatpush1.msra.mxu0 0.0
      %1118 = vmatprep.subr.mxu0 0.0
      %1119 = vmatpush1.msra.mxu0 0.0
      %1120 = vmatprep.subr.mxu0 0.0
      %1121 = vmatpush1.msra.mxu0 0.0
      %1122 = vmatprep.subr.mxu0 0.0
      %1123 = vmatpush1.msra.mxu0 0.0
      %1124 = vmatprep.subr.mxu0 0.0
      %1125 = vmatpush1.msra.mxu0 0.0
      %1126 = vmatprep.subr.mxu0 0.0
      %1127 = vmatpush1.msra.mxu0 0.0
      %1128 = vmatprep.subr.mxu0 0.0
      %1129 = vmatpush1.msra.mxu0 0.0
      %1130 = vmatprep.mubr.f32.mxu0 0.0
      %1131 = vmatmul.mubr.f32.gmra.mrb[0].mxu0 %v1064
      %v1132 = vpop.f32.mrb[0].mxu0
      %v1133 = vadd.f32 %v1062, %v1132
      %v1134 = vpop.f32.mrb[0].mxu0
      %1135 = vdwg.mxu0
      %1136 = vst [vmem:[%s322] sm:$0x3] %v1133
      %v1137 = vlaneseq
      %v1138 = vand.u32 %v1137, 127
      %v1139 = vcvt.s32.f32 %v1138
      %vm1140 = vcmp.lt.s32.totalorder %v1138, 11
      %v1141 = vsel %vm1140, %v1133, -inf
      %vm1142 = vcmask 1041408
      %v1143 = vsel %vm1142, %v1141, -inf
      %1144 = vmax.xlane.f32.xlu0 %v1143
      %v1145 = vpop.xlane.xlu0 %1144
      %vm1146 = vcmp.ge.f32.partialorder %v1141, %v1145
      %v1147 = vsel %vm1146, %v1139, 128.0
      %v1148 = vsel %vm1142, %v1147, inf
      %1149 = vmin.xlane.f32.xlu0 %v1148
      %v1150 = vpop.xlane.xlu0 %1149
      %vm1151 = vcmp.eq.f32.partialorder %v1139, %v1150
      %v1152 = vsel %vm1151, 1, 0
      %v1153 = vcvt.s32.f32 %v1152
      %s1154 = sadd.s32 %s32, 1
      %v1155 = vlaneseq
      %v1156 = vshrl.u32 %v1155, 7
      %vm1157 = vcmp.eq.s32.totalorder %v1156, 0
      %s1158 = sld [smem:[#allocation7 + %s1154]]
      %v1159 = vstv %s1158
      %vm1160 = vcmp.eq.s32.totalorder %v1138, %v1159
      %vm1161 = vmand %vm1157, %vm1160
      %v1162 = vsel %vm1161, 1, 0
      %v1163 = vcvt.s32.f32 %v1162
      %v1164 = vadd.f32 %v1163, 0.0
      %vm1165 = vcmp.eq.s32.totalorder %v1156, 1
      %s1166 = sshra.s32 %s1154, 7
      %s1167 = sand.u32 %s1154, 127
      %s1168 = sadd.s32 %s1166, 1
      %s1169 = smul.u32 %s1168, 128
      %s1170 = sshra.s32 %s1154, 7
      %s1171 = sand.u32 %s1154, 127
      %s1172 = sadd.s32 %s1169, %s1171
      %s1173 = sld [smem:[#allocation7 + %s1172]]
      %v1174 = vstv %s1173
      %vm1175 = vcmp.eq.s32.totalorder %v1138, %v1174
      %vm1176 = vmand %vm1165, %vm1175
      %v1177 = vsel %vm1176, 1, 0
      %v1178 = vcvt.s32.f32 %v1177
      %v1179 = vadd.f32 %v1164, %v1178
      %s1180 = sld [smem:[#allocation8 + %s1154]]
      %p1181 = scmp.gt.s32.totalorder %s1180, 0
      %s1182 = scalar_select %p1181, 1, 0
      %s1183 = scvt.s32.f32 %s1182
      %v1184 = vstv %s1183
      %v1185 = vmul.f32 %v1184, %v1179
      %s1186 = ssub.f32 1.0, %s1183
      %v1187 = vstv %s1186
      %v1188 = vmul.f32 %v1187, %v1153
      %v1189 = vadd.f32 %v1185, %v1188
      %1190 = vst [vmem:[#allocation4] sm:$0x3] %v1189
      %p1191 = scmp.lt.s32.totalorder %s32, 3
      %s1192 = scalar_select %p1191, %s32, 3
      %s1193 = smul.addr %s1192, 2
      %s1194 = scalar_lea.vmem %s11, %s1193
      // Predicated region
      $region61: #{seq2seq_forward.3} parent=55 // pred_check
        %p1195 = pneg %p239
      $region62: #{seq2seq_forward.3} parent=55 // pred_check_branch
        %1197 = sbr.rel (%p1195) target = $region64
      $region63: #{seq2seq_forward.3} parent=55 // pred_region
        _
      $region64: #{seq2seq_forward.3} parent=55 // pred_fallthru
        _
    $region56: #{seq2seq_forward.3} parent=5 // pred_fallthru
      _
    %p1198 = scmp.le.s32.totalorder 2, %s27
    // Predicated region
    $region65: #{seq2seq_forward.3} parent=5 // pred_check
      %p1199 = pneg %p1198
    $region66: #{seq2seq_forward.3} parent=5 // pred_check_branch
      %1201 = sbr.rel (%p1199) target = $region68
    $region67: #{seq2seq_forward.3} parent=5 // pred_region
      %s1202 = ssub.s32 %s27, 2
      // Predicated region
      $region69: #{seq2seq_forward.3} parent=67 // pred_check
        %p1203 = pneg %p245
      $region70: #{seq2seq_forward.3} parent=67 // pred_check_branch
        %1205 = sbr.rel (%p1203) target = $region72
      $region71: #{seq2seq_forward.3} parent=67 // pred_region
        %p1206 = scmp.lt.s32.totalorder %s33, 3
        %s1207 = scalar_select %p1206, %s33, 3
        %s1208 = smul.addr %s1207, 2
        %s1209 = scalar_lea.vmem %s11, %s1208
      $region72: #{seq2seq_forward.3} parent=67 // pred_fallthru
        _
    $region68: #{seq2seq_forward.3} parent=5 // pred_fallthru
      _
  $region6: #{seq2seq_forward.3} parent=0 // loop_footer
    %s31 = sadd.s32 1, %s27
  $region7: #{seq2seq_forward.3} parent=0 // loop_footer_branch
    %26 = sbr.rel target = $region3
  $region8: #{seq2seq_forward.3} parent=0 // loop_exit
    _

// kernel: seq2seq_forward.2
$region0: #{seq2seq_forward.2}
  #allocation0 [shape = 'u32[]', space=smem, size = 0x4, offset = 0x4, fixed_abs, tag = 'smem constant byte address 0x4 - core index']
  #allocation1 [shape = 'u32[144,128]{1,0:T(1,128)}', space=vmem, size = 0x12000, scoped, tag = 'internal scratch']
  #allocation2 [shape = 'f32[8,32]{1,0:T(8,128)}', space=vmem, size = 0x1000, scoped, tag = 'scratch operand']
  #allocation3 [shape = 'f32[8,32]{1,0:T(8,128)}', space=vmem, size = 0x1000, scoped, tag = 'scratch operand']
  %s0 = inlined_call_operand.vmem [shape: f32[6,512,32], index: 0, kind: input, shape index: {}]
  %s1 = inlined_call_operand.vmem [shape: f32[32,32], index: 1, kind: input, shape index: {}]
  %s2 = inlined_call_operand.vmem [shape: f32[1,32], index: 2, kind: input, shape index: {}]
  %s3 = inlined_call_operand.vmem [shape: f32[32,128], index: 3, kind: input, shape index: {}]
  %s4 = inlined_call_operand.vmem [shape: f32[32,128], index: 4, kind: input, shape index: {}]
  %s5 = inlined_call_operand.vmem [shape: f32[3,64,128], index: 5, kind: input, shape index: {}]
  %s6 = inlined_call_operand.vmem [shape: f32[4,1,128], index: 6, kind: input, shape index: {}]
  %s7 = inlined_call_operand.vmem [shape: f32[8,32], index: 7, kind: output, shape index: {0}]
  %s8 = inlined_call_operand.vmem [shape: f32[8,32], index: 8, kind: output, shape index: {1}]
  %9 = xla_tuple %s7, %s8
  %s10 = sld [smem:[#allocation0]]
  $region77: #{seq2seq_forward.2} parent=0
    _
  %s12 = ssub.s32 1, %s10
  %s13 = scalar_select 0, %s12, %s10
  loop: start=0, step=1, limit=8
  $region2: #{seq2seq_forward.2} parent=0 // loop_pre_header
    _
  $region3: #{seq2seq_forward.2} parent=0 // loop_header
    %s15 = sphi 0, %s19
    %p16 = scmp.ge.s32.totalorder %s15, 8
    %s25 = sphi 0, %s27
    %s28 = sphi 0, %s25
    %s29 = sphi 0, %s28
    %s45 = sphi 0, %s29
    %s49 = sphi 0, %s49
    %s51 = sphi 0, %s49
    %s52 = sphi 0, %s51
    %s66 = sphi 0, %s52
    %s70 = sphi 0, %s70
    %s72 = sphi 0, %s70
    %s73 = sphi 0, %s72
    %s87 = sphi 0, %s73
    %s91 = sphi 0, %s91
    %s93 = sphi 0, %s91
    %s94 = sphi 0, %s93
    %s108 = sphi 0, %s94
    %s112 = sphi 0, %s112
    %s114 = sphi 0, %s112
    %s115 = sphi 0, %s114
    %s129 = sphi 0, %s115
    %s133 = sphi 0, %s133
    %s135 = sphi 0, %s133
    %s136 = sphi 0, %s135
    %s150 = sphi 0, %s136
    %s154 = sphi 0, %s154
    %s156 = sphi 0, %s154
    %s157 = sphi 0, %s156
    %s171 = sphi 0, %s157
    %s175 = sphi 0, %s175
    %s177 = sphi 0, %s175
    %s178 = sphi 0, %s177
    %s192 = sphi 0, %s178
    %s196 = sphi 0, %s196
    %s198 = sphi 0, %s196
    %s199 = sphi 0, %s198
    %s213 = sphi 0, %s199
  $region4: #{seq2seq_forward.2} parent=0 // loop_header_branch
    %18 = sbr.rel (%p16) target = $region8
  $region5: #{seq2seq_forward.2} parent=0 // loop_body
    %s20 = ssub.s32 %s15, 1
    %s21 = ssub.s32 %s15, 2
    %s22 = sadd.s32 %s15, 1
    %s23 = ssub.s32 %s15, %s22
    %p24 = scmp.eq.s32.totalorder %s23, 0
    %s26 = sadd.s32 %s25, 1
    %s27 = scalar_select %p24, %s25, %s26
    %p30 = pneg %p24
    %p31 = scmp.eq.s32.totalorder %s15, 5
    %p32 = por %p30, %p31
    %p33 = scmp.ne.s32.totalorder %s25, %s28
    %p34 = scmp.eq.s32.totalorder %s15, 0
    %p35 = por %p33, %p34
    %p36 = scmp.ne.s32.totalorder %s25, %s28
    %p37 = scmp.eq.s32.totalorder %s20, 5
    %p38 = por %p36, %p37
    %p39 = scmp.ne.s32.totalorder %s28, %s29
    %p40 = scmp.eq.s32.totalorder %s20, 0
    %p41 = por %p39, %p40
    %p42 = scmp.ne.s32.totalorder %s28, %s29
    %p43 = scmp.eq.s32.totalorder %s21, 5
    %p44 = por %p42, %p43
    %p46 = scmp.ne.s32.totalorder %s29, %s45
    %p47 = scmp.eq.s32.totalorder %s21, 0
    %p48 = por %p46, %p47
    %s50 = sadd.s32 %s49, 1
    %p53 = scmp.eq.s32.totalorder %s15, 5
    %p54 = scmp.ne.s32.totalorder %s49, %s51
    %p55 = scmp.eq.s32.totalorder %s15, 0
    %p56 = por %p54, %p55
    %p57 = scmp.ne.s32.totalorder %s49, %s51
    %p58 = scmp.eq.s32.totalorder %s20, 5
    %p59 = por %p57, %p58
    %p60 = scmp.ne.s32.totalorder %s51, %s52
    %p61 = scmp.eq.s32.totalorder %s20, 0
    %p62 = por %p60, %p61
    %p63 = scmp.ne.s32.totalorder %s51, %s52
    %p64 = scmp.eq.s32.totalorder %s21, 5
    %p65 = por %p63, %p64
    %p67 = scmp.ne.s32.totalorder %s52, %s66
    %p68 = scmp.eq.s32.totalorder %s21, 0
    %p69 = por %p67, %p68
    %s71 = sadd.s32 %s70, 1
    %p74 = scmp.eq.s32.totalorder %s15, 5
    %p75 = scmp.ne.s32.totalorder %s70, %s72
    %p76 = scmp.eq.s32.totalorder %s15, 0
    %p77 = por %p75, %p76
    %p78 = scmp.ne.s32.totalorder %s70, %s72
    %p79 = scmp.eq.s32.totalorder %s20, 5
    %p80 = por %p78, %p79
    %p81 = scmp.ne.s32.totalorder %s72, %s73
    %p82 = scmp.eq.s32.totalorder %s20, 0
    %p83 = por %p81, %p82
    %p84 = scmp.ne.s32.totalorder %s72, %s73
    %p85 = scmp.eq.s32.totalorder %s21, 5
    %p86 = por %p84, %p85
    %p88 = scmp.ne.s32.totalorder %s73, %s87
    %p89 = scmp.eq.s32.totalorder %s21, 0
    %p90 = por %p88, %p89
    %s92 = sadd.s32 %s91, 1
    %p95 = scmp.eq.s32.totalorder %s15, 5
    %p96 = scmp.ne.s32.totalorder %s91, %s93
    %p97 = scmp.eq.s32.totalorder %s15, 0
    %p98 = por %p96, %p97
    %p99 = scmp.ne.s32.totalorder %s91, %s93
    %p100 = scmp.eq.s32.totalorder %s20, 5
    %p101 = por %p99, %p100
    %p102 = scmp.ne.s32.totalorder %s93, %s94
    %p103 = scmp.eq.s32.totalorder %s20, 0
    %p104 = por %p102, %p103
    %p105 = scmp.ne.s32.totalorder %s93, %s94
    %p106 = scmp.eq.s32.totalorder %s21, 5
    %p107 = por %p105, %p106
    %p109 = scmp.ne.s32.totalorder %s94, %s108
    %p110 = scmp.eq.s32.totalorder %s21, 0
    %p111 = por %p109, %p110
    %s113 = sadd.s32 %s112, 1
    %p116 = scmp.eq.s32.totalorder %s15, 5
    %p117 = scmp.ne.s32.totalorder %s112, %s114
    %p118 = scmp.eq.s32.totalorder %s15, 0
    %p119 = por %p117, %p118
    %p120 = scmp.ne.s32.totalorder %s112, %s114
    %p121 = scmp.eq.s32.totalorder %s20, 5
    %p122 = por %p120, %p121
    %p123 = scmp.ne.s32.totalorder %s114, %s115
    %p124 = scmp.eq.s32.totalorder %s20, 0
    %p125 = por %p123, %p124
    %p126 = scmp.ne.s32.totalorder %s114, %s115
    %p127 = scmp.eq.s32.totalorder %s21, 5
    %p128 = por %p126, %p127
    %p130 = scmp.ne.s32.totalorder %s115, %s129
    %p131 = scmp.eq.s32.totalorder %s21, 0
    %p132 = por %p130, %p131
    %s134 = sadd.s32 %s133, 1
    %p137 = scmp.eq.s32.totalorder %s15, 5
    %p138 = scmp.ne.s32.totalorder %s133, %s135
    %p139 = scmp.eq.s32.totalorder %s15, 0
    %p140 = por %p138, %p139
    %p141 = scmp.ne.s32.totalorder %s133, %s135
    %p142 = scmp.eq.s32.totalorder %s20, 5
    %p143 = por %p141, %p142
    %p144 = scmp.ne.s32.totalorder %s135, %s136
    %p145 = scmp.eq.s32.totalorder %s20, 0
    %p146 = por %p144, %p145
    %p147 = scmp.ne.s32.totalorder %s135, %s136
    %p148 = scmp.eq.s32.totalorder %s21, 5
    %p149 = por %p147, %p148
    %p151 = scmp.ne.s32.totalorder %s136, %s150
    %p152 = scmp.eq.s32.totalorder %s21, 0
    %p153 = por %p151, %p152
    %s155 = sadd.s32 %s154, 1
    %p158 = scmp.eq.s32.totalorder %s15, 5
    %p159 = scmp.ne.s32.totalorder %s154, %s156
    %p160 = scmp.eq.s32.totalorder %s15, 0
    %p161 = por %p159, %p160
    %p162 = scmp.ne.s32.totalorder %s154, %s156
    %p163 = scmp.eq.s32.totalorder %s20, 5
    %p164 = por %p162, %p163
    %p165 = scmp.ne.s32.totalorder %s156, %s157
    %p166 = scmp.eq.s32.totalorder %s20, 0
    %p167 = por %p165, %p166
    %p168 = scmp.ne.s32.totalorder %s156, %s157
    %p169 = scmp.eq.s32.totalorder %s21, 5
    %p170 = por %p168, %p169
    %p172 = scmp.ne.s32.totalorder %s157, %s171
    %p173 = scmp.eq.s32.totalorder %s21, 0
    %p174 = por %p172, %p173
    %s176 = sadd.s32 %s175, 1
    %p179 = scmp.eq.s32.totalorder %s15, 5
    %p180 = scmp.ne.s32.totalorder %s175, %s177
    %p181 = scmp.eq.s32.totalorder %s15, 0
    %p182 = por %p180, %p181
    %p183 = scmp.ne.s32.totalorder %s175, %s177
    %p184 = scmp.eq.s32.totalorder %s20, 5
    %p185 = por %p183, %p184
    %p186 = scmp.ne.s32.totalorder %s177, %s178
    %p187 = scmp.eq.s32.totalorder %s20, 0
    %p188 = por %p186, %p187
    %p189 = scmp.ne.s32.totalorder %s177, %s178
    %p190 = scmp.eq.s32.totalorder %s21, 5
    %p191 = por %p189, %p190
    %p193 = scmp.ne.s32.totalorder %s178, %s192
    %p194 = scmp.eq.s32.totalorder %s21, 0
    %p195 = por %p193, %p194
    %s197 = sadd.s32 %s196, 1
    %p200 = scmp.eq.s32.totalorder %s15, 5
    %p201 = scmp.ne.s32.totalorder %s196, %s198
    %p202 = scmp.eq.s32.totalorder %s15, 0
    %p203 = por %p201, %p202
    %p204 = scmp.ne.s32.totalorder %s196, %s198
    %p205 = scmp.eq.s32.totalorder %s20, 5
    %p206 = por %p204, %p205
    %p207 = scmp.ne.s32.totalorder %s198, %s199
    %p208 = scmp.eq.s32.totalorder %s20, 0
    %p209 = por %p207, %p208
    %p210 = scmp.ne.s32.totalorder %s198, %s199
    %p211 = scmp.eq.s32.totalorder %s21, 5
    %p212 = por %p210, %p211
    %p214 = scmp.ne.s32.totalorder %s199, %s213
    %p215 = scmp.eq.s32.totalorder %s21, 0
    %p216 = por %p214, %p215
    %p217 = scmp.le.s32.totalorder 1, %s15
    %p218 = scmp.lt.s32.totalorder %s15, 7
    %p219 = pnand %p217, %p218
    %p220 = pneg %p219
    // Predicated region
    $region9: #{seq2seq_forward.2} parent=5 // pred_check
      _
    $region10: #{seq2seq_forward.2} parent=5 // pred_check_branch
      %222 = sbr.rel (%p219) target = $region12
    $region11: #{seq2seq_forward.2} parent=5 // pred_region
      %s223 = ssub.s32 %s15, 1
      // Predicated region
      $region13: #{seq2seq_forward.2} parent=11 // pred_check
        %p224 = pneg %p62
      $region14: #{seq2seq_forward.2} parent=11 // pred_check_branch
        %226 = sbr.rel (%p224) target = $region16
      $region15: #{seq2seq_forward.2} parent=11 // pred_region
        _
      $region16: #{seq2seq_forward.2} parent=11 // pred_fallthru
        _
      // Predicated region
      $region17: #{seq2seq_forward.2} parent=11 // pred_check
        %p227 = pneg %p83
      $region18: #{seq2seq_forward.2} parent=11 // pred_check_branch
        %229 = sbr.rel (%p227) target = $region20
      $region19: #{seq2seq_forward.2} parent=11 // pred_region
        _
      $region20: #{seq2seq_forward.2} parent=11 // pred_fallthru
        _
      // Predicated region
      $region21: #{seq2seq_forward.2} parent=11 // pred_check
        %p230 = pneg %p104
      $region22: #{seq2seq_forward.2} parent=11 // pred_check_branch
        %232 = sbr.rel (%p230) target = $region24
      $region23: #{seq2seq_forward.2} parent=11 // pred_region
        _
      $region24: #{seq2seq_forward.2} parent=11 // pred_fallthru
        _
      // Predicated region
      $region25: #{seq2seq_forward.2} parent=11 // pred_check
        %p233 = pneg %p125
      $region26: #{seq2seq_forward.2} parent=11 // pred_check_branch
        %235 = sbr.rel (%p233) target = $region28
      $region27: #{seq2seq_forward.2} parent=11 // pred_region
        _
      $region28: #{seq2seq_forward.2} parent=11 // pred_fallthru
        _
      // Predicated region
      $region29: #{seq2seq_forward.2} parent=11 // pred_check
        %p236 = pneg %p146
      $region30: #{seq2seq_forward.2} parent=11 // pred_check_branch
        %238 = sbr.rel (%p236) target = $region32
      $region31: #{seq2seq_forward.2} parent=11 // pred_region
        _
      $region32: #{seq2seq_forward.2} parent=11 // pred_fallthru
        _
      // Predicated region
      $region33: #{seq2seq_forward.2} parent=11 // pred_check
        %p239 = pneg %p167
      $region34: #{seq2seq_forward.2} parent=11 // pred_check_branch
        %241 = sbr.rel (%p239) target = $region36
      $region35: #{seq2seq_forward.2} parent=11 // pred_region
        _
      $region36: #{seq2seq_forward.2} parent=11 // pred_fallthru
        _
    $region12: #{seq2seq_forward.2} parent=5 // pred_fallthru
      _
    %p242 = scmp.lt.s32.totalorder %s15, 6
    // Predicated region
    $region37: #{seq2seq_forward.2} parent=5 // pred_check
      %p243 = pneg %p242
    $region38: #{seq2seq_forward.2} parent=5 // pred_check_branch
      %245 = sbr.rel (%p243) target = $region40
    $region39: #{seq2seq_forward.2} parent=5 // pred_region
      // Predicated region
      $region41: #{seq2seq_forward.2} parent=39 // pred_check
        %p246 = pneg %p35
      $region42: #{seq2seq_forward.2} parent=39 // pred_check_branch
        %248 = sbr.rel (%p246) target = $region44
      $region43: #{seq2seq_forward.2} parent=39 // pred_region
        %p249 = scmp.lt.s32.totalorder %s15, 5
        %s250 = scalar_select %p249, %s15, 5
        %s251 = smul.addr %s250, 64
        %s252 = smul.addr %s251, 8
        %s253 = scalar_lea.vmem %s0, %s252
      $region44: #{seq2seq_forward.2} parent=39 // pred_fallthru
        _
    $region40: #{seq2seq_forward.2} parent=5 // pred_fallthru
      _
    %p254 = scmp.le.s32.totalorder 1, %s15
    %p255 = scmp.lt.s32.totalorder %s15, 7
    %p256 = pnand %p254, %p255
    %p257 = pneg %p256
    // Predicated region
    $region45: #{seq2seq_forward.2} parent=5 // pred_check
      _
    $region46: #{seq2seq_forward.2} parent=5 // pred_check_branch
      %259 = sbr.rel (%p256) target = $region48
    $region47: #{seq2seq_forward.2} parent=5 // pred_region
      %s260 = ssub.s32 %s15, 1
      %p261 = scmp.lt.s32.totalorder %s20, 5
      %s262 = scalar_select %p261, %s20, 5
      %s263 = smul.addr %s262, 64
      %s264 = smul.addr %s263, 8
      %s265 = scalar_lea.vmem %s0, %s264
      %p266 = pneg %p41
      %p267 = pneg %p38
      %p268 = pneg %p62
      %p269 = pneg %p59
      %p270 = pneg %p83
      %p271 = pneg %p80
      %p272 = pneg %p104
      %p273 = pneg %p101
      %p274 = pneg %p125
      %p275 = pneg %p122
      %p276 = pneg %p146
      %p277 = pneg %p143
      %p278 = pneg %p167
      %p279 = pneg %p164
      %p280 = pneg %p188
      %p281 = pneg %p185
      %p282 = pneg %p209
      %p283 = pneg %p206
      %p284 = scmp.lt.s32.totalorder %s20, 5
      %s285 = scalar_select %p284, %s20, 5
      %s286 = smul.addr %s285, 64
      %s287 = smul.addr %s286, 8
      %s288 = scalar_lea.vmem %s0, %s287
      %p289 = scmp.eq.s32.totalorder %s20, 0
      // Predicated region
      $region49: #{seq2seq_forward.2} parent=47 // pred_check
        %p290 = pneg %p289
      $region50: #{seq2seq_forward.2} parent=47 // pred_check_branch
        %292 = sbr.rel (%p290) target = $region52
      $region51: #{seq2seq_forward.2} parent=47 // pred_region
        %vm293 = vcmask 261120
        %294 = vst.msk [vmem:[#allocation2] sm:$0xff] %vm293, 0.0
        %295 = vst.msk [vmem:[#allocation3] sm:$0xff] %vm293, 0.0
      $region52: #{seq2seq_forward.2} parent=47 // pred_fallthru
        _
      %v296 = vld [vmem:[%s288] sm:$0xff]
      %v297 = vld [vmem:[%s288 + $0x8] sm:$0xff]
      %v298 = vld [vmem:[%s288 + $0x10] sm:$0xff]
      %v299 = vld [vmem:[%s288 + $0x18] sm:$0xff]
      %v300 = vld [vmem:[%s288 + $0x20] sm:$0xff]
      %v301 = vld [vmem:[%s288 + $0x28] sm:$0xff]
      %v302 = vld [vmem:[%s288 + $0x30] sm:$0xff]
      %v303 = vld [vmem:[%s288 + $0x38] sm:$0xff]
      %v304 = vld [vmem:[%s288 + $0x40] sm:$0xff]
      %v305 = vld [vmem:[%s288 + $0x48] sm:$0xff]
      %v306 = vld [vmem:[%s288 + $0x50] sm:$0xff]
      %v307 = vld [vmem:[%s288 + $0x58] sm:$0xff]
      %v308 = vld [vmem:[%s288 + $0x60] sm:$0xff]
      %v309 = vld [vmem:[%s288 + $0x68] sm:$0xff]
      %v310 = vld [vmem:[%s288 + $0x70] sm:$0xff]
      %v311 = vld [vmem:[%s288 + $0x78] sm:$0xff]
      %v312 = vld [vmem:[%s288 + $0x80] sm:$0xff]
      %v313 = vld [vmem:[%s288 + $0x88] sm:$0xff]
      %v314 = vld [vmem:[%s288 + $0x90] sm:$0xff]
      %v315 = vld [vmem:[%s288 + $0x98] sm:$0xff]
      %v316 = vld [vmem:[%s288 + $0xa0] sm:$0xff]
      %v317 = vld [vmem:[%s288 + $0xa8] sm:$0xff]
      %v318 = vld [vmem:[%s288 + $0xb0] sm:$0xff]
      %v319 = vld [vmem:[%s288 + $0xb8] sm:$0xff]
      %v320 = vld [vmem:[%s288 + $0xc0] sm:$0xff]
      %v321 = vld [vmem:[%s288 + $0xc8] sm:$0xff]
      %v322 = vld [vmem:[%s288 + $0xd0] sm:$0xff]
      %v323 = vld [vmem:[%s288 + $0xd8] sm:$0xff]
      %v324 = vld [vmem:[%s288 + $0xe0] sm:$0xff]
      %v325 = vld [vmem:[%s288 + $0xe8] sm:$0xff]
      %v326 = vld [vmem:[%s288 + $0xf0] sm:$0xff]
      %v327 = vld [vmem:[%s288 + $0xf8] sm:$0xff]
      %v328 = vld [vmem:[%s288 + $0x100] sm:$0xff]
      %v329 = vld [vmem:[%s288 + $0x108] sm:$0xff]
      %v330 = vld [vmem:[%s288 + $0x110] sm:$0xff]
      %v331 = vld [vmem:[%s288 + $0x118] sm:$0xff]
      %v332 = vld [vmem:[%s288 + $0x120] sm:$0xff]
      %v333 = vld [vmem:[%s288 + $0x128] sm:$0xff]
      %v334 = vld [vmem:[%s288 + $0x130] sm:$0xff]
      %v335 = vld [vmem:[%s288 + $0x138] sm:$0xff]
      %v336 = vld [vmem:[%s288 + $0x140] sm:$0xff]
      %v337 = vld [vmem:[%s288 + $0x148] sm:$0xff]
      %v338 = vld [vmem:[%s288 + $0x150] sm:$0xff]
      %v339 = vld [vmem:[%s288 + $0x158] sm:$0xff]
      %v340 = vld [vmem:[%s288 + $0x160] sm:$0xff]
      %v341 = vld [vmem:[%s288 + $0x168] sm:$0xff]
      %v342 = vld [vmem:[%s288 + $0x170] sm:$0xff]
      %v343 = vld [vmem:[%s288 + $0x178] sm:$0xff]
      %v344 = vld [vmem:[%s288 + $0x180] sm:$0xff]
      %v345 = vld [vmem:[%s288 + $0x188] sm:$0xff]
      %v346 = vld [vmem:[%s288 + $0x190] sm:$0xff]
      %v347 = vld [vmem:[%s288 + $0x198] sm:$0xff]
      %v348 = vld [vmem:[%s288 + $0x1a0] sm:$0xff]
      %v349 = vld [vmem:[%s288 + $0x1a8] sm:$0xff]
      %v350 = vld [vmem:[%s288 + $0x1b0] sm:$0xff]
      %v351 = vld [vmem:[%s288 + $0x1b8] sm:$0xff]
      %v352 = vld [vmem:[%s288 + $0x1c0] sm:$0xff]
      %v353 = vld [vmem:[%s288 + $0x1c8] sm:$0xff]
      %v354 = vld [vmem:[%s288 + $0x1d0] sm:$0xff]
      %v355 = vld [vmem:[%s288 + $0x1d8] sm:$0xff]
      %v356 = vld [vmem:[%s288 + $0x1e0] sm:$0xff]
      %v357 = vld [vmem:[%s288 + $0x1e8] sm:$0xff]
      %v358 = vld [vmem:[%s288 + $0x1f0] sm:$0xff]
      %v359 = vld [vmem:[%s288 + $0x1f8] sm:$0xff]
      %v360 = vld [vmem:[%s1] sm:$0xff]
      %v361 = vld [vmem:[%s1 + $0x8] sm:$0xff]
      %v362 = vld [vmem:[%s1 + $0x10] sm:$0xff]
      %v363 = vld [vmem:[%s1 + $0x18] sm:$0xff]
      %v364 = vld [vmem:[%s2] sm:$0x1]
      %v366 = vlaneseq
      %v367 = vshrl.u32 %v366, 7
      %v368 = vsub.s32 0, %v367
      %v369 = vrot.slane %v364, %v368
      %vm371 = vcmask 261120
      %v373 = vsel %vm371, %v296, 0
      %v376 = vsel %vm371, %v297, 0
      %v379 = vsel %vm371, %v298, 0
      %v382 = vsel %vm371, %v299, 0
      %v385 = vsel %vm371, %v300, 0
      %v388 = vsel %vm371, %v301, 0
      %v391 = vsel %vm371, %v302, 0
      %v394 = vsel %vm371, %v303, 0
      %v397 = vsel %vm371, %v304, 0
      %v400 = vsel %vm371, %v305, 0
      %v403 = vsel %vm371, %v306, 0
      %v406 = vsel %vm371, %v307, 0
      %v409 = vsel %vm371, %v308, 0
      %v412 = vsel %vm371, %v309, 0
      %v415 = vsel %vm371, %v310, 0
      %v418 = vsel %vm371, %v311, 0
      %v421 = vsel %vm371, %v312, 0
      %v424 = vsel %vm371, %v313, 0
      %v427 = vsel %vm371, %v314, 0
      %v430 = vsel %vm371, %v315, 0
      %v433 = vsel %vm371, %v316, 0
      %v436 = vsel %vm371, %v317, 0
      %v439 = vsel %vm371, %v318, 0
      %v442 = vsel %vm371, %v319, 0
      %v445 = vsel %vm371, %v320, 0
      %v448 = vsel %vm371, %v321, 0
      %v451 = vsel %vm371, %v322, 0
      %v454 = vsel %vm371, %v323, 0
      %v457 = vsel %vm371, %v324, 0
      %v460 = vsel %vm371, %v325, 0
      %v463 = vsel %vm371, %v326, 0
      %v466 = vsel %vm371, %v327, 0
      %v469 = vsel %vm371, %v328, 0
      %v472 = vsel %vm371, %v329, 0
      %v475 = vsel %vm371, %v330, 0
      %v478 = vsel %vm371, %v331, 0
      %v481 = vsel %vm371, %v332, 0
      %v484 = vsel %vm371, %v333, 0
      %v487 = vsel %vm371, %v334, 0
      %v490 = vsel %vm371, %v335, 0
      %v493 = vsel %vm371, %v336, 0
      %v496 = vsel %vm371, %v337, 0
      %v499 = vsel %vm371, %v338, 0
      %v502 = vsel %vm371, %v339, 0
      %v505 = vsel %vm371, %v340, 0
      %v508 = vsel %vm371, %v341, 0
      %v511 = vsel %vm371, %v342, 0
      %v514 = vsel %vm371, %v343, 0
      %v517 = vsel %vm371, %v344, 0
      %v520 = vsel %vm371, %v345, 0
      %v523 = vsel %vm371, %v346, 0
      %v526 = vsel %vm371, %v347, 0
      %v529 = vsel %vm371, %v348, 0
      %v532 = vsel %vm371, %v349, 0
      %v535 = vsel %vm371, %v350, 0
      %v538 = vsel %vm371, %v351, 0
      %v541 = vsel %vm371, %v352, 0
      %v544 = vsel %vm371, %v353, 0
      %v547 = vsel %vm371, %v354, 0
      %v550 = vsel %vm371, %v355, 0
      %v553 = vsel %vm371, %v356, 0
      %v556 = vsel %vm371, %v357, 0
      %v559 = vsel %vm371, %v358, 0
      %v562 = vsel %vm371, %v359, 0
      %564 = vmatprep.subr.mxu0 0.0
      %565 = vmatpush1.msra.mxu0 %v360
      %566 = vmatprep.subr.mxu0 0.0
      %567 = vmatpush1.msra.mxu0 %v361
      %568 = vmatprep.subr.mxu0 0.0
      %569 = vmatpush1.msra.mxu0 %v362
      %570 = vmatprep.subr.mxu0 0.0
      %571 = vmatpush1.msra.mxu0 %v363
      %572 = vmatprep.subr.mxu0 0.0
      %573 = vmatpush1.msra.mxu0 0.0
      %574 = vmatprep.subr.mxu0 0.0
      %575 = vmatpush1.msra.mxu0 0.0
      %576 = vmatprep.subr.mxu0 0.0
      %577 = vmatpush1.msra.mxu0 0.0
      %578 = vmatprep.subr.mxu0 0.0
      %579 = vmatpush1.msra.mxu0 0.0
      %580 = vmatprep.subr.mxu0 0.0
      %581 = vmatpush1.msra.mxu0 0.0
      %582 = vmatprep.subr.mxu0 0.0
      %583 = vmatpush1.msra.mxu0 0.0
      %584 = vmatprep.subr.mxu0 0.0
      %585 = vmatpush1.msra.mxu0 0.0
      %586 = vmatprep.subr.mxu0 0.0
      %587 = vmatpush1.msra.mxu0 0.0
      %588 = vmatprep.subr.mxu0 0.0
      %589 = vmatpush1.msra.mxu0 0.0
      %590 = vmatprep.subr.mxu0 0.0
      %591 = vmatpush1.msra.mxu0 0.0
      %592 = vmatprep.subr.mxu0 0.0
      %593 = vmatpush1.msra.mxu0 0.0
      %594 = vmatprep.subr.mxu0 0.0
      %595 = vmatpush1.msra.mxu0 0.0
      %596 = vmatprep.subr.mxu0 0.0
      %597 = vmatpush1.msra.mxu0 0.0
      %598 = vmatprep.subr.mxu0 0.0
      %599 = vmatpush1.msra.mxu0 0.0
      %600 = vmatprep.subr.mxu0 0.0
      %601 = vmatpush1.msra.mxu0 0.0
      %602 = vmatprep.subr.mxu0 0.0
      %603 = vmatpush1.msra.mxu0 0.0
      %604 = vmatprep.subr.mxu0 0.0
      %605 = vmatpush1.msra.mxu0 0.0
      %606 = vmatprep.subr.mxu0 0.0
      %607 = vmatpush1.msra.mxu0 0.0
      %608 = vmatprep.subr.mxu0 0.0
      %609 = vmatpush1.msra.mxu0 0.0
      %610 = vmatprep.subr.mxu0 0.0
      %611 = vmatpush1.msra.mxu0 0.0
      %612 = vmatprep.subr.mxu0 0.0
      %613 = vmatpush1.msra.mxu0 0.0
      %614 = vmatprep.subr.mxu0 0.0
      %615 = vmatpush1.msra.mxu0 0.0
      %616 = vmatprep.subr.mxu0 0.0
      %617 = vmatpush1.msra.mxu0 0.0
      %618 = vmatprep.subr.mxu0 0.0
      %619 = vmatpush1.msra.mxu0 0.0
      %620 = vmatprep.subr.mxu0 0.0
      %621 = vmatpush1.msra.mxu0 0.0
      %622 = vmatprep.subr.mxu0 0.0
      %623 = vmatpush1.msra.mxu0 0.0
      %624 = vmatprep.subr.mxu0 0.0
      %625 = vmatpush1.msra.mxu0 0.0
      %626 = vmatprep.subr.mxu0 0.0
      %627 = vmatpush1.msra.mxu0 0.0
      %628 = vmatprep.mubr.f32.mxu0 0.0
      %629 = vmatmul.mubr.f32.gmra.mrb[0].mxu0 %v373
      %v630 = vpop.f32.mrb[0].mxu0
      %v631 = vadd.f32 %v369, %v630
      %v632 = vpop.f32.mrb[0].mxu0
      %633 = vmatprep.mubr.f32.mxu0 0.0
      %634 = vmatmul.mubr.f32.gmra.mrb[0].mxu0 %v376
      %v635 = vpop.f32.mrb[0].mxu0
      %v636 = vadd.f32 %v369, %v635
      %v637 = vpop.f32.mrb[0].mxu0
      %638 = vmatprep.mubr.f32.mxu0 0.0
      %639 = vmatmul.mubr.f32.gmra.mrb[0].mxu0 %v379
      %v640 = vpop.f32.mrb[0].mxu0
      %v641 = vadd.f32 %v369, %v640
      %v642 = vpop.f32.mrb[0].mxu0
      %643 = vmatprep.mubr.f32.mxu0 0.0
      %644 = vmatmul.mubr.f32.gmra.mrb[0].mxu0 %v382
      %v645 = vpop.f32.mrb[0].mxu0
      %v646 = vadd.f32 %v369, %v645
      %v647 = vpop.f32.mrb[0].mxu0
      %648 = vmatprep.mubr.f32.mxu0 0.0
      %649 = vmatmul.mubr.f32.gmra.mrb[0].mxu0 %v385
      %v650 = vpop.f32.mrb[0].mxu0
      %v651 = vadd.f32 %v369, %v650
      %v652 = vpop.f32.mrb[0].mxu0
      %653 = vmatprep.mubr.f32.mxu0 0.0
      %654 = vmatmul.mubr.f32.gmra.mrb[0].mxu0 %v388
      %v655 = vpop.f32.mrb[0].mxu0
      %v656 = vadd.f32 %v369, %v655
      %v657 = vpop.f32.mrb[0].mxu0
      %658 = vmatprep.mubr.f32.mxu0 0.0
      %659 = vmatmul.mubr.f32.gmra.mrb[0].mxu0 %v391
      %v660 = vpop.f32.mrb[0].mxu0
      %v661 = vadd.f32 %v369, %v660
      %v662 = vpop.f32.mrb[0].mxu0
      %663 = vmatprep.mubr.f32.mxu0 0.0
      %664 = vmatmul.mubr.f32.gmra.mrb[0].mxu0 %v394
      %v665 = vpop.f32.mrb[0].mxu0
      %v666 = vadd.f32 %v369, %v665
      %v667 = vpop.f32.mrb[0].mxu0
      %668 = vmatprep.mubr.f32.mxu0 0.0
      %669 = vmatmul.mubr.f32.gmra.mrb[0].mxu0 %v397
      %v670 = vpop.f32.mrb[0].mxu0
      %v671 = vadd.f32 %v369, %v670
      %v672 = vpop.f32.mrb[0].mxu0
      %673 = vmatprep.mubr.f32.mxu0 0.0
      %674 = vmatmul.mubr.f32.gmra.mrb[0].mxu0 %v400
      %v675 = vpop.f32.mrb[0].mxu0
      %v676 = vadd.f32 %v369, %v675
      %v677 = vpop.f32.mrb[0].mxu0
      %678 = vmatprep.mubr.f32.mxu0 0.0
      %679 = vmatmul.mubr.f32.gmra.mrb[0].mxu0 %v403
      %v680 = vpop.f32.mrb[0].mxu0
      %v681 = vadd.f32 %v369, %v680
      %v682 = vpop.f32.mrb[0].mxu0
      %683 = vmatprep.mubr.f32.mxu0 0.0
      %684 = vmatmul.mubr.f32.gmra.mrb[0].mxu0 %v406
      %v685 = vpop.f32.mrb[0].mxu0
      %v686 = vadd.f32 %v369, %v685
      %v687 = vpop.f32.mrb[0].mxu0
      %688 = vmatprep.mubr.f32.mxu0 0.0
      %689 = vmatmul.mubr.f32.gmra.mrb[0].mxu0 %v409
      %v690 = vpop.f32.mrb[0].mxu0
      %v691 = vadd.f32 %v369, %v690
      %v692 = vpop.f32.mrb[0].mxu0
      %693 = vmatprep.mubr.f32.mxu0 0.0
      %694 = vmatmul.mubr.f32.gmra.mrb[0].mxu0 %v412
      %v695 = vpop.f32.mrb[0].mxu0
      %v696 = vadd.f32 %v369, %v695
      %v697 = vpop.f32.mrb[0].mxu0
      %698 = vmatprep.mubr.f32.mxu0 0.0
      %699 = vmatmul.mubr.f32.gmra.mrb[0].mxu0 %v415
      %v700 = vpop.f32.mrb[0].mxu0
      %v701 = vadd.f32 %v369, %v700
      %v702 = vpop.f32.mrb[0].mxu0
      %703 = vmatprep.mubr.f32.mxu0 0.0
      %704 = vmatmul.mubr.f32.gmra.mrb[0].mxu0 %v418
      %v705 = vpop.f32.mrb[0].mxu0
      %v706 = vadd.f32 %v369, %v705
      %v707 = vpop.f32.mrb[0].mxu0
      %708 = vmatprep.mubr.f32.mxu0 0.0
      %709 = vmatmul.mubr.f32.gmra.mrb[0].mxu0 %v421
      %v710 = vpop.f32.mrb[0].mxu0
      %v711 = vadd.f32 %v369, %v710
      %v712 = vpop.f32.mrb[0].mxu0
      %713 = vmatprep.mubr.f32.mxu0 0.0
      %714 = vmatmul.mubr.f32.gmra.mrb[0].mxu0 %v424
      %v715 = vpop.f32.mrb[0].mxu0
      %v716 = vadd.f32 %v369, %v715
      %v717 = vpop.f32.mrb[0].mxu0
      %718 = vmatprep.mubr.f32.mxu0 0.0
      %719 = vmatmul.mubr.f32.gmra.mrb[0].mxu0 %v427
      %v720 = vpop.f32.mrb[0].mxu0
      %v721 = vadd.f32 %v369, %v720
      %v722 = vpop.f32.mrb[0].mxu0
      %723 = vmatprep.mubr.f32.mxu0 0.0
      %724 = vmatmul.mubr.f32.gmra.mrb[0].mxu0 %v430
      %v725 = vpop.f32.mrb[0].mxu0
      %v726 = vadd.f32 %v369, %v725
      %v727 = vpop.f32.mrb[0].mxu0
      %728 = vmatprep.mubr.f32.mxu0 0.0
      %729 = vmatmul.mubr.f32.gmra.mrb[0].mxu0 %v433
      %v730 = vpop.f32.mrb[0].mxu0
      %v731 = vadd.f32 %v369, %v730
      %v732 = vpop.f32.mrb[0].mxu0
      %733 = vmatprep.mubr.f32.mxu0 0.0
      %734 = vmatmul.mubr.f32.gmra.mrb[0].mxu0 %v436
      %v735 = vpop.f32.mrb[0].mxu0
      %v736 = vadd.f32 %v369, %v735
      %v737 = vpop.f32.mrb[0].mxu0
      %738 = vmatprep.mubr.f32.mxu0 0.0
      %739 = vmatmul.mubr.f32.gmra.mrb[0].mxu0 %v439
      %v740 = vpop.f32.mrb[0].mxu0
      %v741 = vadd.f32 %v369, %v740
      %v742 = vpop.f32.mrb[0].mxu0
      %743 = vmatprep.mubr.f32.mxu0 0.0
      %744 = vmatmul.mubr.f32.gmra.mrb[0].mxu0 %v442
      %v745 = vpop.f32.mrb[0].mxu0
      %v746 = vadd.f32 %v369, %v745
      %v747 = vpop.f32.mrb[0].mxu0
      %748 = vmatprep.mubr.f32.mxu0 0.0
      %749 = vmatmul.mubr.f32.gmra.mrb[0].mxu0 %v445
      %v750 = vpop.f32.mrb[0].mxu0
      %v751 = vadd.f32 %v369, %v750
      %v752 = vpop.f32.mrb[0].mxu0
      %753 = vmatprep.mubr.f32.mxu0 0.0
      %754 = vmatmul.mubr.f32.gmra.mrb[0].mxu0 %v448
      %v755 = vpop.f32.mrb[0].mxu0
      %v756 = vadd.f32 %v369, %v755
      %v757 = vpop.f32.mrb[0].mxu0
      %758 = vmatprep.mubr.f32.mxu0 0.0
      %759 = vmatmul.mubr.f32.gmra.mrb[0].mxu0 %v451
      %v760 = vpop.f32.mrb[0].mxu0
      %v761 = vadd.f32 %v369, %v760
      %v762 = vpop.f32.mrb[0].mxu0
      %763 = vmatprep.mubr.f32.mxu0 0.0
      %764 = vmatmul.mubr.f32.gmra.mrb[0].mxu0 %v454
      %v765 = vpop.f32.mrb[0].mxu0
      %v766 = vadd.f32 %v369, %v765
      %v767 = vpop.f32.mrb[0].mxu0
      %768 = vmatprep.mubr.f32.mxu0 0.0
      %769 = vmatmul.mubr.f32.gmra.mrb[0].mxu0 %v457
      %v770 = vpop.f32.mrb[0].mxu0
      %v771 = vadd.f32 %v369, %v770
      %v772 = vpop.f32.mrb[0].mxu0
      %773 = vmatprep.mubr.f32.mxu0 0.0
      %774 = vmatmul.mubr.f32.gmra.mrb[0].mxu0 %v460
      %v775 = vpop.f32.mrb[0].mxu0
      %v776 = vadd.f32 %v369, %v775
      %v777 = vpop.f32.mrb[0].mxu0
      %778 = vmatprep.mubr.f32.mxu0 0.0
      %779 = vmatmul.mubr.f32.gmra.mrb[0].mxu0 %v463
      %v780 = vpop.f32.mrb[0].mxu0
      %v781 = vadd.f32 %v369, %v780
      %v782 = vpop.f32.mrb[0].mxu0
      %783 = vmatprep.mubr.f32.mxu0 0.0
      %784 = vmatmul.mubr.f32.gmra.mrb[0].mxu0 %v466
      %v785 = vpop.f32.mrb[0].mxu0
      %v786 = vadd.f32 %v369, %v785
      %v787 = vpop.f32.mrb[0].mxu0
      %788 = vmatprep.mubr.f32.mxu0 0.0
      %789 = vmatmul.mubr.f32.gmra.mrb[0].mxu0 %v469
      %v790 = vpop.f32.mrb[0].mxu0
      %v791 = vadd.f32 %v369, %v790
      %v792 = vpop.f32.mrb[0].mxu0
      %793 = vmatprep.mubr.f32.mxu0 0.0
      %794 = vmatmul.mubr.f32.gmra.mrb[0].mxu0 %v472
      %v795 = vpop.f32.mrb[0].mxu0
      %v796 = vadd.f32 %v369, %v795
      %v797 = vpop.f32.mrb[0].mxu0
      %798 = vmatprep.mubr.f32.mxu0 0.0
      %799 = vmatmul.mubr.f32.gmra.mrb[0].mxu0 %v475
      %v800 = vpop.f32.mrb[0].mxu0
      %v801 = vadd.f32 %v369, %v800
      %v802 = vpop.f32.mrb[0].mxu0
      %803 = vmatprep.mubr.f32.mxu0 0.0
      %804 = vmatmul.mubr.f32.gmra.mrb[0].mxu0 %v478
      %v805 = vpop.f32.mrb[0].mxu0
      %v806 = vadd.f32 %v369, %v805
      %v807 = vpop.f32.mrb[0].mxu0
      %808 = vmatprep.mubr.f32.mxu0 0.0
      %809 = vmatmul.mubr.f32.gmra.mrb[0].mxu0 %v481
      %v810 = vpop.f32.mrb[0].mxu0
      %v811 = vadd.f32 %v369, %v810
      %v812 = vpop.f32.mrb[0].mxu0
      %813 = vmatprep.mubr.f32.mxu0 0.0
      %814 = vmatmul.mubr.f32.gmra.mrb[0].mxu0 %v484
      %v815 = vpop.f32.mrb[0].mxu0
      %v816 = vadd.f32 %v369, %v815
      %v817 = vpop.f32.mrb[0].mxu0
      %818 = vmatprep.mubr.f32.mxu0 0.0
      %819 = vmatmul.mubr.f32.gmra.mrb[0].mxu0 %v487
      %v820 = vpop.f32.mrb[0].mxu0
      %v821 = vadd.f32 %v369, %v820
      %v822 = vpop.f32.mrb[0].mxu0
      %823 = vmatprep.mubr.f32.mxu0 0.0
      %824 = vmatmul.mubr.f32.gmra.mrb[0].mxu0 %v490
      %v825 = vpop.f32.mrb[0].mxu0
      %v826 = vadd.f32 %v369, %v825
      %v827 = vpop.f32.mrb[0].mxu0
      %828 = vmatprep.mubr.f32.mxu0 0.0
      %829 = vmatmul.mubr.f32.gmra.mrb[0].mxu0 %v493
      %v830 = vpop.f32.mrb[0].mxu0
      %v831 = vadd.f32 %v369, %v830
      %v832 = vpop.f32.mrb[0].mxu0
      %833 = vmatprep.mubr.f32.mxu0 0.0
      %834 = vmatmul.mubr.f32.gmra.mrb[0].mxu0 %v496
      %v835 = vpop.f32.mrb[0].mxu0
      %v836 = vadd.f32 %v369, %v835
      %v837 = vpop.f32.mrb[0].mxu0
      %838 = vmatprep.mubr.f32.mxu0 0.0
      %839 = vmatmul.mubr.f32.gmra.mrb[0].mxu0 %v499
      %v840 = vpop.f32.mrb[0].mxu0
      %v841 = vadd.f32 %v369, %v840
      %v842 = vpop.f32.mrb[0].mxu0
      %843 = vmatprep.mubr.f32.mxu0 0.0
      %844 = vmatmul.mubr.f32.gmra.mrb[0].mxu0 %v502
      %v845 = vpop.f32.mrb[0].mxu0
      %v846 = vadd.f32 %v369, %v845
      %v847 = vpop.f32.mrb[0].mxu0
      %848 = vmatprep.mubr.f32.mxu0 0.0
      %849 = vmatmul.mubr.f32.gmra.mrb[0].mxu0 %v505
      %v850 = vpop.f32.mrb[0].mxu0
      %v851 = vadd.f32 %v369, %v850
      %v852 = vpop.f32.mrb[0].mxu0
      %853 = vmatprep.mubr.f32.mxu0 0.0
      %854 = vmatmul.mubr.f32.gmra.mrb[0].mxu0 %v508
      %v855 = vpop.f32.mrb[0].mxu0
      %v856 = vadd.f32 %v369, %v855
      %v857 = vpop.f32.mrb[0].mxu0
      %858 = vmatprep.mubr.f32.mxu0 0.0
      %859 = vmatmul.mubr.f32.gmra.mrb[0].mxu0 %v511
      %v860 = vpop.f32.mrb[0].mxu0
      %v861 = vadd.f32 %v369, %v860
      %v862 = vpop.f32.mrb[0].mxu0
      %863 = vmatprep.mubr.f32.mxu0 0.0
      %864 = vmatmul.mubr.f32.gmra.mrb[0].mxu0 %v514
      %v865 = vpop.f32.mrb[0].mxu0
      %v866 = vadd.f32 %v369, %v865
      %v867 = vpop.f32.mrb[0].mxu0
      %868 = vmatprep.mubr.f32.mxu0 0.0
      %869 = vmatmul.mubr.f32.gmra.mrb[0].mxu0 %v517
      %v870 = vpop.f32.mrb[0].mxu0
      %v871 = vadd.f32 %v369, %v870
      %v872 = vpop.f32.mrb[0].mxu0
      %873 = vmatprep.mubr.f32.mxu0 0.0
      %874 = vmatmul.mubr.f32.gmra.mrb[0].mxu0 %v520
      %v875 = vpop.f32.mrb[0].mxu0
      %v876 = vadd.f32 %v369, %v875
      %v877 = vpop.f32.mrb[0].mxu0
      %878 = vmatprep.mubr.f32.mxu0 0.0
      %879 = vmatmul.mubr.f32.gmra.mrb[0].mxu0 %v523
      %v880 = vpop.f32.mrb[0].mxu0
      %v881 = vadd.f32 %v369, %v880
      %v882 = vpop.f32.mrb[0].mxu0
      %883 = vmatprep.mubr.f32.mxu0 0.0
      %884 = vmatmul.mubr.f32.gmra.mrb[0].mxu0 %v526
      %v885 = vpop.f32.mrb[0].mxu0
      %v886 = vadd.f32 %v369, %v885
      %v887 = vpop.f32.mrb[0].mxu0
      %888 = vmatprep.mubr.f32.mxu0 0.0
      %889 = vmatmul.mubr.f32.gmra.mrb[0].mxu0 %v529
      %v890 = vpop.f32.mrb[0].mxu0
      %v891 = vadd.f32 %v369, %v890
      %v892 = vpop.f32.mrb[0].mxu0
      %893 = vmatprep.mubr.f32.mxu0 0.0
      %894 = vmatmul.mubr.f32.gmra.mrb[0].mxu0 %v532
      %v895 = vpop.f32.mrb[0].mxu0
      %v896 = vadd.f32 %v369, %v895
      %v897 = vpop.f32.mrb[0].mxu0
      %898 = vmatprep.mubr.f32.mxu0 0.0
      %899 = vmatmul.mubr.f32.gmra.mrb[0].mxu0 %v535
      %v900 = vpop.f32.mrb[0].mxu0
      %v901 = vadd.f32 %v369, %v900
      %v902 = vpop.f32.mrb[0].mxu0
      %903 = vmatprep.mubr.f32.mxu0 0.0
      %904 = vmatmul.mubr.f32.gmra.mrb[0].mxu0 %v538
      %v905 = vpop.f32.mrb[0].mxu0
      %v906 = vadd.f32 %v369, %v905
      %v907 = vpop.f32.mrb[0].mxu0
      %908 = vmatprep.mubr.f32.mxu0 0.0
      %909 = vmatmul.mubr.f32.gmra.mrb[0].mxu0 %v541
      %v910 = vpop.f32.mrb[0].mxu0
      %v911 = vadd.f32 %v369, %v910
      %v912 = vpop.f32.mrb[0].mxu0
      %913 = vmatprep.mubr.f32.mxu0 0.0
      %914 = vmatmul.mubr.f32.gmra.mrb[0].mxu0 %v544
      %v915 = vpop.f32.mrb[0].mxu0
      %v916 = vadd.f32 %v369, %v915
      %v917 = vpop.f32.mrb[0].mxu0
      %918 = vmatprep.mubr.f32.mxu0 0.0
      %919 = vmatmul.mubr.f32.gmra.mrb[0].mxu0 %v547
      %v920 = vpop.f32.mrb[0].mxu0
      %v921 = vadd.f32 %v369, %v920
      %v922 = vpop.f32.mrb[0].mxu0
      %923 = vmatprep.mubr.f32.mxu0 0.0
      %924 = vmatmul.mubr.f32.gmra.mrb[0].mxu0 %v550
      %v925 = vpop.f32.mrb[0].mxu0
      %v926 = vadd.f32 %v369, %v925
      %v927 = vpop.f32.mrb[0].mxu0
      %928 = vmatprep.mubr.f32.mxu0 0.0
      %929 = vmatmul.mubr.f32.gmra.mrb[0].mxu0 %v553
      %v930 = vpop.f32.mrb[0].mxu0
      %v931 = vadd.f32 %v369, %v930
      %v932 = vpop.f32.mrb[0].mxu0
      %933 = vmatprep.mubr.f32.mxu0 0.0
      %934 = vmatmul.mubr.f32.gmra.mrb[0].mxu0 %v556
      %v935 = vpop.f32.mrb[0].mxu0
      %v936 = vadd.f32 %v369, %v935
      %v937 = vpop.f32.mrb[0].mxu0
      %938 = vmatprep.mubr.f32.mxu0 0.0
      %939 = vmatmul.mubr.f32.gmra.mrb[0].mxu0 %v559
      %v940 = vpop.f32.mrb[0].mxu0
      %v941 = vadd.f32 %v369, %v940
      %v942 = vpop.f32.mrb[0].mxu0
      %943 = vmatprep.mubr.f32.mxu0 0.0
      %944 = vmatmul.mubr.f32.gmra.mrb[0].mxu0 %v562
      %v945 = vpop.f32.mrb[0].mxu0
      %v946 = vadd.f32 %v369, %v945
      %v947 = vpop.f32.mrb[0].mxu0
      %948 = vdwg.mxu0
      %v949 = vmax.f32 %v631, 0.0
      %v950 = vmax.f32 %v636, 0.0
      %v951 = vmax.f32 %v641, 0.0
      %v952 = vmax.f32 %v646, 0.0
      %v953 = vmax.f32 %v651, 0.0
      %v954 = vmax.f32 %v656, 0.0
      %v955 = vmax.f32 %v661, 0.0
      %v956 = vmax.f32 %v666, 0.0
      %v957 = vmax.f32 %v671, 0.0
      %v958 = vmax.f32 %v676, 0.0
      %v959 = vmax.f32 %v681, 0.0
      %v960 = vmax.f32 %v686, 0.0
      %v961 = vmax.f32 %v691, 0.0
      %v962 = vmax.f32 %v696, 0.0
      %v963 = vmax.f32 %v701, 0.0
      %v964 = vmax.f32 %v706, 0.0
      %v965 = vmax.f32 %v711, 0.0
      %v966 = vmax.f32 %v716, 0.0
      %v967 = vmax.f32 %v721, 0.0
      %v968 = vmax.f32 %v726, 0.0
      %v969 = vmax.f32 %v731, 0.0
      %v970 = vmax.f32 %v736, 0.0
      %v971 = vmax.f32 %v741, 0.0
      %v972 = vmax.f32 %v746, 0.0
      %v973 = vmax.f32 %v751, 0.0
      %v974 = vmax.f32 %v756, 0.0
      %v975 = vmax.f32 %v761, 0.0
      %v976 = vmax.f32 %v766, 0.0
      %v977 = vmax.f32 %v771, 0.0
      %v978 = vmax.f32 %v776, 0.0
      %v979 = vmax.f32 %v781, 0.0
      %v980 = vmax.f32 %v786, 0.0
      %v981 = vmax.f32 %v791, 0.0
      %v982 = vmax.f32 %v796, 0.0
      %v983 = vmax.f32 %v801, 0.0
      %v984 = vmax.f32 %v806, 0.0
      %v985 = vmax.f32 %v811, 0.0
      %v986 = vmax.f32 %v816, 0.0
      %v987 = vmax.f32 %v821, 0.0
      %v988 = vmax.f32 %v826, 0.0
      %v989 = vmax.f32 %v831, 0.0
      %v990 = vmax.f32 %v836, 0.0
      %v991 = vmax.f32 %v841, 0.0
      %v992 = vmax.f32 %v846, 0.0
      %v993 = vmax.f32 %v851, 0.0
      %v994 = vmax.f32 %v856, 0.0
      %v995 = vmax.f32 %v861, 0.0
      %v996 = vmax.f32 %v866, 0.0
      %v997 = vmax.f32 %v871, 0.0
      %v998 = vmax.f32 %v876, 0.0
      %v999 = vmax.f32 %v881, 0.0
      %v1000 = vmax.f32 %v886, 0.0
      %v1001 = vmax.f32 %v891, 0.0
      %v1002 = vmax.f32 %v896, 0.0
      %v1003 = vmax.f32 %v901, 0.0
      %v1004 = vmax.f32 %v906, 0.0
      %v1005 = vmax.f32 %v911, 0.0
      %v1006 = vmax.f32 %v916, 0.0
      %v1007 = vmax.f32 %v921, 0.0
      %v1008 = vmax.f32 %v926, 0.0
      %v1009 = vmax.f32 %v931, 0.0
      %v1010 = vmax.f32 %v936, 0.0
      %v1011 = vmax.f32 %v941, 0.0
      %v1012 = vmax.f32 %v946, 0.0
      %v1013 = vsel %vm371, %v949, 0.0
      %v1014 = vsel %vm371, %v950, 0.0
      %v1015 = vadd.f32 %v1013, %v1014
      %v1016 = vsel %vm371, %v951, 0.0
      %v1017 = vadd.f32 %v1015, %v1016
      %v1018 = vsel %vm371, %v952, 0.0
      %v1019 = vadd.f32 %v1017, %v1018
      %v1020 = vsel %vm371, %v953, 0.0
      %v1021 = vadd.f32 %v1019, %v1020
      %v1022 = vsel %vm371, %v954, 0.0
      %v1023 = vadd.f32 %v1021, %v1022
      %v1024 = vsel %vm371, %v955, 0.0
      %v1025 = vadd.f32 %v1023, %v1024
      %v1026 = vsel %vm371, %v956, 0.0
      %v1027 = vadd.f32 %v1025, %v1026
      %v1028 = vsel %vm371, %v957, 0.0
      %v1029 = vadd.f32 %v1027, %v1028
      %v1030 = vsel %vm371, %v958, 0.0
      %v1031 = vadd.f32 %v1029, %v1030
      %v1032 = vsel %vm371, %v959, 0.0
      %v1033 = vadd.f32 %v1031, %v1032
      %v1034 = vsel %vm371, %v960, 0.0
      %v1035 = vadd.f32 %v1033, %v1034
      %v1036 = vsel %vm371, %v961, 0.0
      %v1037 = vadd.f32 %v1035, %v1036
      %v1038 = vsel %vm371, %v962, 0.0
      %v1039 = vadd.f32 %v1037, %v1038
      %v1040 = vsel %vm371, %v963, 0.0
      %v1041 = vadd.f32 %v1039, %v1040
      %v1042 = vsel %vm371, %v964, 0.0
      %v1043 = vadd.f32 %v1041, %v1042
      %v1044 = vsel %vm371, %v965, 0.0
      %v1045 = vadd.f32 %v1043, %v1044
      %v1046 = vsel %vm371, %v966, 0.0
      %v1047 = vadd.f32 %v1045, %v1046
      %v1048 = vsel %vm371, %v967, 0.0
      %v1049 = vadd.f32 %v1047, %v1048
      %v1050 = vsel %vm371, %v968, 0.0
      %v1051 = vadd.f32 %v1049, %v1050
      %v1052 = vsel %vm371, %v969, 0.0
      %v1053 = vadd.f32 %v1051, %v1052
      %v1054 = vsel %vm371, %v970, 0.0
      %v1055 = vadd.f32 %v1053, %v1054
      %v1056 = vsel %vm371, %v971, 0.0
      %v1057 = vadd.f32 %v1055, %v1056
      %v1058 = vsel %vm371, %v972, 0.0
      %v1059 = vadd.f32 %v1057, %v1058
      %v1060 = vsel %vm371, %v973, 0.0
      %v1061 = vadd.f32 %v1059, %v1060
      %v1062 = vsel %vm371, %v974, 0.0
      %v1063 = vadd.f32 %v1061, %v1062
      %v1064 = vsel %vm371, %v975, 0.0
      %v1065 = vadd.f32 %v1063, %v1064
      %v1066 = vsel %vm371, %v976, 0.0
      %v1067 = vadd.f32 %v1065, %v1066
      %v1068 = vsel %vm371, %v977, 0.0
      %v1069 = vadd.f32 %v1067, %v1068
      %v1070 = vsel %vm371, %v978, 0.0
      %v1071 = vadd.f32 %v1069, %v1070
      %v1072 = vsel %vm371, %v979, 0.0
      %v1073 = vadd.f32 %v1071, %v1072
      %v1074 = vsel %vm371, %v980, 0.0
      %v1075 = vadd.f32 %v1073, %v1074
      %v1076 = vrot.slane %v1075, 4
      %v1077 = vadd.f32 %v1075, %v1076
      %v1078 = vrot.slane %v1077, 2
      %v1079 = vadd.f32 %v1077, %v1078
      %v1080 = vrot.slane %v1079, 1
      %v1081 = vadd.f32 %v1079, %v1080
      %v1082 = vsel %vm371, %v981, 0.0
      %v1083 = vsel %vm371, %v982, 0.0
      %v1084 = vadd.f32 %v1082, %v1083
      %v1085 = vsel %vm371, %v983, 0.0
      %v1086 = vadd.f32 %v1084, %v1085
      %v1087 = vsel %vm371, %v984, 0.0
      %v1088 = vadd.f32 %v1086, %v1087
      %v1089 = vsel %vm371, %v985, 0.0
      %v1090 = vadd.f32 %v1088, %v1089
      %v1091 = vsel %vm371, %v986, 0.0
      %v1092 = vadd.f32 %v1090, %v1091
      %v1093 = vsel %vm371, %v987, 0.0
      %v1094 = vadd.f32 %v1092, %v1093
      %v1095 = vsel %vm371, %v988, 0.0
      %v1096 = vadd.f32 %v1094, %v1095
      %v1097 = vsel %vm371, %v989, 0.0
      %v1098 = vadd.f32 %v1096, %v1097
      %v1099 = vsel %vm371, %v990, 0.0
      %v1100 = vadd.f32 %v1098, %v1099
      %v1101 = vsel %vm371, %v991, 0.0
      %v1102 = vadd.f32 %v1100, %v1101
      %v1103 = vsel %vm371, %v992, 0.0
      %v1104 = vadd.f32 %v1102, %v1103
      %v1105 = vsel %vm371, %v993, 0.0
      %v1106 = vadd.f32 %v1104, %v1105
      %v1107 = vsel %vm371, %v994, 0.0
      %v1108 = vadd.f32 %v1106, %v1107
      %v1109 = vsel %vm371, %v995, 0.0
      %v1110 = vadd.f32 %v1108, %v1109
      %v1111 = vsel %vm371, %v996, 0.0
      %v1112 = vadd.f32 %v1110, %v1111
      %v1113 = vsel %vm371, %v997, 0.0
      %v1114 = vadd.f32 %v1112, %v1113
      %v1115 = vsel %vm371, %v998, 0.0
      %v1116 = vadd.f32 %v1114, %v1115
      %v1117 = vsel %vm371, %v999, 0.0
      %v1118 = vadd.f32 %v1116, %v1117
      %v1119 = vsel %vm371, %v1000, 0.0
      %v1120 = vadd.f32 %v1118, %v1119
      %v1121 = vsel %vm371, %v1001, 0.0
      %v1122 = vadd.f32 %v1120, %v1121
      %v1123 = vsel %vm371, %v1002, 0.0
      %v1124 = vadd.f32 %v1122, %v1123
      %v1125 = vsel %vm371, %v1003, 0.0
      %v1126 = vadd.f32 %v1124, %v1125
      %v1127 = vsel %vm371, %v1004, 0.0
      %v1128 = vadd.f32 %v1126, %v1127
      %v1129 = vsel %vm371, %v1005, 0.0
      %v1130 = vadd.f32 %v1128, %v1129
      %v1131 = vsel %vm371, %v1006, 0.0
      %v1132 = vadd.f32 %v1130, %v1131
      %v1133 = vsel %vm371, %v1007, 0.0
      %v1134 = vadd.f32 %v1132, %v1133
      %v1135 = vsel %vm371, %v1008, 0.0
      %v1136 = vadd.f32 %v1134, %v1135
      %v1137 = vsel %vm371, %v1009, 0.0
      %v1138 = vadd.f32 %v1136, %v1137
      %v1139 = vsel %vm371, %v1010, 0.0
      %v1140 = vadd.f32 %v1138, %v1139
      %v1141 = vsel %vm371, %v1011, 0.0
      %v1142 = vadd.f32 %v1140, %v1141
      %v1143 = vsel %vm371, %v1012, 0.0
      %v1144 = vadd.f32 %v1142, %v1143
      %v1145 = vrot.slane %v1144, 4
      %v1146 = vadd.f32 %v1144, %v1145
      %v1147 = vrot.slane %v1146, 2
      %v1148 = vadd.f32 %v1146, %v1147
      %v1149 = vrot.slane %v1148, 1
      %v1150 = vadd.f32 %v1148, %v1149
      %v1151 = vmul.f32 %v1081, 0.00390625
      %v1152 = vmul.f32 %v1150, 0.00390625
      %v1153 = vld [vmem:[%s3] sm:$0xff]
      %v1154 = vld [vmem:[%s3 + $0x8] sm:$0xff]
      %v1155 = vld [vmem:[%s3 + $0x10] sm:$0xff]
      %v1156 = vld [vmem:[%s3 + $0x18] sm:$0xff]
      %v1157 = vld [vmem:[#allocation2] sm:$0x3]
      %v1158 = vld [vmem:[#allocation3] sm:$0x3]
      %v1159 = vld [vmem:[%s4] sm:$0xff]
      %v1160 = vld [vmem:[%s4 + $0x8] sm:$0xff]
      %v1161 = vld [vmem:[%s4 + $0x10] sm:$0xff]
      %v1162 = vld [vmem:[%s4 + $0x18] sm:$0xff]
      %v1164 = vsel %vm371, %v1157, 0
      %1166 = vmatprep.subr.mxu0 0.0
      %1167 = vmatpush1.msra.mxu0 %v1159
      %1168 = vmatprep.subr.mxu0 0.0
      %1169 = vmatpush1.msra.mxu0 %v1160
      %1170 = vmatprep.subr.mxu0 0.0
      %1171 = vmatpush1.msra.mxu0 %v1161
      %1172 = vmatprep.subr.mxu0 0.0
      %1173 = vmatpush1.msra.mxu0 %v1162
      %1174 = vmatprep.subr.mxu0 0.0
      %1175 = vmatpush1.msra.mxu0 0.0
      %1176 = vmatprep.subr.mxu0 0.0
      %1177 = vmatpush1.msra.mxu0 0.0
      %1178 = vmatprep.subr.mxu0 0.0
      %1179 = vmatpush1.msra.mxu0 0.0
      %1180 = vmatprep.subr.mxu0 0.0
      %1181 = vmatpush1.msra.mxu0 0.0
      %1182 = vmatprep.subr.mxu0 0.0
      %1183 = vmatpush1.msra.mxu0 0.0
      %1184 = vmatprep.subr.mxu0 0.0
      %1185 = vmatpush1.msra.mxu0 0.0
      %1186 = vmatprep.subr.mxu0 0.0
      %1187 = vmatpush1.msra.mxu0 0.0
      %1188 = vmatprep.subr.mxu0 0.0
      %1189 = vmatpush1.msra.mxu0 0.0
      %1190 = vmatprep.subr.mxu0 0.0
      %1191 = vmatpush1.msra.mxu0 0.0
      %1192 = vmatprep.subr.mxu0 0.0
      %1193 = vmatpush1.msra.mxu0 0.0
      %1194 = vmatprep.subr.mxu0 0.0
      %1195 = vmatpush1.msra.mxu0 0.0
      %1196 = vmatprep.subr.mxu0 0.0
      %1197 = vmatpush1.msra.mxu0 0.0
      %1198 = vmatprep.subr.mxu0 0.0
      %1199 = vmatpush1.msra.mxu0 0.0
      %1200 = vmatprep.subr.mxu0 0.0
      %1201 = vmatpush1.msra.mxu0 0.0
      %1202 = vmatprep.subr.mxu0 0.0
      %1203 = vmatpush1.msra.mxu0 0.0
      %1204 = vmatprep.subr.mxu0 0.0
      %1205 = vmatpush1.msra.mxu0 0.0
      %1206 = vmatprep.subr.mxu0 0.0
      %1207 = vmatpush1.msra.mxu0 0.0
      %1208 = vmatprep.subr.mxu0 0.0
      %1209 = vmatpush1.msra.mxu0 0.0
      %1210 = vmatprep.subr.mxu0 0.0
      %1211 = vmatpush1.msra.mxu0 0.0
      %1212 = vmatprep.subr.mxu0 0.0
      %1213 = vmatpush1.msra.mxu0 0.0
      %1214 = vmatprep.subr.mxu0 0.0
      %1215 = vmatpush1.msra.mxu0 0.0
      %1216 = vmatprep.subr.mxu0 0.0
      %1217 = vmatpush1.msra.mxu0 0.0
      %1218 = vmatprep.subr.mxu0 0.0
      %1219 = vmatpush1.msra.mxu0 0.0
      %1220 = vmatprep.subr.mxu0 0.0
      %1221 = vmatpush1.msra.mxu0 0.0
      %1222 = vmatprep.subr.mxu0 0.0
      %1223 = vmatpush1.msra.mxu0 0.0
      %1224 = vmatprep.subr.mxu0 0.0
      %1225 = vmatpush1.msra.mxu0 0.0
      %1226 = vmatprep.subr.mxu0 0.0
      %1227 = vmatpush1.msra.mxu0 0.0
      %1228 = vmatprep.subr.mxu0 0.0
      %1229 = vmatpush1.msra.mxu0 0.0
      %1230 = vmatprep.mubr.f32.mxu0 0.0
      %1231 = vmatmul.mubr.f32.gmra.mrb[0].mxu0 %v1164
      %v1232 = vpop.f32.mrb[0].mxu0
      %v1233 = vadd.f32 0.0, %v1232
      %v1234 = vpop.f32.mrb[0].mxu0
      %1235 = vdwg.mxu0
      %vm1238 = vcmask 1041409
      %v1239 = vsel %vm1238, %v1152, %v1151
      %v1240 = vsel %vm371, %v1239, 0
      %1242 = vmatprep.subr.mxu0 0.0
      %1243 = vmatpush1.msra.mxu0 %v1153
      %1244 = vmatprep.subr.mxu0 0.0
      %1245 = vmatpush1.msra.mxu0 %v1154
      %1246 = vmatprep.subr.mxu0 0.0
      %1247 = vmatpush1.msra.mxu0 %v1155
      %1248 = vmatprep.subr.mxu0 0.0
      %1249 = vmatpush1.msra.mxu0 %v1156
      %1250 = vmatprep.subr.mxu0 0.0
      %1251 = vmatpush1.msra.mxu0 0.0
      %1252 = vmatprep.subr.mxu0 0.0
      %1253 = vmatpush1.msra.mxu0 0.0
      %1254 = vmatprep.subr.mxu0 0.0
      %1255 = vmatpush1.msra.mxu0 0.0
      %1256 = vmatprep.subr.mxu0 0.0
      %1257 = vmatpush1.msra.mxu0 0.0
      %1258 = vmatprep.subr.mxu0 0.0
      %1259 = vmatpush1.msra.mxu0 0.0
      %1260 = vmatprep.subr.mxu0 0.0
      %1261 = vmatpush1.msra.mxu0 0.0
      %1262 = vmatprep.subr.mxu0 0.0
      %1263 = vmatpush1.msra.mxu0 0.0
      %1264 = vmatprep.subr.mxu0 0.0
      %1265 = vmatpush1.msra.mxu0 0.0
      %1266 = vmatprep.subr.mxu0 0.0
      %1267 = vmatpush1.msra.mxu0 0.0
      %1268 = vmatprep.subr.mxu0 0.0
      %1269 = vmatpush1.msra.mxu0 0.0
      %1270 = vmatprep.subr.mxu0 0.0
      %1271 = vmatpush1.msra.mxu0 0.0
      %1272 = vmatprep.subr.mxu0 0.0
      %1273 = vmatpush1.msra.mxu0 0.0
      %1274 = vmatprep.subr.mxu0 0.0
      %1275 = vmatpush1.msra.mxu0 0.0
      %1276 = vmatprep.subr.mxu0 0.0
      %1277 = vmatpush1.msra.mxu0 0.0
      %1278 = vmatprep.subr.mxu0 0.0
      %1279 = vmatpush1.msra.mxu0 0.0
      %1280 = vmatprep.subr.mxu0 0.0
      %1281 = vmatpush1.msra.mxu0 0.0
      %1282 = vmatprep.subr.mxu0 0.0
      %1283 = vmatpush1.msra.mxu0 0.0
      %1284 = vmatprep.subr.mxu0 0.0
      %1285 = vmatpush1.msra.mxu0 0.0
      %1286 = vmatprep.subr.mxu0 0.0
      %1287 = vmatpush1.msra.mxu0 0.0
      %1288 = vmatprep.subr.mxu0 0.0
      %1289 = vmatpush1.msra.mxu0 0.0
      %1290 = vmatprep.subr.mxu0 0.0
      %1291 = vmatpush1.msra.mxu0 0.0
      %1292 = vmatprep.subr.mxu0 0.0
      %1293 = vmatpush1.msra.mxu0 0.0
      %1294 = vmatprep.subr.mxu0 0.0
      %1295 = vmatpush1.msra.mxu0 0.0
      %1296 = vmatprep.subr.mxu0 0.0
      %1297 = vmatpush1.msra.mxu0 0.0
      %1298 = vmatprep.subr.mxu0 0.0
      %1299 = vmatpush1.msra.mxu0 0.0
      %1300 = vmatprep.subr.mxu0 0.0
      %1301 = vmatpush1.msra.mxu0 0.0
      %1302 = vmatprep.subr.mxu0 0.0
      %1303 = vmatpush1.msra.mxu0 0.0
      %1304 = vmatprep.subr.mxu0 0.0
      %1305 = vmatpush1.msra.mxu0 0.0
      %1306 = vmatprep.mubr.f32.mxu0 0.0
      %1307 = vmatmul.mubr.f32.gmra.mrb[0].mxu0 %v1240
      %v1308 = vpop.f32.mrb[0].mxu0
      %v1309 = vadd.f32 %v1233, %v1308
      %v1310 = vpop.f32.mrb[0].mxu0
      %1311 = vdwg.mxu0
      %v1312 = vld [vmem:[%s6] sm:$0x1]
      %v1314 = vlaneseq
      %v1315 = vshrl.u32 %v1314, 7
      %v1316 = vsub.s32 0, %v1315
      %v1317 = vrot.slane %v1312, %v1316
      %v1319 = vadd.f32 %v1309, %v1317
      %v1320 = vxor.u32 %v1319, 2147483648
      %v1321 = vmul.f32 %v1320, 1.442695
      %v1322 = vpow.pop %v1321
      %v1323 = vadd.f32 %v1322, 1.0
      %v1324 = vrcp.pop %v1323
      %v1325 = vmul.f32 1.0, %v1324
      %v1326 = vtanh.pop %v1319
      %1328 = vrot.lane.b32.xlu0 %v1158, 32
      %v1329 = vpop.permute.xlu0 %1328
      %v1331 = vmul.f32 %v1325, %v1329
      %1333 = vrot.lane.b32.xlu0 %v1326, 64
      %v1334 = vpop.permute.xlu0 %1333
      %v1336 = vmul.f32 %v1325, %v1334
      %1338 = vrot.lane.b32.xlu0 %v1336, 32
      %v1339 = vpop.permute.xlu0 %1338
      %v1341 = vadd.f32 %v1331, %v1339
      %v1342 = vtanh.pop %v1341
      %1344 = vrot.lane.b32.xlu0 %v1342, 64
      %v1345 = vpop.permute.xlu0 %1344
      %v1347 = vmul.f32 %v1325, %v1345
      %1349 = vrot.lane.b32.xlu0 %v1347, 32
      %v1350 = vpop.permute.xlu0 %1349
      %vm1352 = vcmask 254976
      %1353 = vst.msk [vmem:[#allocation2] sm:$0x3] %vm1352, %v1350
      %1355 = vrot.lane.b32.xlu0 %v1341, 96
      %v1356 = vpop.permute.xlu0 %1355
      %1358 = vst.msk [vmem:[#allocation3] sm:$0x3] %vm1352, %v1356
      %v1359 = vld [vmem:[#allocation2 + $0x2] sm:$0x3]
      %v1360 = vld [vmem:[#allocation3 + $0x2] sm:$0x3]
      %1362 = vrot.lane.b32.xlu0 %v1359, 32
      %v1363 = vpop.permute.xlu0 %1362
      %v1365 = vsel %vm371, %v1350, %v1363
      %v1366 = vld [vmem:[%s5] sm:$0xff]
      %v1367 = vld [vmem:[%s5 + $0x8] sm:$0xff]
      %v1368 = vld [vmem:[%s5 + $0x10] sm:$0xff]
      %v1369 = vld [vmem:[%s5 + $0x18] sm:$0xff]
      %v1370 = vld [vmem:[%s5 + $0x20] sm:$0xff]
      %v1371 = vld [vmem:[%s5 + $0x28] sm:$0xff]
      %v1372 = vld [vmem:[%s5 + $0x30] sm:$0xff]
      %v1373 = vld [vmem:[%s5 + $0x38] sm:$0xff]
      %s1374 = scalar_lea.vmem %s6, 1
      %v1375 = vld [vmem:[%s1374] sm:$0x1]
      %v1377 = vlaneseq
      %v1378 = vshrl.u32 %v1377, 7
      %v1379 = vsub.s32 0, %v1378
      %v1380 = vrot.slane %v1375, %v1379
      %vm1382 = vcmask 523264
      %v1384 = vsel %vm1382, %v1365, 0
      %1386 = vmatprep.subr.mxu0 0.0
      %1387 = vmatpush1.msra.mxu0 %v1366
      %1388 = vmatprep.subr.mxu0 0.0
      %1389 = vmatpush1.msra.mxu0 %v1367
      %1390 = vmatprep.subr.mxu0 0.0
      %1391 = vmatpush1.msra.mxu0 %v1368
      %1392 = vmatprep.subr.mxu0 0.0
      %1393 = vmatpush1.msra.mxu0 %v1369
      %1394 = vmatprep.subr.mxu0 0.0
      %1395 = vmatpush1.msra.mxu0 %v1370
      %1396 = vmatprep.subr.mxu0 0.0
      %1397 = vmatpush1.msra.mxu0 %v1371
      %1398 = vmatprep.subr.mxu0 0.0
      %1399 = vmatpush1.msra.mxu0 %v1372
      %1400 = vmatprep.subr.mxu0 0.0
      %1401 = vmatpush1.msra.mxu0 %v1373
      %1402 = vmatprep.subr.mxu0 0.0
      %1403 = vmatpush1.msra.mxu0 0.0
      %1404 = vmatprep.subr.mxu0 0.0
      %1405 = vmatpush1.msra.mxu0 0.0
      %1406 = vmatprep.subr.mxu0 0.0
      %1407 = vmatpush1.msra.mxu0 0.0
      %1408 = vmatprep.subr.mxu0 0.0
      %1409 = vmatpush1.msra.mxu0 0.0
      %1410 = vmatprep.subr.mxu0 0.0
      %1411 = vmatpush1.msra.mxu0 0.0
      %1412 = vmatprep.subr.mxu0 0.0
      %1413 = vmatpush1.msra.mxu0 0.0
      %1414 = vmatprep.subr.mxu0 0.0
      %1415 = vmatpush1.msra.mxu0 0.0
      %1416 = vmatprep.subr.mxu0 0.0
      %1417 = vmatpush1.msra.mxu0 0.0
      %1418 = vmatprep.subr.mxu0 0.0
      %1419 = vmatpush1.msra.mxu0 0.0
      %1420 = vmatprep.subr.mxu0 0.0
      %1421 = vmatpush1.msra.mxu0 0.0
      %1422 = vmatprep.subr.mxu0 0.0
      %1423 = vmatpush1.msra.mxu0 0.0
      %1424 = vmatprep.subr.mxu0 0.0
      %1425 = vmatpush1.msra.mxu0 0.0
      %1426 = vmatprep.subr.mxu0 0.0
      %1427 = vmatpush1.msra.mxu0 0.0
      %1428 = vmatprep.subr.mxu0 0.0
      %1429 = vmatpush1.msra.mxu0 0.0
      %1430 = vmatprep.subr.mxu0 0.0
      %1431 = vmatpush1.msra.mxu0 0.0
      %1432 = vmatprep.subr.mxu0 0.0
      %1433 = vmatpush1.msra.mxu0 0.0
      %1434 = vmatprep.subr.mxu0 0.0
      %1435 = vmatpush1.msra.mxu0 0.0
      %1436 = vmatprep.subr.mxu0 0.0
      %1437 = vmatpush1.msra.mxu0 0.0
      %1438 = vmatprep.subr.mxu0 0.0
      %1439 = vmatpush1.msra.mxu0 0.0
      %1440 = vmatprep.subr.mxu0 0.0
      %1441 = vmatpush1.msra.mxu0 0.0
      %1442 = vmatprep.subr.mxu0 0.0
      %1443 = vmatpush1.msra.mxu0 0.0
      %1444 = vmatprep.subr.mxu0 0.0
      %1445 = vmatpush1.msra.mxu0 0.0
      %1446 = vmatprep.subr.mxu0 0.0
      %1447 = vmatpush1.msra.mxu0 0.0
      %1448 = vmatprep.subr.mxu0 0.0
      %1449 = vmatpush1.msra.mxu0 0.0
      %1450 = vmatprep.mubr.f32.mxu0 0.0
      %1451 = vmatmul.mubr.f32.gmra.mrb[0].mxu0 %v1384
      %v1452 = vpop.f32.mrb[0].mxu0
      %v1453 = vadd.f32 %v1380, %v1452
      %v1454 = vpop.f32.mrb[0].mxu0
      %1455 = vdwg.mxu0
      %v1456 = vxor.u32 %v1453, 2147483648
      %v1457 = vmul.f32 %v1456, 1.442695
      %v1458 = vpow.pop %v1457
      %v1459 = vadd.f32 %v1458, 1.0
      %v1460 = vrcp.pop %v1459
      %v1461 = vmul.f32 1.0, %v1460
      %v1462 = vtanh.pop %v1453
      %1464 = vrot.lane.b32.xlu0 %v1360, 32
      %v1465 = vpop.permute.xlu0 %1464
      %v1467 = vmul.f32 %v1461, %v1465
      %1469 = vrot.lane.b32.xlu0 %v1462, 64
      %v1470 = vpop.permute.xlu0 %1469
      %v1472 = vmul.f32 %v1461, %v1470
      %1474 = vrot.lane.b32.xlu0 %v1472, 32
      %v1475 = vpop.permute.xlu0 %1474
      %v1477 = vadd.f32 %v1467, %v1475
      %v1478 = vtanh.pop %v1477
      %1480 = vrot.lane.b32.xlu0 %v1478, 64
      %v1481 = vpop.permute.xlu0 %1480
      %v1483 = vmul.f32 %v1461, %v1481
      %1485 = vrot.lane.b32.xlu0 %v1483, 32
      %v1486 = vpop.permute.xlu0 %1485
      %1488 = vst.msk [vmem:[#allocation2 + $0x2] sm:$0x3] %vm1352, %v1486
      %1490 = vrot.lane.b32.xlu0 %v1477, 96
      %v1491 = vpop.permute.xlu0 %1490
      %1493 = vst.msk [vmem:[#allocation3 + $0x2] sm:$0x3] %vm1352, %v1491
      %v1494 = vld [vmem:[#allocation2 + $0x4] sm:$0x3]
      %v1495 = vld [vmem:[#allocation3 + $0x4] sm:$0x3]
      %1497 = vrot.lane.b32.xlu0 %v1494, 32
      %v1498 = vpop.permute.xlu0 %1497
      %v1500 = vsel %vm371, %v1486, %v1498
      %s1501 = scalar_lea.vmem %s5, 64
      %v1502 = vld [vmem:[%s1501] sm:$0xff]
      %v1503 = vld [vmem:[%s1501 + $0x8] sm:$0xff]
      %v1504 = vld [vmem:[%s1501 + $0x10] sm:$0xff]
      %v1505 = vld [vmem:[%s1501 + $0x18] sm:$0xff]
      %v1506 = vld [vmem:[%s1501 + $0x20] sm:$0xff]
      %v1507 = vld [vmem:[%s1501 + $0x28] sm:$0xff]
      %v1508 = vld [vmem:[%s1501 + $0x30] sm:$0xff]
      %v1509 = vld [vmem:[%s1501 + $0x38] sm:$0xff]
      %s1510 = scalar_lea.vmem %s6, 2
      %v1511 = vld [vmem:[%s1510] sm:$0x1]
      %v1513 = vlaneseq
      %v1514 = vshrl.u32 %v1513, 7
      %v1515 = vsub.s32 0, %v1514
      %v1516 = vrot.slane %v1511, %v1515
      %v1519 = vsel %vm1382, %v1500, 0
      %1521 = vmatprep.subr.mxu0 0.0
      %1522 = vmatpush1.msra.mxu0 %v1502
      %1523 = vmatprep.subr.mxu0 0.0
      %1524 = vmatpush1.msra.mxu0 %v1503
      %1525 = vmatprep.subr.mxu0 0.0
      %1526 = vmatpush1.msra.mxu0 %v1504
      %1527 = vmatprep.subr.mxu0 0.0
      %1528 = vmatpush1.msra.mxu0 %v1505
      %1529 = vmatprep.subr.mxu0 0.0
      %1530 = vmatpush1.msra.mxu0 %v1506
      %1531 = vmatprep.subr.mxu0 0.0
      %1532 = vmatpush1.msra.mxu0 %v1507
      %1533 = vmatprep.subr.mxu0 0.0
      %1534 = vmatpush1.msra.mxu0 %v1508
      %1535 = vmatprep.subr.mxu0 0.0
      %1536 = vmatpush1.msra.mxu0 %v1509
      %1537 = vmatprep.subr.mxu0 0.0
      %1538 = vmatpush1.msra.mxu0 0.0
      %1539 = vmatprep.subr.mxu0 0.0
      %1540 = vmatpush1.msra.mxu0 0.0
      %1541 = vmatprep.subr.mxu0 0.0
      %1542 = vmatpush1.msra.mxu0 0.0
      %1543 = vmatprep.subr.mxu0 0.0
      %1544 = vmatpush1.msra.mxu0 0.0
      %1545 = vmatprep.subr.mxu0 0.0
      %1546 = vmatpush1.msra.mxu0 0.0
      %1547 = vmatprep.subr.mxu0 0.0
      %1548 = vmatpush1.msra.mxu0 0.0
      %1549 = vmatprep.subr.mxu0 0.0
      %1550 = vmatpush1.msra.mxu0 0.0
      %1551 = vmatprep.subr.mxu0 0.0
      %1552 = vmatpush1.msra.mxu0 0.0
      %1553 = vmatprep.subr.mxu0 0.0
      %1554 = vmatpush1.msra.mxu0 0.0
      %1555 = vmatprep.subr.mxu0 0.0
      %1556 = vmatpush1.msra.mxu0 0.0
      %1557 = vmatprep.subr.mxu0 0.0
      %1558 = vmatpush1.msra.mxu0 0.0
      %1559 = vmatprep.subr.mxu0 0.0
      %1560 = vmatpush1.msra.mxu0 0.0
      %1561 = vmatprep.subr.mxu0 0.0
      %1562 = vmatpush1.msra.mxu0 0.0
      %1563 = vmatprep.subr.mxu0 0.0
      %1564 = vmatpush1.msra.mxu0 0.0
      %1565 = vmatprep.subr.mxu0 0.0
      %1566 = vmatpush1.msra.mxu0 0.0
      %1567 = vmatprep.subr.mxu0 0.0
      %1568 = vmatpush1.msra.mxu0 0.0
      %1569 = vmatprep.subr.mxu0 0.0
      %1570 = vmatpush1.msra.mxu0 0.0
      %1571 = vmatprep.subr.mxu0 0.0
      %1572 = vmatpush1.msra.mxu0 0.0
      %1573 = vmatprep.subr.mxu0 0.0
      %1574 = vmatpush1.msra.mxu0 0.0
      %1575 = vmatprep.subr.mxu0 0.0
      %1576 = vmatpush1.msra.mxu0 0.0
      %1577 = vmatprep.subr.mxu0 0.0
      %1578 = vmatpush1.msra.mxu0 0.0
      %1579 = vmatprep.subr.mxu0 0.0
      %1580 = vmatpush1.msra.mxu0 0.0
      %1581 = vmatprep.subr.mxu0 0.0
      %1582 = vmatpush1.msra.mxu0 0.0
      %1583 = vmatprep.subr.mxu0 0.0
      %1584 = vmatpush1.msra.mxu0 0.0
      %1585 = vmatprep.mubr.f32.mxu0 0.0
      %1586 = vmatmul.mubr.f32.gmra.mrb[0].mxu0 %v1519
      %v1587 = vpop.f32.mrb[0].mxu0
      %v1588 = vadd.f32 %v1516, %v1587
      %v1589 = vpop.f32.mrb[0].mxu0
      %1590 = vdwg.mxu0
      %v1591 = vxor.u32 %v1588, 2147483648
      %v1592 = vmul.f32 %v1591, 1.442695
      %v1593 = vpow.pop %v1592
      %v1594 = vadd.f32 %v1593, 1.0
      %v1595 = vrcp.pop %v1594
      %v1596 = vmul.f32 1.0, %v1595
      %v1597 = vtanh.pop %v1588
      %1599 = vrot.lane.b32.xlu0 %v1495, 32
      %v1600 = vpop.permute.xlu0 %1599
      %v1602 = vmul.f32 %v1596, %v1600
      %1604 = vrot.lane.b32.xlu0 %v1597, 64
      %v1605 = vpop.permute.xlu0 %1604
      %v1607 = vmul.f32 %v1596, %v1605
      %1609 = vrot.lane.b32.xlu0 %v1607, 32
      %v1610 = vpop.permute.xlu0 %1609
      %v1612 = vadd.f32 %v1602, %v1610
      %v1613 = vtanh.pop %v1612
      %1615 = vrot.lane.b32.xlu0 %v1613, 64
      %v1616 = vpop.permute.xlu0 %1615
      %v1618 = vmul.f32 %v1596, %v1616
      %1620 = vrot.lane.b32.xlu0 %v1618, 32
      %v1621 = vpop.permute.xlu0 %1620
      %1623 = vst.msk [vmem:[#allocation2 + $0x4] sm:$0x3] %vm1352, %v1621
      %1625 = vrot.lane.b32.xlu0 %v1612, 96
      %v1626 = vpop.permute.xlu0 %1625
      %1628 = vst.msk [vmem:[#allocation3 + $0x4] sm:$0x3] %vm1352, %v1626
      %v1629 = vld [vmem:[#allocation2 + $0x6] sm:$0x3]
      %v1630 = vld [vmem:[#allocation3 + $0x6] sm:$0x3]
      %1632 = vrot.lane.b32.xlu0 %v1629, 32
      %v1633 = vpop.permute.xlu0 %1632
      %v1635 = vsel %vm371, %v1621, %v1633
      %s1636 = scalar_lea.vmem %s5, 128
      %v1637 = vld [vmem:[%s1636] sm:$0xff]
      %v1638 = vld [vmem:[%s1636 + $0x8] sm:$0xff]
      %v1639 = vld [vmem:[%s1636 + $0x10] sm:$0xff]
      %v1640 = vld [vmem:[%s1636 + $0x18] sm:$0xff]
      %v1641 = vld [vmem:[%s1636 + $0x20] sm:$0xff]
      %v1642 = vld [vmem:[%s1636 + $0x28] sm:$0xff]
      %v1643 = vld [vmem:[%s1636 + $0x30] sm:$0xff]
      %v1644 = vld [vmem:[%s1636 + $0x38] sm:$0xff]
      %s1645 = scalar_lea.vmem %s6, 3
      %v1646 = vld [vmem:[%s1645] sm:$0x1]
      %v1648 = vlaneseq
      %v1649 = vshrl.u32 %v1648, 7
      %v1650 = vsub.s32 0, %v1649
      %v1651 = vrot.slane %v1646, %v1650
      %v1654 = vsel %vm1382, %v1635, 0
      %1656 = vmatprep.subr.mxu0 0.0
      %1657 = vmatpush1.msra.mxu0 %v1637
      %1658 = vmatprep.subr.mxu0 0.0
      %1659 = vmatpush1.msra.mxu0 %v1638
      %1660 = vmatprep.subr.mxu0 0.0
      %1661 = vmatpush1.msra.mxu0 %v1639
      %1662 = vmatprep.subr.mxu0 0.0
      %1663 = vmatpush1.msra.mxu0 %v1640
      %1664 = vmatprep.subr.mxu0 0.0
      %1665 = vmatpush1.msra.mxu0 %v1641
      %1666 = vmatprep.subr.mxu0 0.0
      %1667 = vmatpush1.msra.mxu0 %v1642
      %1668 = vmatprep.subr.mxu0 0.0
      %1669 = vmatpush1.msra.mxu0 %v1643
      %1670 = vmatprep.subr.mxu0 0.0
      %1671 = vmatpush1.msra.mxu0 %v1644
      %1672 = vmatprep.subr.mxu0 0.0
      %1673 = vmatpush1.msra.mxu0 0.0
      %1674 = vmatprep.subr.mxu0 0.0
      %1675 = vmatpush1.msra.mxu0 0.0
      %1676 = vmatprep.subr.mxu0 0.0
      %1677 = vmatpush1.msra.mxu0 0.0
      %1678 = vmatprep.subr.mxu0 0.0
      %1679 = vmatpush1.msra.mxu0 0.0
      %1680 = vmatprep.subr.mxu0 0.0
      %1681 = vmatpush1.msra.mxu0 0.0
      %1682 = vmatprep.subr.mxu0 0.0
      %1683 = vmatpush1.msra.mxu0 0.0
      %1684 = vmatprep.subr.mxu0 0.0
      %1685 = vmatpush1.msra.mxu0 0.0
      %1686 = vmatprep.subr.mxu0 0.0
      %1687 = vmatpush1.msra.mxu0 0.0
      %1688 = vmatprep.subr.mxu0 0.0
      %1689 = vmatpush1.msra.mxu0 0.0
      %1690 = vmatprep.subr.mxu0 0.0
      %1691 = vmatpush1.msra.mxu0 0.0
      %1692 = vmatprep.subr.mxu0 0.0
      %1693 = vmatpush1.msra.mxu0 0.0
      %1694 = vmatprep.subr.mxu0 0.0
      %1695 = vmatpush1.msra.mxu0 0.0
      %1696 = vmatprep.subr.mxu0 0.0
      %1697 = vmatpush1.msra.mxu0 0.0
      %1698 = vmatprep.subr.mxu0 0.0
      %1699 = vmatpush1.msra.mxu0 0.0
      %1700 = vmatprep.subr.mxu0 0.0
      %1701 = vmatpush1.msra.mxu0 0.0
      %1702 = vmatprep.subr.mxu0 0.0
      %1703 = vmatpush1.msra.mxu0 0.0
      %1704 = vmatprep.subr.mxu0 0.0
      %1705 = vmatpush1.msra.mxu0 0.0
      %1706 = vmatprep.subr.mxu0 0.0
      %1707 = vmatpush1.msra.mxu0 0.0
      %1708 = vmatprep.subr.mxu0 0.0
      %1709 = vmatpush1.msra.mxu0 0.0
      %1710 = vmatprep.subr.mxu0 0.0
      %1711 = vmatpush1.msra.mxu0 0.0
      %1712 = vmatprep.subr.mxu0 0.0
      %1713 = vmatpush1.msra.mxu0 0.0
      %1714 = vmatprep.subr.mxu0 0.0
      %1715 = vmatpush1.msra.mxu0 0.0
      %1716 = vmatprep.subr.mxu0 0.0
      %1717 = vmatpush1.msra.mxu0 0.0
      %1718 = vmatprep.subr.mxu0 0.0
      %1719 = vmatpush1.msra.mxu0 0.0
      %1720 = vmatprep.mubr.f32.mxu0 0.0
      %1721 = vmatmul.mubr.f32.gmra.mrb[0].mxu0 %v1654
      %v1722 = vpop.f32.mrb[0].mxu0
      %v1723 = vadd.f32 %v1651, %v1722
      %v1724 = vpop.f32.mrb[0].mxu0
      %1725 = vdwg.mxu0
      %v1726 = vxor.u32 %v1723, 2147483648
      %v1727 = vmul.f32 %v1726, 1.442695
      %v1728 = vpow.pop %v1727
      %v1729 = vadd.f32 %v1728, 1.0
      %v1730 = vrcp.pop %v1729
      %v1731 = vmul.f32 1.0, %v1730
      %v1732 = vtanh.pop %v1723
      %1734 = vrot.lane.b32.xlu0 %v1630, 32
      %v1735 = vpop.permute.xlu0 %1734
      %v1737 = vmul.f32 %v1731, %v1735
      %1739 = vrot.lane.b32.xlu0 %v1732, 64
      %v1740 = vpop.permute.xlu0 %1739
      %v1742 = vmul.f32 %v1731, %v1740
      %1744 = vrot.lane.b32.xlu0 %v1742, 32
      %v1745 = vpop.permute.xlu0 %1744
      %v1747 = vadd.f32 %v1737, %v1745
      %v1748 = vtanh.pop %v1747
      %1750 = vrot.lane.b32.xlu0 %v1748, 64
      %v1751 = vpop.permute.xlu0 %1750
      %v1753 = vmul.f32 %v1731, %v1751
      %1755 = vrot.lane.b32.xlu0 %v1753, 32
      %v1756 = vpop.permute.xlu0 %1755
      %1758 = vst.msk [vmem:[#allocation2 + $0x6] sm:$0x3] %vm1352, %v1756
      %1760 = vrot.lane.b32.xlu0 %v1747, 96
      %v1761 = vpop.permute.xlu0 %1760
      %1763 = vst.msk [vmem:[#allocation3 + $0x6] sm:$0x3] %vm1352, %v1761
      %p1764 = scmp.eq.s32.totalorder %s20, 5
      // Predicated region
      $region53: #{seq2seq_forward.2} parent=47 // pred_check
        %p1765 = pneg %p1764
      $region54: #{seq2seq_forward.2} parent=47 // pred_check_branch
        %1767 = sbr.rel (%p1765) target = $region56
      $region55: #{seq2seq_forward.2} parent=47 // pred_region
        %v1768 = vld [vmem:[#allocation2] sm:$0xff]
        %1769 = vst.msk [vmem:[%s7] sm:$0xff] %vm371, %v1768
        %v1770 = vld [vmem:[#allocation3] sm:$0xff]
        %1771 = vst.msk [vmem:[%s8] sm:$0xff] %vm371, %v1770
      $region56: #{seq2seq_forward.2} parent=47 // pred_fallthru
        _
      // Predicated region
      $region57: #{seq2seq_forward.2} parent=47 // pred_check
        %p1772 = pneg %p185
      $region58: #{seq2seq_forward.2} parent=47 // pred_check_branch
        %1774 = sbr.rel (%p1772) target = $region60
      $region59: #{seq2seq_forward.2} parent=47 // pred_region
        _
      $region60: #{seq2seq_forward.2} parent=47 // pred_fallthru
        _
      // Predicated region
      $region61: #{seq2seq_forward.2} parent=47 // pred_check
        %p1775 = pneg %p206
      $region62: #{seq2seq_forward.2} parent=47 // pred_check_branch
        %1777 = sbr.rel (%p1775) target = $region64
      $region63: #{seq2seq_forward.2} parent=47 // pred_region
        _
      $region64: #{seq2seq_forward.2} parent=47 // pred_fallthru
        _
      // Predicated region
      $region65: #{seq2seq_forward.2} parent=47 // pred_check
        %p1778 = pneg %p185
      $region66: #{seq2seq_forward.2} parent=47 // pred_check_branch
        %1780 = sbr.rel (%p1778) target = $region68
      $region67: #{seq2seq_forward.2} parent=47 // pred_region
        _
      $region68: #{seq2seq_forward.2} parent=47 // pred_fallthru
        _
      // Predicated region
      $region69: #{seq2seq_forward.2} parent=47 // pred_check
        %p1781 = pneg %p206
      $region70: #{seq2seq_forward.2} parent=47 // pred_check_branch
        %1783 = sbr.rel (%p1781) target = $region72
      $region71: #{seq2seq_forward.2} parent=47 // pred_region
        _
      $region72: #{seq2seq_forward.2} parent=47 // pred_fallthru
        _
    $region48: #{seq2seq_forward.2} parent=5 // pred_fallthru
      _
    %p1784 = scmp.le.s32.totalorder 2, %s15
    // Predicated region
    $region73: #{seq2seq_forward.2} parent=5 // pred_check
      %p1785 = pneg %p1784
    $region74: #{seq2seq_forward.2} parent=5 // pred_check_branch
      %1787 = sbr.rel (%p1785) target = $region76
    $region75: #{seq2seq_forward.2} parent=5 // pred_region
      %s1788 = ssub.s32 %s15, 2
    $region76: #{seq2seq_forward.2} parent=5 // pred_fallthru
      _
  $region6: #{seq2seq_forward.2} parent=0 // loop_footer
    %s19 = sadd.s32 1, %s15
  $region7: #{seq2seq_forward.2} parent=0 // loop_footer_branch
    %14 = sbr.rel target = $region3
  $region8: #{seq2seq_forward.2} parent=0 // loop_exit
    _

</llo_original>
